<compile_context>
chip_gen: v6e
topology: v6e:2x2x1
jax: 0.10.0
libtpu: 0.0.40
codegen_flags: <defaults>
</compile_context>

<pallas_src>
import functools
import math

import jax
import jax.numpy as jnp
from jax.experimental import pallas as pl
from jax.experimental.pallas import tpu as pltpu

BN_EPS = 1e-5
CONV_DIM = 8
LATENT = 32


# ----------------------------- VMEM / tiling helpers ------------------------ #

def _vmem_limit_bytes():
    """~75% of physical VMEM, capped at 96 MiB (v5e/v6e 128 MiB -> 96 MiB,
    v7x 64 MiB -> 48 MiB).  Falls back to a safe default off-TPU."""
    cap = 128 * 1024 * 1024
    try:
        info = pltpu.get_tpu_info()
        cap = int(getattr(info, "vmem_capacity_bytes", cap)) or cap
    except Exception:
        pass
    return max(16 * 1024 * 1024, min(cap * 3 // 4, 96 * 1024 * 1024))


VMEM_LIMIT = _vmem_limit_bytes()
BLOCK_BUDGET = VMEM_LIMIT // 2          # per-grid-step budget used by the tile picker


def _apply_act(y, act):
    if act == "relu":
        return jnp.maximum(y, 0.0)
    if act == "tanh":
        return jnp.tanh(y)
    return y


def _pick_tile(c, unit, block_bytes, budget):
    """Largest divisor t of c with (t == c or t % unit == 0) fitting the budget.

    No multi-step bias: on single-TC v5e/v6e splitting the channel axis only
    adds ~0.35us/step overhead, and at this config steps are sub-us on v7x too.
    # TODO(synk): at the full conv_dim=64 config, force a 2-way split of a
    # 'parallel' axis on v7x (2 TCs) when the per-step GEMM is large enough.
    """
    divs = sorted((d for d in range(1, c + 1) if c % d == 0), reverse=True)
    legal = [t for t in divs if t == c or t % unit == 0]
    for t in legal:
        if block_bytes(t) <= budget:
            return t
    return legal[-1]


def _conv_block_bytes(n_phase, K, M, out_bytes):
    """Per-grid-step VMEM estimate.  Grid-resident blocks are counted 2x:
    Pallas double-buffers every input even when its index_map is constant."""
    def f(t):
        patches = 2 * n_phase * K * M * 2            # bf16, constant index -> still 2 bufs
        w_tile = 2 * n_phase * t * K * 2             # bf16, double-buffered
        o_tile = 2 * t * n_phase * M * out_bytes     # output, double-buffered
        live = t * n_phase * M * 4                   # f32 GEMM results live in-body
        return patches + w_tile + o_tile + live
    return f


# ----------------------------- Pallas kernels ------------------------------- #

def _fused_gemm_bn_act_kernel(w_ref, p_ref, g_ref, b_ref, o_ref, *,
                              act, n_phase, inv_count):
    """For each phase p: W[p] @ P[p] -> [tc, M] (f32 acc on the MXU), phases
    concatenated along the lane axis -> one lane-dense [tc, n_phase*M] slab.
    Train-mode BatchNorm per output channel (stats over phases x M, single
    pass sum / sum-of-squares) + activation, then a single full-lane store."""
    outs = [jnp.dot(w_ref[ph], p_ref[ph], preferred_element_type=jnp.float32)
            for ph in range(n_phase)]
    o = outs[0] if n_phase == 1 else jnp.concatenate(outs, axis=-1)

    s = o.sum(axis=1, keepdims=True)
    s2 = (o * o).sum(axis=1, keepdims=True)
    mean = s * inv_count
    var = jnp.maximum(s2 * inv_count - mean * mean, 0.0)    # biased var (PyTorch BN)
    scale = jax.lax.rsqrt(var + BN_EPS) * g_ref[...]         # [tc, 1]
    shift = b_ref[...] - mean * scale                        # [tc, 1]

    # TODO(synk): at the full config the M axis must be tiled; that requires an
    # accumulate-in-scratch + pl.when finalize BN pattern to keep full-batch stats.
    o_ref[...] = _apply_act(o * scale + shift, act).astype(o_ref.dtype)


def _fused_head_kernel(x_ref, wn_ref, gn_ref, bn_ref, eps_ref, wd_ref, gd_ref, bd_ref,
                       logvar_ref, d_ref, *, inv_n):
    """Whole VAE head in one kernel:
       logvar = BN1d(x @ Wn^T)   (noise linear, bias=False; mu == logvar)
       z      = eps * exp(0.5*logvar) + mu
       d      = relu(BN1d(z @ Wd^T))   (deconv_linear)."""
    pre = jnp.dot(x_ref[...], wn_ref[...], preferred_element_type=jnp.float32)   # [N, L]
    s = pre.sum(axis=0, keepdims=True)
    s2 = (pre * pre).sum(axis=0, keepdims=True)
    mean = s * inv_n
    var = jnp.maximum(s2 * inv_n - mean * mean, 0.0)
    scale = jax.lax.rsqrt(var + BN_EPS) * gn_ref[...]
    shift = bn_ref[...] - mean * scale
    logvar = pre * scale + shift
    logvar_ref[...] = logvar

    z = eps_ref[...] * jnp.exp(0.5 * logvar) + logvar        # mu == logvar

    d = jnp.dot(z.astype(jnp.bfloat16), wd_ref[...], preferred_element_type=jnp.float32)
    s = d.sum(axis=0, keepdims=True)
    s2 = (d * d).sum(axis=0, keepdims=True)
    mean = s * inv_n
    var = jnp.maximum(s2 * inv_n - mean * mean, 0.0)
    scale = jax.lax.rsqrt(var + BN_EPS) * gd_ref[...]
    shift = bd_ref[...] - mean * scale
    d_ref[...] = jnp.maximum(d * scale + shift, 0.0).astype(d_ref.dtype)


# ----------------------------- fused block wrappers ------------------------- #

def fused_conv_bn_act(w3, p3, gamma, beta, act, out_dtype):
    """w3: [P, Cout, K], p3: [P, K, M] -> [Cout, P*M] (phase-major along lanes)
    with fused train-mode BN (stats over phases x M per channel) + activation."""
    n_phase, Cout, K = w3.shape
    M = p3.shape[-1]
    out_bytes = jnp.dtype(out_dtype).itemsize
    tc = _pick_tile(Cout, 16, _conv_block_bytes(n_phase, K, M, out_bytes), BLOCK_BUDGET)
    g = gamma.reshape(Cout, 1).astype(jnp.float32)
    b = beta.reshape(Cout, 1).astype(jnp.float32)
    kern = functools.partial(_fused_gemm_bn_act_kernel, act=act,
                             n_phase=n_phase, inv_count=1.0 / (n_phase * M))
    return pl.pallas_call(
        kern,
        out_shape=jax.ShapeDtypeStruct((Cout, n_phase * M), out_dtype),
        grid=(Cout // tc,),
        in_specs=[
            pl.BlockSpec((n_phase, tc, K), lambda i: (0, i, 0)),   # weights (tiled on Cout)
            pl.BlockSpec((n_phase, K, M), lambda i: (0, 0, 0)),    # patches (grid-resident)
            pl.BlockSpec((tc, 1), lambda i: (i, 0)),               # gamma
            pl.BlockSpec((tc, 1), lambda i: (i, 0)),               # beta
        ],
        out_specs=pl.BlockSpec((tc, n_phase * M), lambda i: (i, 0)),   # lane-dense slab
        compiler_params=pltpu.CompilerParams(
            dimension_semantics=("parallel",),
            vmem_limit_bytes=VMEM_LIMIT),
    )(w3.astype(jnp.bfloat16), p3.astype(jnp.bfloat16), g, b)


def fused_vae_head(flat, wn, gn, bn, eps, wd, gd, bd):
    """flat: [N, Fin].  wn: (L, Fin), wd: (Fout, L) (PyTorch Linear, bias=False).
    Returns (logvar [N, L] f32, d [N, Fout] bf16) from a single pallas_call."""
    N, Fin = flat.shape
    L = wn.shape[0]
    Fout = wd.shape[0]
    kern = functools.partial(_fused_head_kernel, inv_n=1.0 / N)
    logvar, d = pl.pallas_call(
        kern,
        out_shape=(jax.ShapeDtypeStruct((N, L), jnp.float32),
                   jax.ShapeDtypeStruct((N, Fout), jnp.bfloat16)),
        grid=(1,),
        in_specs=[
            pl.BlockSpec((N, Fin), lambda i: (0, 0)),
            pl.BlockSpec((Fin, L), lambda i: (0, 0)),
            pl.BlockSpec((1, L), lambda i: (0, 0)),
            pl.BlockSpec((1, L), lambda i: (0, 0)),
            pl.BlockSpec((N, L), lambda i: (0, 0)),
            pl.BlockSpec((L, Fout), lambda i: (0, 0)),
            pl.BlockSpec((1, Fout), lambda i: (0, 0)),
            pl.BlockSpec((1, Fout), lambda i: (0, 0)),
        ],
        out_specs=(pl.BlockSpec((N, L), lambda i: (0, 0)),
                   pl.BlockSpec((N, Fout), lambda i: (0, 0))),
        compiler_params=pltpu.CompilerParams(vmem_limit_bytes=VMEM_LIMIT),
    )(flat.astype(jnp.bfloat16),
      jnp.transpose(wn).astype(jnp.bfloat16),
      gn.reshape(1, L).astype(jnp.float32), bn.reshape(1, L).astype(jnp.float32),
      eps.astype(jnp.float32),
      jnp.transpose(wd).astype(jnp.bfloat16),
      gd.reshape(1, Fout).astype(jnp.float32), bd.reshape(1, Fout).astype(jnp.float32))
    return logvar, d


# ----------------------------- conv / deconv glue (CNHW layout) ------------- #
# TODO(synk): at the full (conv_dim=64, 128x128) config the im2col tap gather
# should move inside the kernel (resident CNHW block + per-tap GEMM accumulate,
# or PrefetchScalarGridSpec / manual DMA) to remove the k*k HBM patch
# amplification and the resident-patch VMEM pressure on v7x.

def im2col_cnhw(x, k, stride, pad):
    """x: [C, N, H, W] -> patches [k*k*C, N*Ho*Wo] (tap-major, then channel)."""
    C, N, H, W = x.shape
    xp = jnp.pad(x, ((0, 0), (0, 0), (pad, pad), (pad, pad)))
    Ho = (H + 2 * pad - k) // stride + 1
    Wo = (W + 2 * pad - k) // stride + 1
    taps = []
    for i in range(k):
        for j in range(k):
            taps.append(xp[:, :, i:i + stride * Ho:stride,
                                 j:j + stride * Wo:stride].reshape(C, N * Ho * Wo))
    return jnp.concatenate(taps, axis=0), Ho, Wo


def conv_block(x, w, gamma, beta, act, out_dtype):
    """Conv2d(k=4, s=2, p=1, bias=False) + BatchNorm2d(train) + act.
    x: [Cin, N, H, W] (CNHW) -> [Cout, N, Ho, Wo]."""
    Cout, Cin, k, _ = w.shape
    _, N, H, W = x.shape
    patches, Ho, Wo = im2col_cnhw(x, k, 2, 1)                       # [k*k*Cin, M]
    w_mat = jnp.transpose(w, (0, 2, 3, 1)).reshape(Cout, k * k * Cin)
    o = fused_conv_bn_act(w_mat[None], patches[None], gamma, beta, act, out_dtype)
    return o.reshape(Cout, N, Ho, Wo)


def deconv_block(x, w_t, gamma, beta, act, out_dtype):
    """ConvTranspose2d(k=4, s=2, p=1, bias=False) + BN + act via the sub-pixel
    (stride^2 phase) decomposition.  x: [Cin, N, H, W], w_t: (Cin, Cout, 4, 4).
    Output: [Cout, N, 2H, 2W] (CNHW)."""
    Cin, Cout, k, _ = w_t.shape
    _, N, H, W = x.shape
    xp = jnp.pad(x, ((0, 0), (0, 0), (1, 1), (1, 1)))               # [Cin, N, H+2, W+2]
    M = N * H * W

    pats, weffs = [], []
    for py in range(2):
        for px in range(2):
            taps, wrows = [], []
            for di in range(2):
                for dj in range(2):
                    oy, ox = py + di, px + dj
                    taps.append(xp[:, :, oy:oy + H, ox:ox + W].reshape(Cin, M))
                    # out[co, 2q+py, 2r+px] += x_pad[ci, q+py+di, r+px+dj]
                    #                          * w_t[ci, co, 3-py-2di, 3-px-2dj]
                    wrows.append(jnp.transpose(
                        w_t[:, :, 3 - py - 2 * di, 3 - px - 2 * dj]))   # [Cout, Cin]
            pats.append(jnp.concatenate(taps, axis=0))              # [4*Cin, M]
            weffs.append(jnp.concatenate(wrows, axis=1))            # [Cout, 4*Cin]

    p3 = jnp.stack(pats, axis=0)                                    # [4, 4*Cin, M]
    w3 = jnp.stack(weffs, axis=0)                                   # [4, Cout, 4*Cin]
    o = fused_conv_bn_act(w3, p3, gamma, beta, act, out_dtype)      # [Cout, 4*M]

    # Interleave phases: o[co, (2*py+px)*M + n*H*W + q*W + r] -> out[co, n, 2q+py, 2r+px]
    # TODO(synk): fold this interleave into the next layer's tap gather (or write
    # phase-strided output from the kernel) to drop one HBM round trip per layer.
    o = o.reshape(Cout, 2, 2, N, H, W).transpose(0, 3, 4, 1, 5, 2)  # [Cout, N, H, 2, W, 2]
    return o.reshape(Cout, N, 2 * H, 2 * W)


# ----------------------------- parameters ----------------------------------- #

def init_params(key, conv_dim=CONV_DIM, latent=LATENT, spatial=4):
    flat = conv_dim * 4 * spatial * spatial
    keys = jax.random.split(key, 8)

    def w(k, shape):
        fan_in = 1
        for s in shape[1:]:
            fan_in *= s
        return (1.0 / math.sqrt(fan_in)) * jax.random.normal(k, shape, jnp.float32)

    p = {
        "conv1_w": w(keys[0], (conv_dim, 3, 4, 4)),
        "conv2_w": w(keys[1], (conv_dim * 2, conv_dim, 4, 4)),
        "conv3_w": w(keys[2], (conv_dim * 4, conv_dim * 2, 4, 4)),
        "noise_w": w(keys[3], (latent, flat)),            # nn.Linear(flat, latent)
        "deconv_linear_w": w(keys[4], (flat, latent)),    # nn.Linear(latent, flat)
        "deconv3_w": w(keys[5], (conv_dim * 4, conv_dim * 2, 4, 4)),  # (Cin,Cout,k,k)
        "deconv2_w": w(keys[6], (conv_dim * 2, conv_dim, 4, 4)),
        "deconv1_w": w(keys[7], (conv_dim, 3, 4, 4)),
    }
    for name, c in [("conv1", conv_dim), ("conv2", conv_dim * 2),
                    ("conv3", conv_dim * 4), ("noise", latent),
                    ("deconv_linear", flat), ("deconv3", conv_dim * 2),
                    ("deconv2", conv_dim), ("deconv1", 3)]:
        p[name + "_g"] = jnp.ones((c,), jnp.float32)      # BN gamma (PyTorch default)
        p[name + "_b"] = jnp.zeros((c,), jnp.float32)     # BN beta
    # NOTE: self.mean linear is defined in __init__ but never used in forward -> omitted.
    return p


# ----------------------------- forward pass --------------------------------- #

def cycle_generator_forward(p, x_nchw, eps_noise, conv_dim=CONV_DIM):
    N = x_nchw.shape[0]
    x = jnp.transpose(x_nchw, (1, 0, 2, 3))               # NCHW -> CNHW (internal layout)

    # encoder: relu(BN(conv)) x3 — bf16 intermediates, f32 BN math inside the kernel.
    h = conv_block(x, p["conv1_w"], p["conv1_g"], p["conv1_b"], "relu", jnp.bfloat16)
    h = conv_block(h, p["conv2_w"], p["conv2_g"], p["conv2_b"], "relu", jnp.bfloat16)
    h = conv_block(h, p["conv3_w"], p["conv3_g"], p["conv3_b"], "relu", jnp.bfloat16)
    C, _, H, W = h.shape
    flat = jnp.transpose(h, (1, 0, 2, 3)).reshape(N, C * H * W)     # NCHW .view(-1, CHW)

    # logvar = self.noise(out); mu = self.noise(out)  (same module -> identical),
    # reparameterization and deconv_linear all fused into one kernel.
    # TODO(synk): PyTorch draws eps via .normal_() per call; here it is a fixed
    # deterministic standard-normal sample passed in explicitly.
    logvar, d = fused_vae_head(flat, p["noise_w"], p["noise_g"], p["noise_b"], eps_noise,
                               p["deconv_linear_w"], p["deconv_linear_g"],
                               p["deconv_linear_b"])
    mu = logvar

    d = jnp.transpose(d.reshape(N, conv_dim * 4, H, W), (1, 0, 2, 3))   # -> CNHW
    d = deconv_block(d, p["deconv3_w"], p["deconv3_g"], p["deconv3_b"], "relu", jnp.bfloat16)
    d = deconv_block(d, p["deconv2_w"], p["deconv2_g"], p["deconv2_b"], "tanh", jnp.bfloat16)
    d = deconv_block(d, p["deconv1_w"], p["deconv1_g"], p["deconv1_b"], "tanh", jnp.float32)
    return jnp.transpose(d, (1, 0, 2, 3)), logvar, mu      # CNHW -> NCHW


# ----------------------------------- main ----------------------------------- #

if __name__ == "__main__":
    key = jax.random.PRNGKey(0)
    kx, keps, kp = jax.random.split(key, 3)
    x = jax.random.normal(kx, (2, 3, 32, 32), jnp.float32)
    eps = jax.random.normal(keps, (2, LATENT), jnp.float32)
    params = init_params(kp)

    fwd = jax.jit(cycle_generator_forward)
    out, logvar, mu = fwd(params, x, eps)
    jax.block_until_ready((out, logvar, mu))

    assert out.shape == (2, 3, 32, 32), out.shape
    assert out.dtype == jnp.float32, out.dtype
    assert logvar.shape == (2, LATENT), logvar.shape
    assert mu.shape == (2, LATENT), mu.shape
    assert bool(jnp.all(jnp.isfinite(out)))
    assert bool(jnp.all(jnp.isfinite(logvar)))
    print("KERNEL_OK")
</pallas_src>

<mosaic_0001>
module attributes {stable_mosaic.version = 11 : i64} {
  func.func @_fused_gemm_bn_act_kernel(%arg0: i32, %arg1: memref<1x8x48xbf16, #tpu.memory_space<vmem>>, %arg2: memref<1x48x512xbf16, #tpu.memory_space<vmem>>, %arg3: memref<8x1xf32, #tpu.memory_space<vmem>>, %arg4: memref<8x1xf32, #tpu.memory_space<vmem>>, %arg5: memref<8x512xbf16, #tpu.memory_space<vmem>>) attributes {dimension_semantics = [#tpu.dimension_semantics<parallel>], iteration_bounds = array<i64: 1>, scalar_prefetch = 0 : i64, scratch_operands = 0 : i64, tpu.core_type = #tpu.core_type<tc>, window_params = [{transform_indices = @transform_0, window_bounds = array<i64: 1, 8, 48>}, {pipeline_mode = #tpu.pipeline_mode<synchronous>, transform_indices = @transform_1, window_bounds = array<i64: 1, 48, 512>}, {transform_indices = @transform_2, window_bounds = array<i64: 8, 1>}, {transform_indices = @transform_3, window_bounds = array<i64: 8, 1>}, {transform_indices = @transform_4, window_bounds = array<i64: 8, 512>}]} {
    %c0 = arith.constant 0 : index
    %c0_0 = arith.constant 0 : index
    %c0_1 = arith.constant 0 : index
    %0 = vector.load %arg1[%c0, %c0_0, %c0_1] : memref<1x8x48xbf16, #tpu.memory_space<vmem>>, vector<1x8x48xbf16>
    %1 = vector.shape_cast %0 : vector<1x8x48xbf16> to vector<8x48xbf16>
    %c0_2 = arith.constant 0 : index
    %c0_3 = arith.constant 0 : index
    %c0_4 = arith.constant 0 : index
    %2 = vector.load %arg2[%c0_2, %c0_3, %c0_4] : memref<1x48x512xbf16, #tpu.memory_space<vmem>>, vector<1x48x512xbf16>
    %3 = vector.shape_cast %2 : vector<1x48x512xbf16> to vector<48x512xbf16>
    %cst = arith.constant dense<0.000000e+00> : vector<8x512xf32>
    %4 = tpu.matmul %1, %3, %cst {dimension_numbers = #tpu.dot_dimension_numbers<[1], [0], [0], [1], [0, 0, 1, 1], [], []>} : vector<8x48xbf16>, vector<48x512xbf16>, vector<8x512xf32> -> vector<8x512xf32>
    %cst_5 = arith.constant dense<0.000000e+00> : vector<8xf32>
    %5 = vector.multi_reduction <add>, %4, %cst_5 [1] : vector<8x512xf32> to vector<8xf32>
    %6 = vector.shape_cast %5 : vector<8xf32> to vector<8x1xf32>
    %7 = arith.mulf %4, %4 : vector<8x512xf32>
    %cst_6 = arith.constant dense<0.000000e+00> : vector<8xf32>
    %8 = vector.multi_reduction <add>, %7, %cst_6 [1] : vector<8x512xf32> to vector<8xf32>
    %9 = vector.shape_cast %8 : vector<8xf32> to vector<8x1xf32>
    %cst_7 = arith.constant 0.001953125 : f32
    %10 = vector.broadcast %cst_7 : f32 to vector<8x1xf32>
    %11 = arith.mulf %6, %10 : vector<8x1xf32>
    %cst_8 = arith.constant 0.001953125 : f32
    %12 = vector.broadcast %cst_8 : f32 to vector<8x1xf32>
    %13 = arith.mulf %9, %12 : vector<8x1xf32>
    %14 = arith.mulf %11, %11 : vector<8x1xf32>
    %15 = arith.subf %13, %14 : vector<8x1xf32>
    %cst_9 = arith.constant 0.000000e+00 : f32
    %16 = vector.broadcast %cst_9 : f32 to vector<8x1xf32>
    %17 = arith.maximumf %15, %16 : vector<8x1xf32>
    %cst_10 = arith.constant 9.99999974E-6 : f32
    %18 = vector.broadcast %cst_10 : f32 to vector<8x1xf32>
    %19 = arith.addf %17, %18 : vector<8x1xf32>
    %20 = math.rsqrt %19 : vector<8x1xf32>
    %c0_11 = arith.constant 0 : index
    %c0_12 = arith.constant 0 : index
    %21 = vector.load %arg3[%c0_11, %c0_12] : memref<8x1xf32, #tpu.memory_space<vmem>>, vector<8x1xf32>
    %22 = arith.mulf %20, %21 : vector<8x1xf32>
    %c0_13 = arith.constant 0 : index
    %c0_14 = arith.constant 0 : index
    %23 = vector.load %arg4[%c0_13, %c0_14] : memref<8x1xf32, #tpu.memory_space<vmem>>, vector<8x1xf32>
    %24 = arith.mulf %11, %22 : vector<8x1xf32>
    %25 = arith.subf %23, %24 : vector<8x1xf32>
    %26 = vector.broadcast %22 : vector<8x1xf32> to vector<8x512xf32>
    %27 = arith.mulf %4, %26 : vector<8x512xf32>
    %28 = vector.broadcast %25 : vector<8x1xf32> to vector<8x512xf32>
    %29 = arith.addf %27, %28 : vector<8x512xf32>
    %cst_15 = arith.constant 0.000000e+00 : f32
    %30 = vector.broadcast %cst_15 : f32 to vector<8x512xf32>
    %31 = arith.maximumf %29, %30 : vector<8x512xf32>
    %32 = arith.truncf %31 : vector<8x512xf32> to vector<8x512xbf16>
    %c0_16 = arith.constant 0 : index
    %c0_17 = arith.constant 0 : index
    %33 = vector.load %arg5[%c0_16, %c0_17] : memref<8x512xbf16, #tpu.memory_space<vmem>>, vector<8x512xbf16>
    tpu.vector_store %arg5[%c0_16, %c0_17], %32 {strides = array<i32>} : memref<8x512xbf16, #tpu.memory_space<vmem>>, vector<8x512xbf16>,
    return
  }
  func.func @transform_0(%arg0: i32) -> (i32, i32, i32) {
    %c0_i32 = arith.constant 0 : i32
    %c0_i32_0 = arith.constant 0 : i32
    %c0_i32_1 = arith.constant 0 : i32
    return %c0_i32, %arg0, %c0_i32_0 : i32, i32, i32
  }
  func.func @transform_1(%arg0: i32) -> (i32, i32, i32) {
    %c0_i32 = arith.constant 0 : i32
    %c0_i32_0 = arith.constant 0 : i32
    %c0_i32_1 = arith.constant 0 : i32
    %c0_i32_2 = arith.constant 0 : i32
    return %c0_i32, %c0_i32_0, %c0_i32_1 : i32, i32, i32
  }
  func.func @transform_2(%arg0: i32) -> (i32, i32) {
    %c0_i32 = arith.constant 0 : i32
    %c0_i32_0 = arith.constant 0 : i32
    return %arg0, %c0_i32 : i32, i32
  }
  func.func @transform_3(%arg0: i32) -> (i32, i32) {
    %c0_i32 = arith.constant 0 : i32
    %c0_i32_0 = arith.constant 0 : i32
    return %arg0, %c0_i32 : i32, i32
  }
  func.func @transform_4(%arg0: i32) -> (i32, i32) {
    %c0_i32 = arith.constant 0 : i32
    %c0_i32_0 = arith.constant 0 : i32
    return %arg0, %c0_i32 : i32, i32
  }
}

module attributes {stable_mosaic.version = 11 : i64} {
  func.func @_fused_gemm_bn_act_kernel(%arg0: i32, %arg1: memref<1x16x128xbf16, #tpu.memory_space<vmem>>, %arg2: memref<1x128x128xbf16, #tpu.memory_space<vmem>>, %arg3: memref<16x1xf32, #tpu.memory_space<vmem>>, %arg4: memref<16x1xf32, #tpu.memory_space<vmem>>, %arg5: memref<16x128xbf16, #tpu.memory_space<vmem>>) attributes {dimension_semantics = [#tpu.dimension_semantics<parallel>], iteration_bounds = array<i64: 1>, scalar_prefetch = 0 : i64, scratch_operands = 0 : i64, tpu.core_type = #tpu.core_type<tc>, window_params = [{transform_indices = @transform_0, window_bounds = array<i64: 1, 16, 128>}, {pipeline_mode = #tpu.pipeline_mode<synchronous>, transform_indices = @transform_1, window_bounds = array<i64: 1, 128, 128>}, {transform_indices = @transform_2, window_bounds = array<i64: 16, 1>}, {transform_indices = @transform_3, window_bounds = array<i64: 16, 1>}, {transform_indices = @transform_4, window_bounds = array<i64: 16, 128>}]} {
    %c0 = arith.constant 0 : index
    %c0_0 = arith.constant 0 : index
    %c0_1 = arith.constant 0 : index
    %0 = vector.load %arg1[%c0, %c0_0, %c0_1] : memref<1x16x128xbf16, #tpu.memory_space<vmem>>, vector<1x16x128xbf16>
    %1 = vector.shape_cast %0 : vector<1x16x128xbf16> to vector<16x128xbf16>
    %c0_2 = arith.constant 0 : index
    %c0_3 = arith.constant 0 : index
    %c0_4 = arith.constant 0 : index
    %2 = vector.load %arg2[%c0_2, %c0_3, %c0_4] : memref<1x128x128xbf16, #tpu.memory_space<vmem>>, vector<1x128x128xbf16>
    %3 = vector.shape_cast %2 : vector<1x128x128xbf16> to vector<128x128xbf16>
    %cst = arith.constant dense<0.000000e+00> : vector<16x128xf32>
    %4 = tpu.matmul %1, %3, %cst {dimension_numbers = #tpu.dot_dimension_numbers<[1], [0], [0], [1], [0, 0, 1, 1], [], []>} : vector<16x128xbf16>, vector<128x128xbf16>, vector<16x128xf32> -> vector<16x128xf32>
    %cst_5 = arith.constant dense<0.000000e+00> : vector<16xf32>
    %5 = vector.multi_reduction <add>, %4, %cst_5 [1] : vector<16x128xf32> to vector<16xf32>
    %6 = vector.shape_cast %5 : vector<16xf32> to vector<16x1xf32>
    %7 = arith.mulf %4, %4 : vector<16x128xf32>
    %cst_6 = arith.constant dense<0.000000e+00> : vector<16xf32>
    %8 = vector.multi_reduction <add>, %7, %cst_6 [1] : vector<16x128xf32> to vector<16xf32>
    %9 = vector.shape_cast %8 : vector<16xf32> to vector<16x1xf32>
    %cst_7 = arith.constant 7.812500e-03 : f32
    %10 = vector.broadcast %cst_7 : f32 to vector<16x1xf32>
    %11 = arith.mulf %6, %10 : vector<16x1xf32>
    %cst_8 = arith.constant 7.812500e-03 : f32
    %12 = vector.broadcast %cst_8 : f32 to vector<16x1xf32>
    %13 = arith.mulf %9, %12 : vector<16x1xf32>
    %14 = arith.mulf %11, %11 : vector<16x1xf32>
    %15 = arith.subf %13, %14 : vector<16x1xf32>
    %cst_9 = arith.constant 0.000000e+00 : f32
    %16 = vector.broadcast %cst_9 : f32 to vector<16x1xf32>
    %17 = arith.maximumf %15, %16 : vector<16x1xf32>
    %cst_10 = arith.constant 9.99999974E-6 : f32
    %18 = vector.broadcast %cst_10 : f32 to vector<16x1xf32>
    %19 = arith.addf %17, %18 : vector<16x1xf32>
    %20 = math.rsqrt %19 : vector<16x1xf32>
    %c0_11 = arith.constant 0 : index
    %c0_12 = arith.constant 0 : index
    %21 = vector.load %arg3[%c0_11, %c0_12] : memref<16x1xf32, #tpu.memory_space<vmem>>, vector<16x1xf32>
    %22 = arith.mulf %20, %21 : vector<16x1xf32>
    %c0_13 = arith.constant 0 : index
    %c0_14 = arith.constant 0 : index
    %23 = vector.load %arg4[%c0_13, %c0_14] : memref<16x1xf32, #tpu.memory_space<vmem>>, vector<16x1xf32>
    %24 = arith.mulf %11, %22 : vector<16x1xf32>
    %25 = arith.subf %23, %24 : vector<16x1xf32>
    %26 = vector.broadcast %22 : vector<16x1xf32> to vector<16x128xf32>
    %27 = arith.mulf %4, %26 : vector<16x128xf32>
    %28 = vector.broadcast %25 : vector<16x1xf32> to vector<16x128xf32>
    %29 = arith.addf %27, %28 : vector<16x128xf32>
    %cst_15 = arith.constant 0.000000e+00 : f32
    %30 = vector.broadcast %cst_15 : f32 to vector<16x128xf32>
    %31 = arith.maximumf %29, %30 : vector<16x128xf32>
    %32 = arith.truncf %31 : vector<16x128xf32> to vector<16x128xbf16>
    %c0_16 = arith.constant 0 : index
    %c0_17 = arith.constant 0 : index
    %33 = vector.load %arg5[%c0_16, %c0_17] : memref<16x128xbf16, #tpu.memory_space<vmem>>, vector<16x128xbf16>
    tpu.vector_store %arg5[%c0_16, %c0_17], %32 {strides = array<i32>} : memref<16x128xbf16, #tpu.memory_space<vmem>>, vector<16x128xbf16>,
    return
  }
  func.func @transform_0(%arg0: i32) -> (i32, i32, i32) {
    %c0_i32 = arith.constant 0 : i32
    %c0_i32_0 = arith.constant 0 : i32
    %c0_i32_1 = arith.constant 0 : i32
    return %c0_i32, %arg0, %c0_i32_0 : i32, i32, i32
  }
  func.func @transform_1(%arg0: i32) -> (i32, i32, i32) {
    %c0_i32 = arith.constant 0 : i32
    %c0_i32_0 = arith.constant 0 : i32
    %c0_i32_1 = arith.constant 0 : i32
    %c0_i32_2 = arith.constant 0 : i32
    return %c0_i32, %c0_i32_0, %c0_i32_1 : i32, i32, i32
  }
  func.func @transform_2(%arg0: i32) -> (i32, i32) {
    %c0_i32 = arith.constant 0 : i32
    %c0_i32_0 = arith.constant 0 : i32
    return %arg0, %c0_i32 : i32, i32
  }
  func.func @transform_3(%arg0: i32) -> (i32, i32) {
    %c0_i32 = arith.constant 0 : i32
    %c0_i32_0 = arith.constant 0 : i32
    return %arg0, %c0_i32 : i32, i32
  }
  func.func @transform_4(%arg0: i32) -> (i32, i32) {
    %c0_i32 = arith.constant 0 : i32
    %c0_i32_0 = arith.constant 0 : i32
    return %arg0, %c0_i32 : i32, i32
  }
}

module attributes {stable_mosaic.version = 11 : i64} {
  func.func @_fused_gemm_bn_act_kernel(%arg0: i32, %arg1: memref<1x32x256xbf16, #tpu.memory_space<vmem>>, %arg2: memref<1x256x32xbf16, #tpu.memory_space<vmem>>, %arg3: memref<32x1xf32, #tpu.memory_space<vmem>>, %arg4: memref<32x1xf32, #tpu.memory_space<vmem>>, %arg5: memref<32x32xbf16, #tpu.memory_space<vmem>>) attributes {dimension_semantics = [#tpu.dimension_semantics<parallel>], iteration_bounds = array<i64: 1>, scalar_prefetch = 0 : i64, scratch_operands = 0 : i64, tpu.core_type = #tpu.core_type<tc>, window_params = [{transform_indices = @transform_0, window_bounds = array<i64: 1, 32, 256>}, {pipeline_mode = #tpu.pipeline_mode<synchronous>, transform_indices = @transform_1, window_bounds = array<i64: 1, 256, 32>}, {transform_indices = @transform_2, window_bounds = array<i64: 32, 1>}, {transform_indices = @transform_3, window_bounds = array<i64: 32, 1>}, {transform_indices = @transform_4, window_bounds = array<i64: 32, 32>}]} {
    %c0 = arith.constant 0 : index
    %c0_0 = arith.constant 0 : index
    %c0_1 = arith.constant 0 : index
    %0 = vector.load %arg1[%c0, %c0_0, %c0_1] : memref<1x32x256xbf16, #tpu.memory_space<vmem>>, vector<1x32x256xbf16>
    %1 = vector.shape_cast %0 : vector<1x32x256xbf16> to vector<32x256xbf16>
    %c0_2 = arith.constant 0 : index
    %c0_3 = arith.constant 0 : index
    %c0_4 = arith.constant 0 : index
    %2 = vector.load %arg2[%c0_2, %c0_3, %c0_4] : memref<1x256x32xbf16, #tpu.memory_space<vmem>>, vector<1x256x32xbf16>
    %3 = vector.shape_cast %2 : vector<1x256x32xbf16> to vector<256x32xbf16>
    %cst = arith.constant dense<0.000000e+00> : vector<32x32xf32>
    %4 = tpu.matmul %1, %3, %cst {dimension_numbers = #tpu.dot_dimension_numbers<[1], [0], [0], [1], [0, 0, 1, 1], [], []>} : vector<32x256xbf16>, vector<256x32xbf16>, vector<32x32xf32> -> vector<32x32xf32>
    %cst_5 = arith.constant dense<0.000000e+00> : vector<32xf32>
    %5 = vector.multi_reduction <add>, %4, %cst_5 [1] : vector<32x32xf32> to vector<32xf32>
    %6 = vector.shape_cast %5 : vector<32xf32> to vector<32x1xf32>
    %7 = arith.mulf %4, %4 : vector<32x32xf32>
    %cst_6 = arith.constant dense<0.000000e+00> : vector<32xf32>
    %8 = vector.multi_reduction <add>, %7, %cst_6 [1] : vector<32x32xf32> to vector<32xf32>
    %9 = vector.shape_cast %8 : vector<32xf32> to vector<32x1xf32>
    %cst_7 = arith.constant 3.125000e-02 : f32
    %10 = vector.broadcast %cst_7 : f32 to vector<32x1xf32>
    %11 = arith.mulf %6, %10 : vector<32x1xf32>
    %cst_8 = arith.constant 3.125000e-02 : f32
    %12 = vector.broadcast %cst_8 : f32 to vector<32x1xf32>
    %13 = arith.mulf %9, %12 : vector<32x1xf32>
    %14 = arith.mulf %11, %11 : vector<32x1xf32>
    %15 = arith.subf %13, %14 : vector<32x1xf32>
    %cst_9 = arith.constant 0.000000e+00 : f32
    %16 = vector.broadcast %cst_9 : f32 to vector<32x1xf32>
    %17 = arith.maximumf %15, %16 : vector<32x1xf32>
    %cst_10 = arith.constant 9.99999974E-6 : f32
    %18 = vector.broadcast %cst_10 : f32 to vector<32x1xf32>
    %19 = arith.addf %17, %18 : vector<32x1xf32>
    %20 = math.rsqrt %19 : vector<32x1xf32>
    %c0_11 = arith.constant 0 : index
    %c0_12 = arith.constant 0 : index
    %21 = vector.load %arg3[%c0_11, %c0_12] : memref<32x1xf32, #tpu.memory_space<vmem>>, vector<32x1xf32>
    %22 = arith.mulf %20, %21 : vector<32x1xf32>
    %c0_13 = arith.constant 0 : index
    %c0_14 = arith.constant 0 : index
    %23 = vector.load %arg4[%c0_13, %c0_14] : memref<32x1xf32, #tpu.memory_space<vmem>>, vector<32x1xf32>
    %24 = arith.mulf %11, %22 : vector<32x1xf32>
    %25 = arith.subf %23, %24 : vector<32x1xf32>
    %26 = vector.broadcast %22 : vector<32x1xf32> to vector<32x32xf32>
    %27 = arith.mulf %4, %26 : vector<32x32xf32>
    %28 = vector.broadcast %25 : vector<32x1xf32> to vector<32x32xf32>
    %29 = arith.addf %27, %28 : vector<32x32xf32>
    %cst_15 = arith.constant 0.000000e+00 : f32
    %30 = vector.broadcast %cst_15 : f32 to vector<32x32xf32>
    %31 = arith.maximumf %29, %30 : vector<32x32xf32>
    %32 = arith.truncf %31 : vector<32x32xf32> to vector<32x32xbf16>
    %c0_16 = arith.constant 0 : index
    %c0_17 = arith.constant 0 : index
    %33 = vector.load %arg5[%c0_16, %c0_17] : memref<32x32xbf16, #tpu.memory_space<vmem>>, vector<32x32xbf16>
    tpu.vector_store %arg5[%c0_16, %c0_17], %32 {strides = array<i32>} : memref<32x32xbf16, #tpu.memory_space<vmem>>, vector<32x32xbf16>,
    return
  }
  func.func @transform_0(%arg0: i32) -> (i32, i32, i32) {
    %c0_i32 = arith.constant 0 : i32
    %c0_i32_0 = arith.constant 0 : i32
    %c0_i32_1 = arith.constant 0 : i32
    return %c0_i32, %arg0, %c0_i32_0 : i32, i32, i32
  }
  func.func @transform_1(%arg0: i32) -> (i32, i32, i32) {
    %c0_i32 = arith.constant 0 : i32
    %c0_i32_0 = arith.constant 0 : i32
    %c0_i32_1 = arith.constant 0 : i32
    %c0_i32_2 = arith.constant 0 : i32
    return %c0_i32, %c0_i32_0, %c0_i32_1 : i32, i32, i32
  }
  func.func @transform_2(%arg0: i32) -> (i32, i32) {
    %c0_i32 = arith.constant 0 : i32
    %c0_i32_0 = arith.constant 0 : i32
    return %arg0, %c0_i32 : i32, i32
  }
  func.func @transform_3(%arg0: i32) -> (i32, i32) {
    %c0_i32 = arith.constant 0 : i32
    %c0_i32_0 = arith.constant 0 : i32
    return %arg0, %c0_i32 : i32, i32
  }
  func.func @transform_4(%arg0: i32) -> (i32, i32) {
    %c0_i32 = arith.constant 0 : i32
    %c0_i32_0 = arith.constant 0 : i32
    return %arg0, %c0_i32 : i32, i32
  }
}

module attributes {stable_mosaic.version = 11 : i64} {
  func.func @_fused_head_kernel(%arg0: i32, %arg1: memref<2x512xbf16, #tpu.memory_space<vmem>>, %arg2: memref<512x32xbf16, #tpu.memory_space<vmem>>, %arg3: memref<1x32xf32, #tpu.memory_space<vmem>>, %arg4: memref<1x32xf32, #tpu.memory_space<vmem>>, %arg5: memref<2x32xf32, #tpu.memory_space<vmem>>, %arg6: memref<32x512xbf16, #tpu.memory_space<vmem>>, %arg7: memref<1x512xf32, #tpu.memory_space<vmem>>, %arg8: memref<1x512xf32, #tpu.memory_space<vmem>>, %arg9: memref<2x32xf32, #tpu.memory_space<vmem>>, %arg10: memref<2x512xbf16, #tpu.memory_space<vmem>>) attributes {dimension_semantics = [#tpu.dimension_semantics<arbitrary>], iteration_bounds = array<i64: 1>, scalar_prefetch = 0 : i64, scratch_operands = 0 : i64, tpu.core_type = #tpu.core_type<tc>, window_params = [{pipeline_mode = #tpu.pipeline_mode<synchronous>, transform_indices = @transform_0, window_bounds = array<i64: 2, 512>}, {pipeline_mode = #tpu.pipeline_mode<synchronous>, transform_indices = @transform_1, window_bounds = array<i64: 512, 32>}, {pipeline_mode = #tpu.pipeline_mode<synchronous>, transform_indices = @transform_2, window_bounds = array<i64: 1, 32>}, {pipeline_mode = #tpu.pipeline_mode<synchronous>, transform_indices = @transform_3, window_bounds = array<i64: 1, 32>}, {pipeline_mode = #tpu.pipeline_mode<synchronous>, transform_indices = @transform_4, window_bounds = array<i64: 2, 32>}, {pipeline_mode = #tpu.pipeline_mode<synchronous>, transform_indices = @transform_5, window_bounds = array<i64: 32, 512>}, {pipeline_mode = #tpu.pipeline_mode<synchronous>, transform_indices = @transform_6, window_bounds = array<i64: 1, 512>}, {pipeline_mode = #tpu.pipeline_mode<synchronous>, transform_indices = @transform_7, window_bounds = array<i64: 1, 512>}, {pipeline_mode = #tpu.pipeline_mode<synchronous>, transform_indices = @transform_8, window_bounds = array<i64: 2, 32>}, {pipeline_mode = #tpu.pipeline_mode<synchronous>, transform_indices = @transform_9, window_bounds = array<i64: 2, 512>}]} {
    %c0 = arith.constant 0 : index
    %c0_0 = arith.constant 0 : index
    %0 = vector.load %arg1[%c0, %c0_0] : memref<2x512xbf16, #tpu.memory_space<vmem>>, vector<2x512xbf16>
    %c0_1 = arith.constant 0 : index
    %c0_2 = arith.constant 0 : index
    %1 = vector.load %arg2[%c0_1, %c0_2] : memref<512x32xbf16, #tpu.memory_space<vmem>>, vector<512x32xbf16>
    %cst = arith.constant dense<0.000000e+00> : vector<2x32xf32>
    %2 = tpu.matmul %0, %1, %cst {dimension_numbers = #tpu.dot_dimension_numbers<[1], [0], [0], [1], [0, 0, 1, 1], [], []>} : vector<2x512xbf16>, vector<512x32xbf16>, vector<2x32xf32> -> vector<2x32xf32>
    %cst_3 = arith.constant dense<0.000000e+00> : vector<32xf32>
    %3 = vector.multi_reduction <add>, %2, %cst_3 [0] : vector<2x32xf32> to vector<32xf32>
    %4 = vector.shape_cast %3 : vector<32xf32> to vector<1x32xf32>
    %5 = arith.mulf %2, %2 : vector<2x32xf32>
    %cst_4 = arith.constant dense<0.000000e+00> : vector<32xf32>
    %6 = vector.multi_reduction <add>, %5, %cst_4 [0] : vector<2x32xf32> to vector<32xf32>
    %7 = vector.shape_cast %6 : vector<32xf32> to vector<1x32xf32>
    %cst_5 = arith.constant 5.000000e-01 : f32
    %8 = vector.broadcast %cst_5 : f32 to vector<1x32xf32>
    %9 = arith.mulf %4, %8 : vector<1x32xf32>
    %cst_6 = arith.constant 5.000000e-01 : f32
    %10 = vector.broadcast %cst_6 : f32 to vector<1x32xf32>
    %11 = arith.mulf %7, %10 : vector<1x32xf32>
    %12 = arith.mulf %9, %9 : vector<1x32xf32>
    %13 = arith.subf %11, %12 : vector<1x32xf32>
    %cst_7 = arith.constant 0.000000e+00 : f32
    %14 = vector.broadcast %cst_7 : f32 to vector<1x32xf32>
    %15 = arith.maximumf %13, %14 : vector<1x32xf32>
    %cst_8 = arith.constant 9.99999974E-6 : f32
    %16 = vector.broadcast %cst_8 : f32 to vector<1x32xf32>
    %17 = arith.addf %15, %16 : vector<1x32xf32>
    %18 = math.rsqrt %17 : vector<1x32xf32>
    %c0_9 = arith.constant 0 : index
    %c0_10 = arith.constant 0 : index
    %19 = vector.load %arg3[%c0_9, %c0_10] : memref<1x32xf32, #tpu.memory_space<vmem>>, vector<1x32xf32>
    %20 = arith.mulf %18, %19 : vector<1x32xf32>
    %c0_11 = arith.constant 0 : index
    %c0_12 = arith.constant 0 : index
    %21 = vector.load %arg4[%c0_11, %c0_12] : memref<1x32xf32, #tpu.memory_space<vmem>>, vector<1x32xf32>
    %22 = arith.mulf %9, %20 : vector<1x32xf32>
    %23 = arith.subf %21, %22 : vector<1x32xf32>
    %24 = vector.broadcast %20 : vector<1x32xf32> to vector<2x32xf32>
    %25 = arith.mulf %2, %24 : vector<2x32xf32>
    %26 = vector.broadcast %23 : vector<1x32xf32> to vector<2x32xf32>
    %27 = arith.addf %25, %26 : vector<2x32xf32>
    %c0_13 = arith.constant 0 : index
    %c0_14 = arith.constant 0 : index
    %28 = vector.load %arg9[%c0_13, %c0_14] : memref<2x32xf32, #tpu.memory_space<vmem>>, vector<2x32xf32>
    tpu.vector_store %arg9[%c0_13, %c0_14], %27 {strides = array<i32>} : memref<2x32xf32, #tpu.memory_space<vmem>>, vector<2x32xf32>,
    %c0_15 = arith.constant 0 : index
    %c0_16 = arith.constant 0 : index
    %29 = vector.load %arg5[%c0_15, %c0_16] : memref<2x32xf32, #tpu.memory_space<vmem>>, vector<2x32xf32>
    %cst_17 = arith.constant 5.000000e-01 : f32
    %30 = vector.broadcast %cst_17 : f32 to vector<2x32xf32>
    %31 = arith.mulf %30, %27 : vector<2x32xf32>
    %32 = math.exp %31 : vector<2x32xf32>
    %33 = arith.mulf %29, %32 : vector<2x32xf32>
    %34 = arith.addf %33, %27 : vector<2x32xf32>
    %35 = arith.truncf %34 : vector<2x32xf32> to vector<2x32xbf16>
    %c0_18 = arith.constant 0 : index
    %c0_19 = arith.constant 0 : index
    %36 = vector.load %arg6[%c0_18, %c0_19] : memref<32x512xbf16, #tpu.memory_space<vmem>>, vector<32x512xbf16>
    %cst_20 = arith.constant dense<0.000000e+00> : vector<2x512xf32>
    %37 = tpu.matmul %35, %36, %cst_20 {dimension_numbers = #tpu.dot_dimension_numbers<[1], [0], [0], [1], [0, 0, 1, 1], [], []>} : vector<2x32xbf16>, vector<32x512xbf16>, vector<2x512xf32> -> vector<2x512xf32>
    %cst_21 = arith.constant dense<0.000000e+00> : vector<512xf32>
    %38 = vector.multi_reduction <add>, %37, %cst_21 [0] : vector<2x512xf32> to vector<512xf32>
    %39 = vector.shape_cast %38 : vector<512xf32> to vector<1x512xf32>
    %40 = arith.mulf %37, %37 : vector<2x512xf32>
    %cst_22 = arith.constant dense<0.000000e+00> : vector<512xf32>
    %41 = vector.multi_reduction <add>, %40, %cst_22 [0] : vector<2x512xf32> to vector<512xf32>
    %42 = vector.shape_cast %41 : vector<512xf32> to vector<1x512xf32>
    %cst_23 = arith.constant 5.000000e-01 : f32
    %43 = vector.broadcast %cst_23 : f32 to vector<1x512xf32>
    %44 = arith.mulf %39, %43 : vector<1x512xf32>
    %cst_24 = arith.constant 5.000000e-01 : f32
    %45 = vector.broadcast %cst_24 : f32 to vector<1x512xf32>
    %46 = arith.mulf %42, %45 : vector<1x512xf32>
    %47 = arith.mulf %44, %44 : vector<1x512xf32>
    %48 = arith.subf %46, %47 : vector<1x512xf32>
    %cst_25 = arith.constant 0.000000e+00 : f32
    %49 = vector.broadcast %cst_25 : f32 to vector<1x512xf32>
    %50 = arith.maximumf %48, %49 : vector<1x512xf32>
    %cst_26 = arith.constant 9.99999974E-6 : f32
    %51 = vector.broadcast %cst_26 : f32 to vector<1x512xf32>
    %52 = arith.addf %50, %51 : vector<1x512xf32>
    %53 = math.rsqrt %52 : vector<1x512xf32>
    %c0_27 = arith.constant 0 : index
    %c0_28 = arith.constant 0 : index
    %54 = vector.load %arg7[%c0_27, %c0_28] : memref<1x512xf32, #tpu.memory_space<vmem>>, vector<1x512xf32>
    %55 = arith.mulf %53, %54 : vector<1x512xf32>
    %c0_29 = arith.constant 0 : index
    %c0_30 = arith.constant 0 : index
    %56 = vector.load %arg8[%c0_29, %c0_30] : memref<1x512xf32, #tpu.memory_space<vmem>>, vector<1x512xf32>
    %57 = arith.mulf %44, %55 : vector<1x512xf32>
    %58 = arith.subf %56, %57 : vector<1x512xf32>
    %59 = vector.broadcast %55 : vector<1x512xf32> to vector<2x512xf32>
    %60 = arith.mulf %37, %59 : vector<2x512xf32>
    %61 = vector.broadcast %58 : vector<1x512xf32> to vector<2x512xf32>
    %62 = arith.addf %60, %61 : vector<2x512xf32>
    %cst_31 = arith.constant 0.000000e+00 : f32
    %63 = vector.broadcast %cst_31 : f32 to vector<2x512xf32>
    %64 = arith.maximumf %62, %63 : vector<2x512xf32>
    %65 = arith.truncf %64 : vector<2x512xf32> to vector<2x512xbf16>
    %c0_32 = arith.constant 0 : index
    %c0_33 = arith.constant 0 : index
    %66 = vector.load %arg10[%c0_32, %c0_33] : memref<2x512xbf16, #tpu.memory_space<vmem>>, vector<2x512xbf16>
    tpu.vector_store %arg10[%c0_32, %c0_33], %65 {strides = array<i32>} : memref<2x512xbf16, #tpu.memory_space<vmem>>, vector<2x512xbf16>,
    return
  }
  func.func @transform_0(%arg0: i32) -> (i32, i32) {
    %c0_i32 = arith.constant 0 : i32
    %c0_i32_0 = arith.constant 0 : i32
    %c0_i32_1 = arith.constant 0 : i32
    return %c0_i32, %c0_i32_0 : i32, i32
  }
  func.func @transform_1(%arg0: i32) -> (i32, i32) {
    %c0_i32 = arith.constant 0 : i32
    %c0_i32_0 = arith.constant 0 : i32
    %c0_i32_1 = arith.constant 0 : i32
    return %c0_i32, %c0_i32_0 : i32, i32
  }
  func.func @transform_2(%arg0: i32) -> (i32, i32) {
    %c0_i32 = arith.constant 0 : i32
    %c0_i32_0 = arith.constant 0 : i32
    %c0_i32_1 = arith.constant 0 : i32
    return %c0_i32, %c0_i32_0 : i32, i32
  }
  func.func @transform_3(%arg0: i32) -> (i32, i32) {
    %c0_i32 = arith.constant 0 : i32
    %c0_i32_0 = arith.constant 0 : i32
    %c0_i32_1 = arith.constant 0 : i32
    return %c0_i32, %c0_i32_0 : i32, i32
  }
  func.func @transform_4(%arg0: i32) -> (i32, i32) {
    %c0_i32 = arith.constant 0 : i32
    %c0_i32_0 = arith.constant 0 : i32
    %c0_i32_1 = arith.constant 0 : i32
    return %c0_i32, %c0_i32_0 : i32, i32
  }
  func.func @transform_5(%arg0: i32) -> (i32, i32) {
    %c0_i32 = arith.constant 0 : i32
    %c0_i32_0 = arith.constant 0 : i32
    %c0_i32_1 = arith.constant 0 : i32
    return %c0_i32, %c0_i32_0 : i32, i32
  }
  func.func @transform_6(%arg0: i32) -> (i32, i32) {
    %c0_i32 = arith.constant 0 : i32
    %c0_i32_0 = arith.constant 0 : i32
    %c0_i32_1 = arith.constant 0 : i32
    return %c0_i32, %c0_i32_0 : i32, i32
  }
  func.func @transform_7(%arg0: i32) -> (i32, i32) {
    %c0_i32 = arith.constant 0 : i32
    %c0_i32_0 = arith.constant 0 : i32
    %c0_i32_1 = arith.constant 0 : i32
    return %c0_i32, %c0_i32_0 : i32, i32
  }
  func.func @transform_8(%arg0: i32) -> (i32, i32) {
    %c0_i32 = arith.constant 0 : i32
    %c0_i32_0 = arith.constant 0 : i32
    %c0_i32_1 = arith.constant 0 : i32
    return %c0_i32, %c0_i32_0 : i32, i32
  }
  func.func @transform_9(%arg0: i32) -> (i32, i32) {
    %c0_i32 = arith.constant 0 : i32
    %c0_i32_0 = arith.constant 0 : i32
    %c0_i32_1 = arith.constant 0 : i32
    return %c0_i32, %c0_i32_0 : i32, i32
  }
}

module attributes {stable_mosaic.version = 11 : i64} {
  func.func @_fused_gemm_bn_act_kernel(%arg0: i32, %arg1: memref<4x16x128xbf16, #tpu.memory_space<vmem>>, %arg2: memref<4x128x32xbf16, #tpu.memory_space<vmem>>, %arg3: memref<16x1xf32, #tpu.memory_space<vmem>>, %arg4: memref<16x1xf32, #tpu.memory_space<vmem>>, %arg5: memref<16x128xbf16, #tpu.memory_space<vmem>>) attributes {dimension_semantics = [#tpu.dimension_semantics<parallel>], iteration_bounds = array<i64: 1>, scalar_prefetch = 0 : i64, scratch_operands = 0 : i64, tpu.core_type = #tpu.core_type<tc>, window_params = [{transform_indices = @transform_0, window_bounds = array<i64: 4, 16, 128>}, {pipeline_mode = #tpu.pipeline_mode<synchronous>, transform_indices = @transform_1, window_bounds = array<i64: 4, 128, 32>}, {transform_indices = @transform_2, window_bounds = array<i64: 16, 1>}, {transform_indices = @transform_3, window_bounds = array<i64: 16, 1>}, {transform_indices = @transform_4, window_bounds = array<i64: 16, 128>}]} {
    %c0 = arith.constant 0 : index
    %c0_0 = arith.constant 0 : index
    %c0_1 = arith.constant 0 : index
    %0 = vector.load %arg1[%c0, %c0_0, %c0_1] : memref<4x16x128xbf16, #tpu.memory_space<vmem>>, vector<1x16x128xbf16>
    %1 = vector.shape_cast %0 : vector<1x16x128xbf16> to vector<16x128xbf16>
    %c0_2 = arith.constant 0 : index
    %c0_3 = arith.constant 0 : index
    %c0_4 = arith.constant 0 : index
    %2 = vector.load %arg2[%c0_2, %c0_3, %c0_4] : memref<4x128x32xbf16, #tpu.memory_space<vmem>>, vector<1x128x32xbf16>
    %3 = vector.shape_cast %2 : vector<1x128x32xbf16> to vector<128x32xbf16>
    %cst = arith.constant dense<0.000000e+00> : vector<16x32xf32>
    %4 = tpu.matmul %1, %3, %cst {dimension_numbers = #tpu.dot_dimension_numbers<[1], [0], [0], [1], [0, 0, 1, 1], [], []>} : vector<16x128xbf16>, vector<128x32xbf16>, vector<16x32xf32> -> vector<16x32xf32>
    %c1 = arith.constant 1 : index
    %c0_5 = arith.constant 0 : index
    %c0_6 = arith.constant 0 : index
    %5 = vector.load %arg1[%c1, %c0_5, %c0_6] : memref<4x16x128xbf16, #tpu.memory_space<vmem>>, vector<1x16x128xbf16>
    %6 = vector.shape_cast %5 : vector<1x16x128xbf16> to vector<16x128xbf16>
    %c1_7 = arith.constant 1 : index
    %c0_8 = arith.constant 0 : index
    %c0_9 = arith.constant 0 : index
    %7 = vector.load %arg2[%c1_7, %c0_8, %c0_9] : memref<4x128x32xbf16, #tpu.memory_space<vmem>>, vector<1x128x32xbf16>
    %8 = vector.shape_cast %7 : vector<1x128x32xbf16> to vector<128x32xbf16>
    %cst_10 = arith.constant dense<0.000000e+00> : vector<16x32xf32>
    %9 = tpu.matmul %6, %8, %cst_10 {dimension_numbers = #tpu.dot_dimension_numbers<[1], [0], [0], [1], [0, 0, 1, 1], [], []>} : vector<16x128xbf16>, vector<128x32xbf16>, vector<16x32xf32> -> vector<16x32xf32>
    %c2 = arith.constant 2 : index
    %c0_11 = arith.constant 0 : index
    %c0_12 = arith.constant 0 : index
    %10 = vector.load %arg1[%c2, %c0_11, %c0_12] : memref<4x16x128xbf16, #tpu.memory_space<vmem>>, vector<1x16x128xbf16>
    %11 = vector.shape_cast %10 : vector<1x16x128xbf16> to vector<16x128xbf16>
    %c2_13 = arith.constant 2 : index
    %c0_14 = arith.constant 0 : index
    %c0_15 = arith.constant 0 : index
    %12 = vector.load %arg2[%c2_13, %c0_14, %c0_15] : memref<4x128x32xbf16, #tpu.memory_space<vmem>>, vector<1x128x32xbf16>
    %13 = vector.shape_cast %12 : vector<1x128x32xbf16> to vector<128x32xbf16>
    %cst_16 = arith.constant dense<0.000000e+00> : vector<16x32xf32>
    %14 = tpu.matmul %11, %13, %cst_16 {dimension_numbers = #tpu.dot_dimension_numbers<[1], [0], [0], [1], [0, 0, 1, 1], [], []>} : vector<16x128xbf16>, vector<128x32xbf16>, vector<16x32xf32> -> vector<16x32xf32>
    %c3 = arith.constant 3 : index
    %c0_17 = arith.constant 0 : index
    %c0_18 = arith.constant 0 : index
    %15 = vector.load %arg1[%c3, %c0_17, %c0_18] : memref<4x16x128xbf16, #tpu.memory_space<vmem>>, vector<1x16x128xbf16>
    %16 = vector.shape_cast %15 : vector<1x16x128xbf16> to vector<16x128xbf16>
    %c3_19 = arith.constant 3 : index
    %c0_20 = arith.constant 0 : index
    %c0_21 = arith.constant 0 : index
    %17 = vector.load %arg2[%c3_19, %c0_20, %c0_21] : memref<4x128x32xbf16, #tpu.memory_space<vmem>>, vector<1x128x32xbf16>
    %18 = vector.shape_cast %17 : vector<1x128x32xbf16> to vector<128x32xbf16>
    %cst_22 = arith.constant dense<0.000000e+00> : vector<16x32xf32>
    %19 = tpu.matmul %16, %18, %cst_22 {dimension_numbers = #tpu.dot_dimension_numbers<[1], [0], [0], [1], [0, 0, 1, 1], [], []>} : vector<16x128xbf16>, vector<128x32xbf16>, vector<16x32xf32> -> vector<16x32xf32>
    %20 = tpu.concatenate %4, %9, %14, %19 in 1 : vector<16x32xf32>, vector<16x32xf32>, vector<16x32xf32>, vector<16x32xf32> -> vector<16x128xf32>
    %cst_23 = arith.constant dense<0.000000e+00> : vector<16xf32>
    %21 = vector.multi_reduction <add>, %20, %cst_23 [1] : vector<16x128xf32> to vector<16xf32>
    %22 = vector.shape_cast %21 : vector<16xf32> to vector<16x1xf32>
    %23 = arith.mulf %20, %20 : vector<16x128xf32>
    %cst_24 = arith.constant dense<0.000000e+00> : vector<16xf32>
    %24 = vector.multi_reduction <add>, %23, %cst_24 [1] : vector<16x128xf32> to vector<16xf32>
    %25 = vector.shape_cast %24 : vector<16xf32> to vector<16x1xf32>
    %cst_25 = arith.constant 7.812500e-03 : f32
    %26 = vector.broadcast %cst_25 : f32 to vector<16x1xf32>
    %27 = arith.mulf %22, %26 : vector<16x1xf32>
    %cst_26 = arith.constant 7.812500e-03 : f32
    %28 = vector.broadcast %cst_26 : f32 to vector<16x1xf32>
    %29 = arith.mulf %25, %28 : vector<16x1xf32>
    %30 = arith.mulf %27, %27 : vector<16x1xf32>
    %31 = arith.subf %29, %30 : vector<16x1xf32>
    %cst_27 = arith.constant 0.000000e+00 : f32
    %32 = vector.broadcast %cst_27 : f32 to vector<16x1xf32>
    %33 = arith.maximumf %31, %32 : vector<16x1xf32>
    %cst_28 = arith.constant 9.99999974E-6 : f32
    %34 = vector.broadcast %cst_28 : f32 to vector<16x1xf32>
    %35 = arith.addf %33, %34 : vector<16x1xf32>
    %36 = math.rsqrt %35 : vector<16x1xf32>
    %c0_29 = arith.constant 0 : index
    %c0_30 = arith.constant 0 : index
    %37 = vector.load %arg3[%c0_29, %c0_30] : memref<16x1xf32, #tpu.memory_space<vmem>>, vector<16x1xf32>
    %38 = arith.mulf %36, %37 : vector<16x1xf32>
    %c0_31 = arith.constant 0 : index
    %c0_32 = arith.constant 0 : index
    %39 = vector.load %arg4[%c0_31, %c0_32] : memref<16x1xf32, #tpu.memory_space<vmem>>, vector<16x1xf32>
    %40 = arith.mulf %27, %38 : vector<16x1xf32>
    %41 = arith.subf %39, %40 : vector<16x1xf32>
    %42 = vector.broadcast %38 : vector<16x1xf32> to vector<16x128xf32>
    %43 = arith.mulf %20, %42 : vector<16x128xf32>
    %44 = vector.broadcast %41 : vector<16x1xf32> to vector<16x128xf32>
    %45 = arith.addf %43, %44 : vector<16x128xf32>
    %cst_33 = arith.constant 0.000000e+00 : f32
    %46 = vector.broadcast %cst_33 : f32 to vector<16x128xf32>
    %47 = arith.maximumf %45, %46 : vector<16x128xf32>
    %48 = arith.truncf %47 : vector<16x128xf32> to vector<16x128xbf16>
    %c0_34 = arith.constant 0 : index
    %c0_35 = arith.constant 0 : index
    %49 = vector.load %arg5[%c0_34, %c0_35] : memref<16x128xbf16, #tpu.memory_space<vmem>>, vector<16x128xbf16>
    tpu.vector_store %arg5[%c0_34, %c0_35], %48 {strides = array<i32>} : memref<16x128xbf16, #tpu.memory_space<vmem>>, vector<16x128xbf16>,
    return
  }
  func.func @transform_0(%arg0: i32) -> (i32, i32, i32) {
    %c0_i32 = arith.constant 0 : i32
    %c0_i32_0 = arith.constant 0 : i32
    %c0_i32_1 = arith.constant 0 : i32
    return %c0_i32, %arg0, %c0_i32_0 : i32, i32, i32
  }
  func.func @transform_1(%arg0: i32) -> (i32, i32, i32) {
    %c0_i32 = arith.constant 0 : i32
    %c0_i32_0 = arith.constant 0 : i32
    %c0_i32_1 = arith.constant 0 : i32
    %c0_i32_2 = arith.constant 0 : i32
    return %c0_i32, %c0_i32_0, %c0_i32_1 : i32, i32, i32
  }
  func.func @transform_2(%arg0: i32) -> (i32, i32) {
    %c0_i32 = arith.constant 0 : i32
    %c0_i32_0 = arith.constant 0 : i32
    return %arg0, %c0_i32 : i32, i32
  }
  func.func @transform_3(%arg0: i32) -> (i32, i32) {
    %c0_i32 = arith.constant 0 : i32
    %c0_i32_0 = arith.constant 0 : i32
    return %arg0, %c0_i32 : i32, i32
  }
  func.func @transform_4(%arg0: i32) -> (i32, i32) {
    %c0_i32 = arith.constant 0 : i32
    %c0_i32_0 = arith.constant 0 : i32
    return %arg0, %c0_i32 : i32, i32
  }
}

module attributes {stable_mosaic.version = 11 : i64} {
  func.func @_fused_gemm_bn_act_kernel(%arg0: i32, %arg1: memref<4x8x64xbf16, #tpu.memory_space<vmem>>, %arg2: memref<4x64x128xbf16, #tpu.memory_space<vmem>>, %arg3: memref<8x1xf32, #tpu.memory_space<vmem>>, %arg4: memref<8x1xf32, #tpu.memory_space<vmem>>, %arg5: memref<8x512xbf16, #tpu.memory_space<vmem>>) attributes {dimension_semantics = [#tpu.dimension_semantics<parallel>], iteration_bounds = array<i64: 1>, scalar_prefetch = 0 : i64, scratch_operands = 0 : i64, tpu.core_type = #tpu.core_type<tc>, window_params = [{transform_indices = @transform_0, window_bounds = array<i64: 4, 8, 64>}, {pipeline_mode = #tpu.pipeline_mode<synchronous>, transform_indices = @transform_1, window_bounds = array<i64: 4, 64, 128>}, {transform_indices = @transform_2, window_bounds = array<i64: 8, 1>}, {transform_indices = @transform_3, window_bounds = array<i64: 8, 1>}, {transform_indices = @transform_4, window_bounds = array<i64: 8, 512>}]} {
    %c0 = arith.constant 0 : index
    %c0_0 = arith.constant 0 : index
    %c0_1 = arith.constant 0 : index
    %0 = vector.load %arg1[%c0, %c0_0, %c0_1] : memref<4x8x64xbf16, #tpu.memory_space<vmem>>, vector<1x8x64xbf16>
    %1 = vector.shape_cast %0 : vector<1x8x64xbf16> to vector<8x64xbf16>
    %c0_2 = arith.constant 0 : index
    %c0_3 = arith.constant 0 : index
    %c0_4 = arith.constant 0 : index
    %2 = vector.load %arg2[%c0_2, %c0_3, %c0_4] : memref<4x64x128xbf16, #tpu.memory_space<vmem>>, vector<1x64x128xbf16>
    %3 = vector.shape_cast %2 : vector<1x64x128xbf16> to vector<64x128xbf16>
    %cst = arith.constant dense<0.000000e+00> : vector<8x128xf32>
    %4 = tpu.matmul %1, %3, %cst {dimension_numbers = #tpu.dot_dimension_numbers<[1], [0], [0], [1], [0, 0, 1, 1], [], []>} : vector<8x64xbf16>, vector<64x128xbf16>, vector<8x128xf32> -> vector<8x128xf32>
    %c1 = arith.constant 1 : index
    %c0_5 = arith.constant 0 : index
    %c0_6 = arith.constant 0 : index
    %5 = vector.load %arg1[%c1, %c0_5, %c0_6] : memref<4x8x64xbf16, #tpu.memory_space<vmem>>, vector<1x8x64xbf16>
    %6 = vector.shape_cast %5 : vector<1x8x64xbf16> to vector<8x64xbf16>
    %c1_7 = arith.constant 1 : index
    %c0_8 = arith.constant 0 : index
    %c0_9 = arith.constant 0 : index
    %7 = vector.load %arg2[%c1_7, %c0_8, %c0_9] : memref<4x64x128xbf16, #tpu.memory_space<vmem>>, vector<1x64x128xbf16>
    %8 = vector.shape_cast %7 : vector<1x64x128xbf16> to vector<64x128xbf16>
    %cst_10 = arith.constant dense<0.000000e+00> : vector<8x128xf32>
    %9 = tpu.matmul %6, %8, %cst_10 {dimension_numbers = #tpu.dot_dimension_numbers<[1], [0], [0], [1], [0, 0, 1, 1], [], []>} : vector<8x64xbf16>, vector<64x128xbf16>, vector<8x128xf32> -> vector<8x128xf32>
    %c2 = arith.constant 2 : index
    %c0_11 = arith.constant 0 : index
    %c0_12 = arith.constant 0 : index
    %10 = vector.load %arg1[%c2, %c0_11, %c0_12] : memref<4x8x64xbf16, #tpu.memory_space<vmem>>, vector<1x8x64xbf16>
    %11 = vector.shape_cast %10 : vector<1x8x64xbf16> to vector<8x64xbf16>
    %c2_13 = arith.constant 2 : index
    %c0_14 = arith.constant 0 : index
    %c0_15 = arith.constant 0 : index
    %12 = vector.load %arg2[%c2_13, %c0_14, %c0_15] : memref<4x64x128xbf16, #tpu.memory_space<vmem>>, vector<1x64x128xbf16>
    %13 = vector.shape_cast %12 : vector<1x64x128xbf16> to vector<64x128xbf16>
    %cst_16 = arith.constant dense<0.000000e+00> : vector<8x128xf32>
    %14 = tpu.matmul %11, %13, %cst_16 {dimension_numbers = #tpu.dot_dimension_numbers<[1], [0], [0], [1], [0, 0, 1, 1], [], []>} : vector<8x64xbf16>, vector<64x128xbf16>, vector<8x128xf32> -> vector<8x128xf32>
    %c3 = arith.constant 3 : index
    %c0_17 = arith.constant 0 : index
    %c0_18 = arith.constant 0 : index
    %15 = vector.load %arg1[%c3, %c0_17, %c0_18] : memref<4x8x64xbf16, #tpu.memory_space<vmem>>, vector<1x8x64xbf16>
    %16 = vector.shape_cast %15 : vector<1x8x64xbf16> to vector<8x64xbf16>
    %c3_19 = arith.constant 3 : index
    %c0_20 = arith.constant 0 : index
    %c0_21 = arith.constant 0 : index
    %17 = vector.load %arg2[%c3_19, %c0_20, %c0_21] : memref<4x64x128xbf16, #tpu.memory_space<vmem>>, vector<1x64x128xbf16>
    %18 = vector.shape_cast %17 : vector<1x64x128xbf16> to vector<64x128xbf16>
    %cst_22 = arith.constant dense<0.000000e+00> : vector<8x128xf32>
    %19 = tpu.matmul %16, %18, %cst_22 {dimension_numbers = #tpu.dot_dimension_numbers<[1], [0], [0], [1], [0, 0, 1, 1], [], []>} : vector<8x64xbf16>, vector<64x128xbf16>, vector<8x128xf32> -> vector<8x128xf32>
    %20 = tpu.concatenate %4, %9, %14, %19 in 1 : vector<8x128xf32>, vector<8x128xf32>, vector<8x128xf32>, vector<8x128xf32> -> vector<8x512xf32>
    %cst_23 = arith.constant dense<0.000000e+00> : vector<8xf32>
    %21 = vector.multi_reduction <add>, %20, %cst_23 [1] : vector<8x512xf32> to vector<8xf32>
    %22 = vector.shape_cast %21 : vector<8xf32> to vector<8x1xf32>
    %23 = arith.mulf %20, %20 : vector<8x512xf32>
    %cst_24 = arith.constant dense<0.000000e+00> : vector<8xf32>
    %24 = vector.multi_reduction <add>, %23, %cst_24 [1] : vector<8x512xf32> to vector<8xf32>
    %25 = vector.shape_cast %24 : vector<8xf32> to vector<8x1xf32>
    %cst_25 = arith.constant 0.001953125 : f32
    %26 = vector.broadcast %cst_25 : f32 to vector<8x1xf32>
    %27 = arith.mulf %22, %26 : vector<8x1xf32>
    %cst_26 = arith.constant 0.001953125 : f32
    %28 = vector.broadcast %cst_26 : f32 to vector<8x1xf32>
    %29 = arith.mulf %25, %28 : vector<8x1xf32>
    %30 = arith.mulf %27, %27 : vector<8x1xf32>
    %31 = arith.subf %29, %30 : vector<8x1xf32>
    %cst_27 = arith.constant 0.000000e+00 : f32
    %32 = vector.broadcast %cst_27 : f32 to vector<8x1xf32>
    %33 = arith.maximumf %31, %32 : vector<8x1xf32>
    %cst_28 = arith.constant 9.99999974E-6 : f32
    %34 = vector.broadcast %cst_28 : f32 to vector<8x1xf32>
    %35 = arith.addf %33, %34 : vector<8x1xf32>
    %36 = math.rsqrt %35 : vector<8x1xf32>
    %c0_29 = arith.constant 0 : index
    %c0_30 = arith.constant 0 : index
    %37 = vector.load %arg3[%c0_29, %c0_30] : memref<8x1xf32, #tpu.memory_space<vmem>>, vector<8x1xf32>
    %38 = arith.mulf %36, %37 : vector<8x1xf32>
    %c0_31 = arith.constant 0 : index
    %c0_32 = arith.constant 0 : index
    %39 = vector.load %arg4[%c0_31, %c0_32] : memref<8x1xf32, #tpu.memory_space<vmem>>, vector<8x1xf32>
    %40 = arith.mulf %27, %38 : vector<8x1xf32>
    %41 = arith.subf %39, %40 : vector<8x1xf32>
    %42 = vector.broadcast %38 : vector<8x1xf32> to vector<8x512xf32>
    %43 = arith.mulf %20, %42 : vector<8x512xf32>
    %44 = vector.broadcast %41 : vector<8x1xf32> to vector<8x512xf32>
    %45 = arith.addf %43, %44 : vector<8x512xf32>
    %46 = math.tanh %45 : vector<8x512xf32>
    %47 = arith.truncf %46 : vector<8x512xf32> to vector<8x512xbf16>
    %c0_33 = arith.constant 0 : index
    %c0_34 = arith.constant 0 : index
    %48 = vector.load %arg5[%c0_33, %c0_34] : memref<8x512xbf16, #tpu.memory_space<vmem>>, vector<8x512xbf16>
    tpu.vector_store %arg5[%c0_33, %c0_34], %47 {strides = array<i32>} : memref<8x512xbf16, #tpu.memory_space<vmem>>, vector<8x512xbf16>,
    return
  }
  func.func @transform_0(%arg0: i32) -> (i32, i32, i32) {
    %c0_i32 = arith.constant 0 : i32
    %c0_i32_0 = arith.constant 0 : i32
    %c0_i32_1 = arith.constant 0 : i32
    return %c0_i32, %arg0, %c0_i32_0 : i32, i32, i32
  }
  func.func @transform_1(%arg0: i32) -> (i32, i32, i32) {
    %c0_i32 = arith.constant 0 : i32
    %c0_i32_0 = arith.constant 0 : i32
    %c0_i32_1 = arith.constant 0 : i32
    %c0_i32_2 = arith.constant 0 : i32
    return %c0_i32, %c0_i32_0, %c0_i32_1 : i32, i32, i32
  }
  func.func @transform_2(%arg0: i32) -> (i32, i32) {
    %c0_i32 = arith.constant 0 : i32
    %c0_i32_0 = arith.constant 0 : i32
    return %arg0, %c0_i32 : i32, i32
  }
  func.func @transform_3(%arg0: i32) -> (i32, i32) {
    %c0_i32 = arith.constant 0 : i32
    %c0_i32_0 = arith.constant 0 : i32
    return %arg0, %c0_i32 : i32, i32
  }
  func.func @transform_4(%arg0: i32) -> (i32, i32) {
    %c0_i32 = arith.constant 0 : i32
    %c0_i32_0 = arith.constant 0 : i32
    return %arg0, %c0_i32 : i32, i32
  }
}

module attributes {stable_mosaic.version = 11 : i64} {
  func.func @_fused_gemm_bn_act_kernel(%arg0: i32, %arg1: memref<4x3x32xbf16, #tpu.memory_space<vmem>>, %arg2: memref<4x32x512xbf16, #tpu.memory_space<vmem>>, %arg3: memref<3x1xf32, #tpu.memory_space<vmem>>, %arg4: memref<3x1xf32, #tpu.memory_space<vmem>>, %arg5: memref<3x2048xf32, #tpu.memory_space<vmem>>) attributes {dimension_semantics = [#tpu.dimension_semantics<parallel>], iteration_bounds = array<i64: 1>, scalar_prefetch = 0 : i64, scratch_operands = 0 : i64, tpu.core_type = #tpu.core_type<tc>, window_params = [{transform_indices = @transform_0, window_bounds = array<i64: 4, 3, 32>}, {pipeline_mode = #tpu.pipeline_mode<synchronous>, transform_indices = @transform_1, window_bounds = array<i64: 4, 32, 512>}, {transform_indices = @transform_2, window_bounds = array<i64: 3, 1>}, {transform_indices = @transform_3, window_bounds = array<i64: 3, 1>}, {transform_indices = @transform_4, window_bounds = array<i64: 3, 2048>}]} {
    %c0 = arith.constant 0 : index
    %c0_0 = arith.constant 0 : index
    %c0_1 = arith.constant 0 : index
    %0 = vector.load %arg1[%c0, %c0_0, %c0_1] : memref<4x3x32xbf16, #tpu.memory_space<vmem>>, vector<1x3x32xbf16>
    %1 = vector.shape_cast %0 : vector<1x3x32xbf16> to vector<3x32xbf16>
    %c0_2 = arith.constant 0 : index
    %c0_3 = arith.constant 0 : index
    %c0_4 = arith.constant 0 : index
    %2 = vector.load %arg2[%c0_2, %c0_3, %c0_4] : memref<4x32x512xbf16, #tpu.memory_space<vmem>>, vector<1x32x512xbf16>
    %3 = vector.shape_cast %2 : vector<1x32x512xbf16> to vector<32x512xbf16>
    %cst = arith.constant dense<0.000000e+00> : vector<3x512xf32>
    %4 = tpu.matmul %1, %3, %cst {dimension_numbers = #tpu.dot_dimension_numbers<[1], [0], [0], [1], [0, 0, 1, 1], [], []>} : vector<3x32xbf16>, vector<32x512xbf16>, vector<3x512xf32> -> vector<3x512xf32>
    %c1 = arith.constant 1 : index
    %c0_5 = arith.constant 0 : index
    %c0_6 = arith.constant 0 : index
    %5 = vector.load %arg1[%c1, %c0_5, %c0_6] : memref<4x3x32xbf16, #tpu.memory_space<vmem>>, vector<1x3x32xbf16>
    %6 = vector.shape_cast %5 : vector<1x3x32xbf16> to vector<3x32xbf16>
    %c1_7 = arith.constant 1 : index
    %c0_8 = arith.constant 0 : index
    %c0_9 = arith.constant 0 : index
    %7 = vector.load %arg2[%c1_7, %c0_8, %c0_9] : memref<4x32x512xbf16, #tpu.memory_space<vmem>>, vector<1x32x512xbf16>
    %8 = vector.shape_cast %7 : vector<1x32x512xbf16> to vector<32x512xbf16>
    %cst_10 = arith.constant dense<0.000000e+00> : vector<3x512xf32>
    %9 = tpu.matmul %6, %8, %cst_10 {dimension_numbers = #tpu.dot_dimension_numbers<[1], [0], [0], [1], [0, 0, 1, 1], [], []>} : vector<3x32xbf16>, vector<32x512xbf16>, vector<3x512xf32> -> vector<3x512xf32>
    %c2 = arith.constant 2 : index
    %c0_11 = arith.constant 0 : index
    %c0_12 = arith.constant 0 : index
    %10 = vector.load %arg1[%c2, %c0_11, %c0_12] : memref<4x3x32xbf16, #tpu.memory_space<vmem>>, vector<1x3x32xbf16>
    %11 = vector.shape_cast %10 : vector<1x3x32xbf16> to vector<3x32xbf16>
    %c2_13 = arith.constant 2 : index
    %c0_14 = arith.constant 0 : index
    %c0_15 = arith.constant 0 : index
    %12 = vector.load %arg2[%c2_13, %c0_14, %c0_15] : memref<4x32x512xbf16, #tpu.memory_space<vmem>>, vector<1x32x512xbf16>
    %13 = vector.shape_cast %12 : vector<1x32x512xbf16> to vector<32x512xbf16>
    %cst_16 = arith.constant dense<0.000000e+00> : vector<3x512xf32>
    %14 = tpu.matmul %11, %13, %cst_16 {dimension_numbers = #tpu.dot_dimension_numbers<[1], [0], [0], [1], [0, 0, 1, 1], [], []>} : vector<3x32xbf16>, vector<32x512xbf16>, vector<3x512xf32> -> vector<3x512xf32>
    %c3 = arith.constant 3 : index
    %c0_17 = arith.constant 0 : index
    %c0_18 = arith.constant 0 : index
    %15 = vector.load %arg1[%c3, %c0_17, %c0_18] : memref<4x3x32xbf16, #tpu.memory_space<vmem>>, vector<1x3x32xbf16>
    %16 = vector.shape_cast %15 : vector<1x3x32xbf16> to vector<3x32xbf16>
    %c3_19 = arith.constant 3 : index
    %c0_20 = arith.constant 0 : index
    %c0_21 = arith.constant 0 : index
    %17 = vector.load %arg2[%c3_19, %c0_20, %c0_21] : memref<4x32x512xbf16, #tpu.memory_space<vmem>>, vector<1x32x512xbf16>
    %18 = vector.shape_cast %17 : vector<1x32x512xbf16> to vector<32x512xbf16>
    %cst_22 = arith.constant dense<0.000000e+00> : vector<3x512xf32>
    %19 = tpu.matmul %16, %18, %cst_22 {dimension_numbers = #tpu.dot_dimension_numbers<[1], [0], [0], [1], [0, 0, 1, 1], [], []>} : vector<3x32xbf16>, vector<32x512xbf16>, vector<3x512xf32> -> vector<3x512xf32>
    %20 = tpu.concatenate %4, %9, %14, %19 in 1 : vector<3x512xf32>, vector<3x512xf32>, vector<3x512xf32>, vector<3x512xf32> -> vector<3x2048xf32>
    %cst_23 = arith.constant dense<0.000000e+00> : vector<3xf32>
    %21 = vector.multi_reduction <add>, %20, %cst_23 [1] : vector<3x2048xf32> to vector<3xf32>
    %22 = vector.shape_cast %21 : vector<3xf32> to vector<3x1xf32>
    %23 = arith.mulf %20, %20 : vector<3x2048xf32>
    %cst_24 = arith.constant dense<0.000000e+00> : vector<3xf32>
    %24 = vector.multi_reduction <add>, %23, %cst_24 [1] : vector<3x2048xf32> to vector<3xf32>
    %25 = vector.shape_cast %24 : vector<3xf32> to vector<3x1xf32>
    %cst_25 = arith.constant 4.8828125E-4 : f32
    %26 = vector.broadcast %cst_25 : f32 to vector<3x1xf32>
    %27 = arith.mulf %22, %26 : vector<3x1xf32>
    %cst_26 = arith.constant 4.8828125E-4 : f32
    %28 = vector.broadcast %cst_26 : f32 to vector<3x1xf32>
    %29 = arith.mulf %25, %28 : vector<3x1xf32>
    %30 = arith.mulf %27, %27 : vector<3x1xf32>
    %31 = arith.subf %29, %30 : vector<3x1xf32>
    %cst_27 = arith.constant 0.000000e+00 : f32
    %32 = vector.broadcast %cst_27 : f32 to vector<3x1xf32>
    %33 = arith.maximumf %31, %32 : vector<3x1xf32>
    %cst_28 = arith.constant 9.99999974E-6 : f32
    %34 = vector.broadcast %cst_28 : f32 to vector<3x1xf32>
    %35 = arith.addf %33, %34 : vector<3x1xf32>
    %36 = math.rsqrt %35 : vector<3x1xf32>
    %c0_29 = arith.constant 0 : index
    %c0_30 = arith.constant 0 : index
    %37 = vector.load %arg3[%c0_29, %c0_30] : memref<3x1xf32, #tpu.memory_space<vmem>>, vector<3x1xf32>
    %38 = arith.mulf %36, %37 : vector<3x1xf32>
    %c0_31 = arith.constant 0 : index
    %c0_32 = arith.constant 0 : index
    %39 = vector.load %arg4[%c0_31, %c0_32] : memref<3x1xf32, #tpu.memory_space<vmem>>, vector<3x1xf32>
    %40 = arith.mulf %27, %38 : vector<3x1xf32>
    %41 = arith.subf %39, %40 : vector<3x1xf32>
    %42 = vector.broadcast %38 : vector<3x1xf32> to vector<3x2048xf32>
    %43 = arith.mulf %20, %42 : vector<3x2048xf32>
    %44 = vector.broadcast %41 : vector<3x1xf32> to vector<3x2048xf32>
    %45 = arith.addf %43, %44 : vector<3x2048xf32>
    %46 = math.tanh %45 : vector<3x2048xf32>
    %c0_33 = arith.constant 0 : index
    %c0_34 = arith.constant 0 : index
    %47 = vector.load %arg5[%c0_33, %c0_34] : memref<3x2048xf32, #tpu.memory_space<vmem>>, vector<3x2048xf32>
    tpu.vector_store %arg5[%c0_33, %c0_34], %46 {strides = array<i32>} : memref<3x2048xf32, #tpu.memory_space<vmem>>, vector<3x2048xf32>,
    return
  }
  func.func @transform_0(%arg0: i32) -> (i32, i32, i32) {
    %c0_i32 = arith.constant 0 : i32
    %c0_i32_0 = arith.constant 0 : i32
    %c0_i32_1 = arith.constant 0 : i32
    return %c0_i32, %arg0, %c0_i32_0 : i32, i32, i32
  }
  func.func @transform_1(%arg0: i32) -> (i32, i32, i32) {
    %c0_i32 = arith.constant 0 : i32
    %c0_i32_0 = arith.constant 0 : i32
    %c0_i32_1 = arith.constant 0 : i32
    %c0_i32_2 = arith.constant 0 : i32
    return %c0_i32, %c0_i32_0, %c0_i32_1 : i32, i32, i32
  }
  func.func @transform_2(%arg0: i32) -> (i32, i32) {
    %c0_i32 = arith.constant 0 : i32
    %c0_i32_0 = arith.constant 0 : i32
    return %arg0, %c0_i32 : i32, i32
  }
  func.func @transform_3(%arg0: i32) -> (i32, i32) {
    %c0_i32 = arith.constant 0 : i32
    %c0_i32_0 = arith.constant 0 : i32
    return %arg0, %c0_i32 : i32, i32
  }
  func.func @transform_4(%arg0: i32) -> (i32, i32) {
    %c0_i32 = arith.constant 0 : i32
    %c0_i32_0 = arith.constant 0 : i32
    return %arg0, %c0_i32 : i32, i32
  }
}

</mosaic_0001>

<llo_original>
// kernel: cycle_generator_forward.7
$region0: #{cycle_generator_forward.7}
  #allocation0 [shape = 'u32[]', space=smem, size = 0x4, offset = 0x4, fixed_abs, tag = 'smem constant byte address 0x4 - core index']
  #allocation1 [shape = 'u32[144,128]{1,0:T(1,128)}', space=vmem, size = 0x12000, scoped, tag = 'internal scratch']
  %s0 = inlined_call_operand.vmem [shape: bf16[1,8,48], index: 0, kind: input, shape index: {}]
  %s1 = inlined_call_operand.vmem [shape: bf16[1,48,512], index: 1, kind: input, shape index: {}]
  %s2 = inlined_call_operand.vmem [shape: f32[8,1], index: 2, kind: input, shape index: {}]
  %s3 = inlined_call_operand.vmem [shape: f32[8,1], index: 3, kind: input, shape index: {}]
  %s4 = inlined_call_operand.vmem [shape: bf16[8,512], index: 4, kind: output, shape index: {}]
  %s5 = sld [smem:[#allocation0]]
  $region26: #{cycle_generator_forward.7} parent=0
    _
  %s7 = ssub.s32 1, %s5
  %s8 = scalar_select 0, %s7, %s5
  // Predicated region
  $region2: #{cycle_generator_forward.7} parent=0 // pred_check
    _
  $region3: #{cycle_generator_forward.7} parent=0 // pred_check_branch
    %10 = sbr.rel (0) target = $region5
  $region4: #{cycle_generator_forward.7} parent=0 // pred_region
    _
  $region5: #{cycle_generator_forward.7} parent=0 // pred_fallthru
    _
  // Predicated region
  $region6: #{cycle_generator_forward.7} parent=0 // pred_check
    _
  $region7: #{cycle_generator_forward.7} parent=0 // pred_check_branch
    %12 = sbr.rel (0) target = $region9
  $region8: #{cycle_generator_forward.7} parent=0 // pred_region
    _
  $region9: #{cycle_generator_forward.7} parent=0 // pred_fallthru
    _
  // Predicated region
  $region10: #{cycle_generator_forward.7} parent=0 // pred_check
    _
  $region11: #{cycle_generator_forward.7} parent=0 // pred_check_branch
    %14 = sbr.rel (0) target = $region13
  $region12: #{cycle_generator_forward.7} parent=0 // pred_region
    _
  $region13: #{cycle_generator_forward.7} parent=0 // pred_fallthru
    _
  // Predicated region
  $region14: #{cycle_generator_forward.7} parent=0 // pred_check
    _
  $region15: #{cycle_generator_forward.7} parent=0 // pred_check_branch
    %16 = sbr.rel (0) target = $region17
  $region16: #{cycle_generator_forward.7} parent=0 // pred_region
    _
  $region17: #{cycle_generator_forward.7} parent=0 // pred_fallthru
    _
  %v18 = vld [vmem:[%s0] sm:$0xf]
  %v19 = vld [vmem:[%s1] sm:$0xff]
  %v20 = vld [vmem:[%s1 + $0x8] sm:$0xff]
  %v21 = vld [vmem:[%s1 + $0x10] sm:$0xff]
  %v22 = vld [vmem:[%s1 + $0x18] sm:$0xff]
  %v23 = vld [vmem:[%s1 + $0x20] sm:$0xff]
  %v24 = vld [vmem:[%s1 + $0x28] sm:$0xff]
  %v25 = vld [vmem:[%s1 + $0x30] sm:$0xff]
  %v26 = vld [vmem:[%s1 + $0x38] sm:$0xff]
  %v27 = vld [vmem:[%s1 + $0x40] sm:$0xff]
  %v28 = vld [vmem:[%s1 + $0x48] sm:$0xff]
  %v29 = vld [vmem:[%s1 + $0x50] sm:$0xff]
  %v30 = vld [vmem:[%s1 + $0x58] sm:$0xff]
  %v43 = vunpack.c.l.b16 %v19
  %v44 = vunpack.c.h.b16 %v19
  %v45 = vunpack.c.l.b16 %v20
  %v46 = vunpack.c.h.b16 %v20
  %v47 = vunpack.c.l.b16 %v21
  %v48 = vunpack.c.h.b16 %v21
  %v49 = vunpack.c.l.b16 %v22
  %v50 = vunpack.c.h.b16 %v22
  %v51 = vunpack.c.l.b16 %v23
  %v52 = vunpack.c.h.b16 %v23
  %v53 = vunpack.c.l.b16 %v24
  %v54 = vunpack.c.h.b16 %v24
  %v55 = vunpack.c.l.b16 %v25
  %v56 = vunpack.c.h.b16 %v25
  %v57 = vunpack.c.l.b16 %v26
  %v58 = vunpack.c.h.b16 %v26
  %v59 = vunpack.c.l.b16 %v27
  %v60 = vunpack.c.h.b16 %v27
  %v61 = vunpack.c.l.b16 %v28
  %v62 = vunpack.c.h.b16 %v28
  %v63 = vunpack.c.l.b16 %v29
  %v64 = vunpack.c.h.b16 %v29
  %v65 = vunpack.c.l.b16 %v30
  %v66 = vunpack.c.h.b16 %v30
  %v67 = vpack.c.b16 %v47, %v43
  %v68 = vpack.c.b16 %v48, %v44
  %v69 = vpack.c.b16 %v49, %v45
  %v70 = vpack.c.b16 %v50, %v46
  %v71 = vpack.c.b16 %v55, %v51
  %v72 = vpack.c.b16 %v56, %v52
  %v73 = vpack.c.b16 %v57, %v53
  %v74 = vpack.c.b16 %v58, %v54
  %v75 = vpack.c.b16 %v63, %v59
  %v76 = vpack.c.b16 %v64, %v60
  %v77 = vpack.c.b16 %v65, %v61
  %v78 = vpack.c.b16 %v66, %v62
  %vm91 = vcmask 392192
  %v93 = vsel %vm91, %v18, 0
  %95 = vmatprep.subr.bf16.mxu0 0
  %96 = vmatpush1.bf16.msra.mxu0 0
  %97 = vmatprep.subr.bf16.mxu0 0
  %98 = vmatpush1.bf16.msra.mxu0 0
  %99 = vmatprep.subr.bf16.mxu0 0
  %100 = vmatpush1.bf16.msra.mxu0 0
  %101 = vmatprep.subr.bf16.mxu0 0
  %102 = vmatpush1.bf16.msra.mxu0 0
  %103 = vmatprep.subr.bf16.mxu0 0
  %104 = vmatpush1.bf16.msra.mxu0 0
  %105 = vmatprep.subr.bf16.mxu0 %v76
  %106 = vmatpush1.bf16.msra.mxu0 %v75
  %107 = vmatprep.subr.bf16.mxu0 %v72
  %108 = vmatpush1.bf16.msra.mxu0 %v71
  %109 = vmatprep.subr.bf16.mxu0 %v68
  %110 = vmatpush1.bf16.msra.mxu0 %v67
  %111 = vmatprep.subr.bf16.mxu0 0
  %112 = vmatpush2.bf16.msra.mxu0 0
  %113 = vmatprep.subr.bf16.mxu0 0
  %114 = vmatpush2.bf16.msra.mxu0 0
  %115 = vmatprep.subr.bf16.mxu0 0
  %116 = vmatpush2.bf16.msra.mxu0 0
  %117 = vmatprep.subr.bf16.mxu0 0
  %118 = vmatpush2.bf16.msra.mxu0 0
  %119 = vmatprep.subr.bf16.mxu0 0
  %120 = vmatpush2.bf16.msra.mxu0 0
  %121 = vmatprep.subr.bf16.mxu0 0
  %122 = vmatpush2.bf16.msra.mxu0 0
  %123 = vmatprep.subr.bf16.mxu0 0
  %124 = vmatpush2.bf16.msra.mxu0 0
  %125 = vmatprep.subr.bf16.mxu0 0
  %126 = vmatpush2.bf16.msra.mxu0 0
  %127 = vmatprep.mubr.bf16.mxu0 0
  %128 = vmatmul.mubr.bf16.gmra.mxu0 %v93
  %v129 = vpop.f32.mrf.mxu0
  %v130 = vadd.f32 0.0, %v129
  %v131 = vpop.f32.mrf.mxu0
  %v132 = vadd.f32 0.0, %v131
  %v133 = vpop.f32.mrf.mxu0
  %v134 = vpop.f32.mrf.mxu0
  %135 = vdwg.mxu0
  %136 = vmatprep.subr.bf16.mxu0 0
  %137 = vmatpush1.bf16.msra.mxu0 0
  %138 = vmatprep.subr.bf16.mxu0 0
  %139 = vmatpush1.bf16.msra.mxu0 0
  %140 = vmatprep.subr.bf16.mxu0 0
  %141 = vmatpush1.bf16.msra.mxu0 0
  %142 = vmatprep.subr.bf16.mxu0 0
  %143 = vmatpush1.bf16.msra.mxu0 0
  %144 = vmatprep.subr.bf16.mxu0 0
  %145 = vmatpush1.bf16.msra.mxu0 0
  %146 = vmatprep.subr.bf16.mxu0 %v78
  %147 = vmatpush1.bf16.msra.mxu0 %v77
  %148 = vmatprep.subr.bf16.mxu0 %v74
  %149 = vmatpush1.bf16.msra.mxu0 %v73
  %150 = vmatprep.subr.bf16.mxu0 %v70
  %151 = vmatpush1.bf16.msra.mxu0 %v69
  %152 = vmatprep.subr.bf16.mxu0 0
  %153 = vmatpush2.bf16.msra.mxu0 0
  %154 = vmatprep.subr.bf16.mxu0 0
  %155 = vmatpush2.bf16.msra.mxu0 0
  %156 = vmatprep.subr.bf16.mxu0 0
  %157 = vmatpush2.bf16.msra.mxu0 0
  %158 = vmatprep.subr.bf16.mxu0 0
  %159 = vmatpush2.bf16.msra.mxu0 0
  %160 = vmatprep.subr.bf16.mxu0 0
  %161 = vmatpush2.bf16.msra.mxu0 0
  %162 = vmatprep.subr.bf16.mxu0 0
  %163 = vmatpush2.bf16.msra.mxu0 0
  %164 = vmatprep.subr.bf16.mxu0 0
  %165 = vmatpush2.bf16.msra.mxu0 0
  %166 = vmatprep.subr.bf16.mxu0 0
  %167 = vmatpush2.bf16.msra.mxu0 0
  %168 = vmatprep.mubr.bf16.mxu0 0
  %169 = vmatmul.mubr.bf16.gmra.mxu0 %v93
  %v170 = vpop.f32.mrf.mxu0
  %v171 = vadd.f32 0.0, %v170
  %v172 = vpop.f32.mrf.mxu0
  %v173 = vadd.f32 0.0, %v172
  %v174 = vpop.f32.mrf.mxu0
  %v175 = vpop.f32.mrf.mxu0
  %176 = vdwg.mxu0
  %v177 = vadd.f32 %v130, %v132
  %v178 = vadd.f32 %v177, %v171
  %v179 = vadd.f32 %v178, %v173
  %180 = vadd.xlane.f32.xlu0 %v179
  %v181 = vpop.xlane.xlu0 %180
  %v182 = vmul.f32 %v130, %v130
  %v183 = vmul.f32 %v132, %v132
  %v184 = vmul.f32 %v171, %v171
  %v185 = vmul.f32 %v173, %v173
  %v186 = vadd.f32 %v182, %v183
  %v187 = vadd.f32 %v186, %v184
  %v188 = vadd.f32 %v187, %v185
  %189 = vadd.xlane.f32.xlu0 %v188
  %v190 = vpop.xlane.xlu0 %189
  %v191 = vmul.f32 %v181, 0.001953125
  %v192 = vmul.f32 %v190, 0.001953125
  %v193 = vmul.f32 %v191, %v191
  %v194 = vsub.f32 %v192, %v193
  %v195 = vmax.f32 %v194, 0.0
  %v196 = vadd.f32 %v195, 1e-05
  %v197 = vrsqrt.pop %v196
  %v198 = vld [vmem:[%s2] sm:$0xff]
  %v199 = vmul.f32 %v197, %v198
  %v200 = vld [vmem:[%s3] sm:$0xff]
  %v201 = vmul.f32 %v191, %v199
  %v202 = vsub.f32 %v200, %v201
  %204 = vset.pattern.permute.xlu0 0
  %205 = vperm.xlu0 %204, %v199
  %v206 = vpop.permute.xlu0 %205
  %v208 = vmul.f32 %v130, %v206
  %v209 = vmul.f32 %v132, %v206
  %v210 = vmul.f32 %v171, %v206
  %v211 = vmul.f32 %v173, %v206
  %213 = vset.pattern.permute.xlu0 0
  %214 = vperm.xlu0 %213, %v202
  %v215 = vpop.permute.xlu0 %214
  %v217 = vadd.f32 %v208, %v215
  %v218 = vadd.f32 %v209, %v215
  %v219 = vadd.f32 %v210, %v215
  %v220 = vadd.f32 %v211, %v215
  %v221 = vmax.f32 %v217, 0.0
  %v222 = vmax.f32 %v218, 0.0
  %v223 = vmax.f32 %v219, 0.0
  %v224 = vmax.f32 %v220, 0.0
  %v225 = vpack.c.bf16 %v221, %v221
  %v226 = vpack.c.bf16 %v222, %v222
  %v227 = vpack.c.bf16 %v223, %v223
  %v228 = vpack.c.bf16 %v224, %v224
  %v233 = vunpack.c.l.b16 %v225
  %v234 = vunpack.c.l.b16 %v226
  %v235 = vunpack.c.l.b16 %v227
  %v236 = vunpack.c.l.b16 %v228
  %v237 = vpack.c.b16 %v234, %v233
  %v238 = vpack.c.b16 %v236, %v235
  %241 = vst [vmem:[%s4] sm:$0xff] %v237
  %242 = vst [vmem:[%s4 + $0x8] sm:$0xff] %v238
  // Predicated region
  $region18: #{cycle_generator_forward.7} parent=0 // pred_check
    _
  $region19: #{cycle_generator_forward.7} parent=0 // pred_check_branch
    %244 = sbr.rel (0) target = $region21
  $region20: #{cycle_generator_forward.7} parent=0 // pred_region
    _
  $region21: #{cycle_generator_forward.7} parent=0 // pred_fallthru
    _
  // Predicated region
  $region22: #{cycle_generator_forward.7} parent=0 // pred_check
    _
  $region23: #{cycle_generator_forward.7} parent=0 // pred_check_branch
    %246 = sbr.rel (0) target = $region25
  $region24: #{cycle_generator_forward.7} parent=0 // pred_region
    _
  $region25: #{cycle_generator_forward.7} parent=0 // pred_fallthru
    _

// kernel: cycle_generator_forward.8
$region0: #{cycle_generator_forward.8}
  #allocation0 [shape = 'u32[]', space=smem, size = 0x4, offset = 0x4, fixed_abs, tag = 'smem constant byte address 0x4 - core index']
  #allocation1 [shape = 'u32[144,128]{1,0:T(1,128)}', space=vmem, size = 0x12000, scoped, tag = 'internal scratch']
  %s0 = inlined_call_operand.vmem [shape: bf16[1,16,128], index: 0, kind: input, shape index: {}]
  %s1 = inlined_call_operand.vmem [shape: bf16[1,128,128], index: 1, kind: input, shape index: {}]
  %s2 = inlined_call_operand.vmem [shape: f32[16,1], index: 2, kind: input, shape index: {}]
  %s3 = inlined_call_operand.vmem [shape: f32[16,1], index: 3, kind: input, shape index: {}]
  %s4 = inlined_call_operand.vmem [shape: bf16[16,128], index: 4, kind: output, shape index: {}]
  %s5 = sld [smem:[#allocation0]]
  $region26: #{cycle_generator_forward.8} parent=0
    _
  %s7 = ssub.s32 1, %s5
  %s8 = scalar_select 0, %s7, %s5
  // Predicated region
  $region2: #{cycle_generator_forward.8} parent=0 // pred_check
    _
  $region3: #{cycle_generator_forward.8} parent=0 // pred_check_branch
    %10 = sbr.rel (0) target = $region5
  $region4: #{cycle_generator_forward.8} parent=0 // pred_region
    _
  $region5: #{cycle_generator_forward.8} parent=0 // pred_fallthru
    _
  // Predicated region
  $region6: #{cycle_generator_forward.8} parent=0 // pred_check
    _
  $region7: #{cycle_generator_forward.8} parent=0 // pred_check_branch
    %12 = sbr.rel (0) target = $region9
  $region8: #{cycle_generator_forward.8} parent=0 // pred_region
    _
  $region9: #{cycle_generator_forward.8} parent=0 // pred_fallthru
    _
  // Predicated region
  $region10: #{cycle_generator_forward.8} parent=0 // pred_check
    _
  $region11: #{cycle_generator_forward.8} parent=0 // pred_check_branch
    %14 = sbr.rel (0) target = $region13
  $region12: #{cycle_generator_forward.8} parent=0 // pred_region
    _
  $region13: #{cycle_generator_forward.8} parent=0 // pred_fallthru
    _
  // Predicated region
  $region14: #{cycle_generator_forward.8} parent=0 // pred_check
    _
  $region15: #{cycle_generator_forward.8} parent=0 // pred_check_branch
    %16 = sbr.rel (0) target = $region17
  $region16: #{cycle_generator_forward.8} parent=0 // pred_region
    _
  $region17: #{cycle_generator_forward.8} parent=0 // pred_fallthru
    _
  %v18 = vld [vmem:[%s0] sm:$0xf]
  %v19 = vld [vmem:[%s0 + $0x4] sm:$0xf]
  %v20 = vld [vmem:[%s1] sm:$0xf]
  %v21 = vld [vmem:[%s1 + $0x4] sm:$0xf]
  %v22 = vld [vmem:[%s1 + $0x8] sm:$0xf]
  %v23 = vld [vmem:[%s1 + $0xc] sm:$0xf]
  %v24 = vld [vmem:[%s1 + $0x10] sm:$0xf]
  %v25 = vld [vmem:[%s1 + $0x14] sm:$0xf]
  %v26 = vld [vmem:[%s1 + $0x18] sm:$0xf]
  %v27 = vld [vmem:[%s1 + $0x1c] sm:$0xf]
  %v28 = vld [vmem:[%s1 + $0x20] sm:$0xf]
  %v29 = vld [vmem:[%s1 + $0x24] sm:$0xf]
  %v30 = vld [vmem:[%s1 + $0x28] sm:$0xf]
  %v31 = vld [vmem:[%s1 + $0x2c] sm:$0xf]
  %v32 = vld [vmem:[%s1 + $0x30] sm:$0xf]
  %v33 = vld [vmem:[%s1 + $0x34] sm:$0xf]
  %v34 = vld [vmem:[%s1 + $0x38] sm:$0xf]
  %v35 = vld [vmem:[%s1 + $0x3c] sm:$0xf]
  %v38 = vunpack.c.l.b16 %v18
  %v39 = vunpack.c.l.b16 %v19
  %v40 = vpack.c.b16 %v39, %v38
  %v58 = vunpack.c.l.b16 %v20
  %v59 = vunpack.c.l.b16 %v21
  %v60 = vunpack.c.l.b16 %v22
  %v61 = vunpack.c.l.b16 %v23
  %v62 = vunpack.c.l.b16 %v24
  %v63 = vunpack.c.l.b16 %v25
  %v64 = vunpack.c.l.b16 %v26
  %v65 = vunpack.c.l.b16 %v27
  %v66 = vunpack.c.l.b16 %v28
  %v67 = vunpack.c.l.b16 %v29
  %v68 = vunpack.c.l.b16 %v30
  %v69 = vunpack.c.l.b16 %v31
  %v70 = vunpack.c.l.b16 %v32
  %v71 = vunpack.c.l.b16 %v33
  %v72 = vunpack.c.l.b16 %v34
  %v73 = vunpack.c.l.b16 %v35
  %v74 = vpack.c.b16 %v59, %v58
  %v75 = vpack.c.b16 %v61, %v60
  %v76 = vpack.c.b16 %v63, %v62
  %v77 = vpack.c.b16 %v65, %v64
  %v78 = vpack.c.b16 %v67, %v66
  %v79 = vpack.c.b16 %v69, %v68
  %v80 = vpack.c.b16 %v71, %v70
  %v81 = vpack.c.b16 %v73, %v72
  %90 = vmatprep.subr.bf16.mxu0 0
  %91 = vmatpush1.bf16.msra.mxu0 %v81
  %92 = vmatprep.subr.bf16.mxu0 0
  %93 = vmatpush1.bf16.msra.mxu0 %v80
  %94 = vmatprep.subr.bf16.mxu0 0
  %95 = vmatpush1.bf16.msra.mxu0 %v79
  %96 = vmatprep.subr.bf16.mxu0 0
  %97 = vmatpush1.bf16.msra.mxu0 %v78
  %98 = vmatprep.subr.bf16.mxu0 0
  %99 = vmatpush1.bf16.msra.mxu0 %v77
  %100 = vmatprep.subr.bf16.mxu0 0
  %101 = vmatpush1.bf16.msra.mxu0 %v76
  %102 = vmatprep.subr.bf16.mxu0 0
  %103 = vmatpush1.bf16.msra.mxu0 %v75
  %104 = vmatprep.subr.bf16.mxu0 0
  %105 = vmatpush1.bf16.msra.mxu0 %v74
  %106 = vmatprep.subr.bf16.mxu0 0
  %107 = vmatpush2.bf16.msra.mxu0 0
  %108 = vmatprep.subr.bf16.mxu0 0
  %109 = vmatpush2.bf16.msra.mxu0 0
  %110 = vmatprep.subr.bf16.mxu0 0
  %111 = vmatpush2.bf16.msra.mxu0 0
  %112 = vmatprep.subr.bf16.mxu0 0
  %113 = vmatpush2.bf16.msra.mxu0 0
  %114 = vmatprep.subr.bf16.mxu0 0
  %115 = vmatpush2.bf16.msra.mxu0 0
  %116 = vmatprep.subr.bf16.mxu0 0
  %117 = vmatpush2.bf16.msra.mxu0 0
  %118 = vmatprep.subr.bf16.mxu0 0
  %119 = vmatpush2.bf16.msra.mxu0 0
  %120 = vmatprep.subr.bf16.mxu0 0
  %121 = vmatpush2.bf16.msra.mxu0 0
  %122 = vmatprep.mubr.bf16.mxu0 0
  %123 = vmatmul.mubr.bf16.gmra.mxu0 %v40
  %v124 = vpop.f32.mrf.mxu0
  %v125 = vadd.f32 0.0, %v124
  %v126 = vpop.f32.mrf.mxu0
  %v127 = vpop.f32.mrf.mxu0
  %v128 = vadd.f32 0.0, %v127
  %v129 = vpop.f32.mrf.mxu0
  %130 = vdwg.mxu0
  %131 = vadd.xlane.f32.xlu0 %v125
  %v132 = vpop.xlane.xlu0 %131
  %133 = vadd.xlane.f32.xlu0 %v128
  %v134 = vpop.xlane.xlu0 %133
  %v135 = vmul.f32 %v125, %v125
  %v136 = vmul.f32 %v128, %v128
  %137 = vadd.xlane.f32.xlu0 %v135
  %v138 = vpop.xlane.xlu0 %137
  %139 = vadd.xlane.f32.xlu0 %v136
  %v140 = vpop.xlane.xlu0 %139
  %v141 = vmul.f32 %v132, 0.0078125
  %v142 = vmul.f32 %v134, 0.0078125
  %v143 = vmul.f32 %v138, 0.0078125
  %v144 = vmul.f32 %v140, 0.0078125
  %v145 = vmul.f32 %v141, %v141
  %v146 = vmul.f32 %v142, %v142
  %v147 = vsub.f32 %v143, %v145
  %v148 = vsub.f32 %v144, %v146
  %v149 = vmax.f32 %v147, 0.0
  %v150 = vmax.f32 %v148, 0.0
  %v151 = vadd.f32 %v149, 1e-05
  %v152 = vadd.f32 %v150, 1e-05
  %v153 = vrsqrt.pop %v151
  %v154 = vrsqrt.pop %v152
  %v155 = vld [vmem:[%s2] sm:$0xff]
  %v156 = vld [vmem:[%s2 + $0x8] sm:$0xff]
  %v157 = vmul.f32 %v153, %v155
  %v158 = vmul.f32 %v154, %v156
  %v159 = vld [vmem:[%s3] sm:$0xff]
  %v160 = vld [vmem:[%s3 + $0x8] sm:$0xff]
  %v161 = vmul.f32 %v141, %v157
  %v162 = vmul.f32 %v142, %v158
  %v163 = vsub.f32 %v159, %v161
  %v164 = vsub.f32 %v160, %v162
  %166 = vset.pattern.permute.xlu0 0
  %167 = vperm.xlu0 %166, %v157
  %v168 = vpop.permute.xlu0 %167
  %171 = vset.pattern.permute.xlu0 0
  %172 = vperm.xlu0 %171, %v158
  %v173 = vpop.permute.xlu0 %172
  %v175 = vmul.f32 %v125, %v168
  %v176 = vmul.f32 %v128, %v173
  %178 = vset.pattern.permute.xlu0 0
  %179 = vperm.xlu0 %178, %v163
  %v180 = vpop.permute.xlu0 %179
  %183 = vset.pattern.permute.xlu0 0
  %184 = vperm.xlu0 %183, %v164
  %v185 = vpop.permute.xlu0 %184
  %v187 = vadd.f32 %v175, %v180
  %v188 = vadd.f32 %v176, %v185
  %v189 = vmax.f32 %v187, 0.0
  %v190 = vmax.f32 %v188, 0.0
  %v191 = vpack.c.bf16 %v190, %v189
  %v193 = vunpack.c.l.b16 %v191
  %v194 = vunpack.c.h.b16 %v191
  %v195 = vpack.c.b16 %v193, %v193
  %v196 = vpack.c.b16 %v194, %v194
  %199 = vst [vmem:[%s4] sm:$0xf] %v195
  %200 = vst [vmem:[%s4 + $0x4] sm:$0xf] %v196
  // Predicated region
  $region18: #{cycle_generator_forward.8} parent=0 // pred_check
    _
  $region19: #{cycle_generator_forward.8} parent=0 // pred_check_branch
    %202 = sbr.rel (0) target = $region21
  $region20: #{cycle_generator_forward.8} parent=0 // pred_region
    _
  $region21: #{cycle_generator_forward.8} parent=0 // pred_fallthru
    _
  // Predicated region
  $region22: #{cycle_generator_forward.8} parent=0 // pred_check
    _
  $region23: #{cycle_generator_forward.8} parent=0 // pred_check_branch
    %204 = sbr.rel (0) target = $region25
  $region24: #{cycle_generator_forward.8} parent=0 // pred_region
    _
  $region25: #{cycle_generator_forward.8} parent=0 // pred_fallthru
    _

// kernel: cycle_generator_forward.9
$region0: #{cycle_generator_forward.9}
  #allocation0 [shape = 'u32[]', space=smem, size = 0x4, offset = 0x4, fixed_abs, tag = 'smem constant byte address 0x4 - core index']
  #allocation1 [shape = 'u32[144,128]{1,0:T(1,128)}', space=vmem, size = 0x12000, scoped, tag = 'internal scratch']
  %s0 = inlined_call_operand.vmem [shape: bf16[1,32,256], index: 0, kind: input, shape index: {}]
  %s1 = inlined_call_operand.vmem [shape: bf16[1,256,32], index: 1, kind: input, shape index: {}]
  %s2 = inlined_call_operand.vmem [shape: f32[32,1], index: 2, kind: input, shape index: {}]
  %s3 = inlined_call_operand.vmem [shape: f32[32,1], index: 3, kind: input, shape index: {}]
  %s4 = inlined_call_operand.vmem [shape: bf16[32,32], index: 4, kind: output, shape index: {}]
  %s5 = sld [smem:[#allocation0]]
  $region26: #{cycle_generator_forward.9} parent=0
    _
  %s7 = ssub.s32 1, %s5
  %s8 = scalar_select 0, %s7, %s5
  // Predicated region
  $region2: #{cycle_generator_forward.9} parent=0 // pred_check
    _
  $region3: #{cycle_generator_forward.9} parent=0 // pred_check_branch
    %10 = sbr.rel (0) target = $region5
  $region4: #{cycle_generator_forward.9} parent=0 // pred_region
    _
  $region5: #{cycle_generator_forward.9} parent=0 // pred_fallthru
    _
  // Predicated region
  $region6: #{cycle_generator_forward.9} parent=0 // pred_check
    _
  $region7: #{cycle_generator_forward.9} parent=0 // pred_check_branch
    %12 = sbr.rel (0) target = $region9
  $region8: #{cycle_generator_forward.9} parent=0 // pred_region
    _
  $region9: #{cycle_generator_forward.9} parent=0 // pred_fallthru
    _
  // Predicated region
  $region10: #{cycle_generator_forward.9} parent=0 // pred_check
    _
  $region11: #{cycle_generator_forward.9} parent=0 // pred_check_branch
    %14 = sbr.rel (0) target = $region13
  $region12: #{cycle_generator_forward.9} parent=0 // pred_region
    _
  $region13: #{cycle_generator_forward.9} parent=0 // pred_fallthru
    _
  // Predicated region
  $region14: #{cycle_generator_forward.9} parent=0 // pred_check
    _
  $region15: #{cycle_generator_forward.9} parent=0 // pred_check_branch
    %16 = sbr.rel (0) target = $region17
  $region16: #{cycle_generator_forward.9} parent=0 // pred_region
    _
  $region17: #{cycle_generator_forward.9} parent=0 // pred_fallthru
    _
  %v18 = vld [vmem:[%s0] sm:$0xff]
  %v19 = vld [vmem:[%s0 + $0x8] sm:$0xff]
  %v20 = vld [vmem:[%s0 + $0x10] sm:$0xff]
  %v21 = vld [vmem:[%s0 + $0x18] sm:$0xff]
  %v22 = vld [vmem:[%s1] sm:$0xf]
  %v23 = vld [vmem:[%s1 + $0x4] sm:$0xf]
  %v24 = vld [vmem:[%s1 + $0x8] sm:$0xf]
  %v25 = vld [vmem:[%s1 + $0xc] sm:$0xf]
  %v26 = vld [vmem:[%s1 + $0x10] sm:$0xf]
  %v27 = vld [vmem:[%s1 + $0x14] sm:$0xf]
  %v28 = vld [vmem:[%s1 + $0x18] sm:$0xf]
  %v29 = vld [vmem:[%s1 + $0x1c] sm:$0xf]
  %v30 = vld [vmem:[%s1 + $0x20] sm:$0xf]
  %v31 = vld [vmem:[%s1 + $0x24] sm:$0xf]
  %v32 = vld [vmem:[%s1 + $0x28] sm:$0xf]
  %v33 = vld [vmem:[%s1 + $0x2c] sm:$0xf]
  %v34 = vld [vmem:[%s1 + $0x30] sm:$0xf]
  %v35 = vld [vmem:[%s1 + $0x34] sm:$0xf]
  %v36 = vld [vmem:[%s1 + $0x38] sm:$0xf]
  %v37 = vld [vmem:[%s1 + $0x3c] sm:$0xf]
  %v38 = vld [vmem:[%s1 + $0x40] sm:$0xf]
  %v39 = vld [vmem:[%s1 + $0x44] sm:$0xf]
  %v40 = vld [vmem:[%s1 + $0x48] sm:$0xf]
  %v41 = vld [vmem:[%s1 + $0x4c] sm:$0xf]
  %v42 = vld [vmem:[%s1 + $0x50] sm:$0xf]
  %v43 = vld [vmem:[%s1 + $0x54] sm:$0xf]
  %v44 = vld [vmem:[%s1 + $0x58] sm:$0xf]
  %v45 = vld [vmem:[%s1 + $0x5c] sm:$0xf]
  %v46 = vld [vmem:[%s1 + $0x60] sm:$0xf]
  %v47 = vld [vmem:[%s1 + $0x64] sm:$0xf]
  %v48 = vld [vmem:[%s1 + $0x68] sm:$0xf]
  %v49 = vld [vmem:[%s1 + $0x6c] sm:$0xf]
  %v50 = vld [vmem:[%s1 + $0x70] sm:$0xf]
  %v51 = vld [vmem:[%s1 + $0x74] sm:$0xf]
  %v52 = vld [vmem:[%s1 + $0x78] sm:$0xf]
  %v53 = vld [vmem:[%s1 + $0x7c] sm:$0xf]
  %v58 = vunpack.c.l.b16 %v18
  %v59 = vunpack.c.h.b16 %v18
  %v60 = vunpack.c.l.b16 %v19
  %v61 = vunpack.c.h.b16 %v19
  %v62 = vunpack.c.l.b16 %v20
  %v63 = vunpack.c.h.b16 %v20
  %v64 = vunpack.c.l.b16 %v21
  %v65 = vunpack.c.h.b16 %v21
  %v66 = vpack.c.b16 %v60, %v58
  %v67 = vpack.c.b16 %v61, %v59
  %v68 = vpack.c.b16 %v64, %v62
  %v69 = vpack.c.b16 %v65, %v63
  %v106 = vunpack.c.l.b16 %v22
  %v107 = vunpack.c.l.b16 %v23
  %v108 = vunpack.c.l.b16 %v24
  %v109 = vunpack.c.l.b16 %v25
  %v110 = vunpack.c.l.b16 %v26
  %v111 = vunpack.c.l.b16 %v27
  %v112 = vunpack.c.l.b16 %v28
  %v113 = vunpack.c.l.b16 %v29
  %v114 = vunpack.c.l.b16 %v30
  %v115 = vunpack.c.l.b16 %v31
  %v116 = vunpack.c.l.b16 %v32
  %v117 = vunpack.c.l.b16 %v33
  %v118 = vunpack.c.l.b16 %v34
  %v119 = vunpack.c.l.b16 %v35
  %v120 = vunpack.c.l.b16 %v36
  %v121 = vunpack.c.l.b16 %v37
  %v122 = vunpack.c.l.b16 %v38
  %v123 = vunpack.c.l.b16 %v39
  %v124 = vunpack.c.l.b16 %v40
  %v125 = vunpack.c.l.b16 %v41
  %v126 = vunpack.c.l.b16 %v42
  %v127 = vunpack.c.l.b16 %v43
  %v128 = vunpack.c.l.b16 %v44
  %v129 = vunpack.c.l.b16 %v45
  %v130 = vunpack.c.l.b16 %v46
  %v131 = vunpack.c.l.b16 %v47
  %v132 = vunpack.c.l.b16 %v48
  %v133 = vunpack.c.l.b16 %v49
  %v134 = vunpack.c.l.b16 %v50
  %v135 = vunpack.c.l.b16 %v51
  %v136 = vunpack.c.l.b16 %v52
  %v137 = vunpack.c.l.b16 %v53
  %v138 = vpack.c.b16 %v107, %v106
  %v139 = vpack.c.b16 %v109, %v108
  %v140 = vpack.c.b16 %v111, %v110
  %v141 = vpack.c.b16 %v113, %v112
  %v142 = vpack.c.b16 %v115, %v114
  %v143 = vpack.c.b16 %v117, %v116
  %v144 = vpack.c.b16 %v119, %v118
  %v145 = vpack.c.b16 %v121, %v120
  %v146 = vpack.c.b16 %v123, %v122
  %v147 = vpack.c.b16 %v125, %v124
  %v148 = vpack.c.b16 %v127, %v126
  %v149 = vpack.c.b16 %v129, %v128
  %v150 = vpack.c.b16 %v131, %v130
  %v151 = vpack.c.b16 %v133, %v132
  %v152 = vpack.c.b16 %v135, %v134
  %v153 = vpack.c.b16 %v137, %v136
  %170 = vmatprep.subr.bf16.mxu0 0
  %171 = vmatpush1.bf16.msra.mxu0 %v145
  %172 = vmatprep.subr.bf16.mxu0 0
  %173 = vmatpush1.bf16.msra.mxu0 %v144
  %174 = vmatprep.subr.bf16.mxu0 0
  %175 = vmatpush1.bf16.msra.mxu0 %v143
  %176 = vmatprep.subr.bf16.mxu0 0
  %177 = vmatpush1.bf16.msra.mxu0 %v142
  %178 = vmatprep.subr.bf16.mxu0 0
  %179 = vmatpush1.bf16.msra.mxu0 %v141
  %180 = vmatprep.subr.bf16.mxu0 0
  %181 = vmatpush1.bf16.msra.mxu0 %v140
  %182 = vmatprep.subr.bf16.mxu0 0
  %183 = vmatpush1.bf16.msra.mxu0 %v139
  %184 = vmatprep.subr.bf16.mxu0 0
  %185 = vmatpush1.bf16.msra.mxu0 %v138
  %186 = vmatprep.subr.bf16.mxu0 0
  %187 = vmatpush2.bf16.msra.mxu0 %v153
  %188 = vmatprep.subr.bf16.mxu0 0
  %189 = vmatpush2.bf16.msra.mxu0 %v152
  %190 = vmatprep.subr.bf16.mxu0 0
  %191 = vmatpush2.bf16.msra.mxu0 %v151
  %192 = vmatprep.subr.bf16.mxu0 0
  %193 = vmatpush2.bf16.msra.mxu0 %v150
  %194 = vmatprep.subr.bf16.mxu0 0
  %195 = vmatpush2.bf16.msra.mxu0 %v149
  %196 = vmatprep.subr.bf16.mxu0 0
  %197 = vmatpush2.bf16.msra.mxu0 %v148
  %198 = vmatprep.subr.bf16.mxu0 0
  %199 = vmatpush2.bf16.msra.mxu0 %v147
  %200 = vmatprep.subr.bf16.mxu0 0
  %201 = vmatpush2.bf16.msra.mxu0 %v146
  %202 = vmatprep.mubr.bf16.mxu0 %v67
  %203 = vmatmul.mubr.bf16.gmra.mxu0 %v66
  %v204 = vpop.f32.mrf.mxu0
  %v205 = vadd.f32 0.0, %v204
  %v206 = vpop.f32.mrf.mxu0
  %v207 = vpop.f32.mrf.mxu0
  %v208 = vadd.f32 0.0, %v207
  %v209 = vpop.f32.mrf.mxu0
  %210 = vmatprep.mubr.bf16.mxu0 %v69
  %211 = vmatmul.mubr.bf16.gmra.mxu0 %v68
  %v212 = vpop.f32.mrf.mxu0
  %v213 = vadd.f32 0.0, %v212
  %v214 = vpop.f32.mrf.mxu0
  %v215 = vpop.f32.mrf.mxu0
  %v216 = vadd.f32 0.0, %v215
  %v217 = vpop.f32.mrf.mxu0
  %218 = vdwg.mxu0
  %vm219 = vcmask 261120
  %v220 = vsel %vm219, %v205, 0.0
  %221 = vadd.xlane.f32.xlu0 %v220
  %v222 = vpop.xlane.xlu0 %221
  %v223 = vsel %vm219, %v208, 0.0
  %224 = vadd.xlane.f32.xlu0 %v223
  %v225 = vpop.xlane.xlu0 %224
  %v226 = vsel %vm219, %v213, 0.0
  %227 = vadd.xlane.f32.xlu0 %v226
  %v228 = vpop.xlane.xlu0 %227
  %v229 = vsel %vm219, %v216, 0.0
  %230 = vadd.xlane.f32.xlu0 %v229
  %v231 = vpop.xlane.xlu0 %230
  %v232 = vmul.f32 %v205, %v205
  %v233 = vmul.f32 %v208, %v208
  %v234 = vmul.f32 %v213, %v213
  %v235 = vmul.f32 %v216, %v216
  %v236 = vsel %vm219, %v232, 0.0
  %237 = vadd.xlane.f32.xlu0 %v236
  %v238 = vpop.xlane.xlu0 %237
  %v239 = vsel %vm219, %v233, 0.0
  %240 = vadd.xlane.f32.xlu0 %v239
  %v241 = vpop.xlane.xlu0 %240
  %v242 = vsel %vm219, %v234, 0.0
  %243 = vadd.xlane.f32.xlu0 %v242
  %v244 = vpop.xlane.xlu0 %243
  %v245 = vsel %vm219, %v235, 0.0
  %246 = vadd.xlane.f32.xlu0 %v245
  %v247 = vpop.xlane.xlu0 %246
  %v248 = vmul.f32 %v222, 0.03125
  %v249 = vmul.f32 %v225, 0.03125
  %v250 = vmul.f32 %v228, 0.03125
  %v251 = vmul.f32 %v231, 0.03125
  %v252 = vmul.f32 %v238, 0.03125
  %v253 = vmul.f32 %v241, 0.03125
  %v254 = vmul.f32 %v244, 0.03125
  %v255 = vmul.f32 %v247, 0.03125
  %v256 = vmul.f32 %v248, %v248
  %v257 = vmul.f32 %v249, %v249
  %v258 = vmul.f32 %v250, %v250
  %v259 = vmul.f32 %v251, %v251
  %v260 = vsub.f32 %v252, %v256
  %v261 = vsub.f32 %v253, %v257
  %v262 = vsub.f32 %v254, %v258
  %v263 = vsub.f32 %v255, %v259
  %v264 = vmax.f32 %v260, 0.0
  %v265 = vmax.f32 %v261, 0.0
  %v266 = vmax.f32 %v262, 0.0
  %v267 = vmax.f32 %v263, 0.0
  %v268 = vadd.f32 %v264, 1e-05
  %v269 = vadd.f32 %v265, 1e-05
  %v270 = vadd.f32 %v266, 1e-05
  %v271 = vadd.f32 %v267, 1e-05
  %v272 = vrsqrt.pop %v268
  %v273 = vrsqrt.pop %v269
  %v274 = vrsqrt.pop %v270
  %v275 = vrsqrt.pop %v271
  %v276 = vld [vmem:[%s2] sm:$0xff]
  %v277 = vld [vmem:[%s2 + $0x8] sm:$0xff]
  %v278 = vld [vmem:[%s2 + $0x10] sm:$0xff]
  %v279 = vld [vmem:[%s2 + $0x18] sm:$0xff]
  %v280 = vmul.f32 %v272, %v276
  %v281 = vmul.f32 %v273, %v277
  %v282 = vmul.f32 %v274, %v278
  %v283 = vmul.f32 %v275, %v279
  %v284 = vld [vmem:[%s3] sm:$0xff]
  %v285 = vld [vmem:[%s3 + $0x8] sm:$0xff]
  %v286 = vld [vmem:[%s3 + $0x10] sm:$0xff]
  %v287 = vld [vmem:[%s3 + $0x18] sm:$0xff]
  %v288 = vmul.f32 %v248, %v280
  %v289 = vmul.f32 %v249, %v281
  %v290 = vmul.f32 %v250, %v282
  %v291 = vmul.f32 %v251, %v283
  %v292 = vsub.f32 %v284, %v288
  %v293 = vsub.f32 %v285, %v289
  %v294 = vsub.f32 %v286, %v290
  %v295 = vsub.f32 %v287, %v291
  %297 = vset.pattern.permute.xlu0 0
  %298 = vperm.xlu0 %297, %v280
  %v299 = vpop.permute.xlu0 %298
  %302 = vset.pattern.permute.xlu0 0
  %303 = vperm.xlu0 %302, %v281
  %v304 = vpop.permute.xlu0 %303
  %307 = vset.pattern.permute.xlu0 0
  %308 = vperm.xlu0 %307, %v282
  %v309 = vpop.permute.xlu0 %308
  %312 = vset.pattern.permute.xlu0 0
  %313 = vperm.xlu0 %312, %v283
  %v314 = vpop.permute.xlu0 %313
  %v316 = vmul.f32 %v205, %v299
  %v317 = vmul.f32 %v208, %v304
  %v318 = vmul.f32 %v213, %v309
  %v319 = vmul.f32 %v216, %v314
  %321 = vset.pattern.permute.xlu0 0
  %322 = vperm.xlu0 %321, %v292
  %v323 = vpop.permute.xlu0 %322
  %326 = vset.pattern.permute.xlu0 0
  %327 = vperm.xlu0 %326, %v293
  %v328 = vpop.permute.xlu0 %327
  %331 = vset.pattern.permute.xlu0 0
  %332 = vperm.xlu0 %331, %v294
  %v333 = vpop.permute.xlu0 %332
  %336 = vset.pattern.permute.xlu0 0
  %337 = vperm.xlu0 %336, %v295
  %v338 = vpop.permute.xlu0 %337
  %v340 = vadd.f32 %v316, %v323
  %v341 = vadd.f32 %v317, %v328
  %v342 = vadd.f32 %v318, %v333
  %v343 = vadd.f32 %v319, %v338
  %v344 = vmax.f32 %v340, 0.0
  %v345 = vmax.f32 %v341, 0.0
  %v346 = vmax.f32 %v342, 0.0
  %v347 = vmax.f32 %v343, 0.0
  %v348 = vpack.c.bf16 %v345, %v344
  %v349 = vpack.c.bf16 %v347, %v346
  %v352 = vunpack.c.l.b16 %v348
  %v353 = vunpack.c.h.b16 %v348
  %v354 = vunpack.c.l.b16 %v349
  %v355 = vunpack.c.h.b16 %v349
  %v356 = vpack.c.b16 %v352, %v352
  %v357 = vpack.c.b16 %v353, %v353
  %v358 = vpack.c.b16 %v354, %v354
  %v359 = vpack.c.b16 %v355, %v355
  %vm364 = vcmask 257024
  %365 = vst.msk [vmem:[%s4] sm:$0xf] %vm364, %v356
  %366 = vst.msk [vmem:[%s4 + $0x4] sm:$0xf] %vm364, %v357
  %367 = vst.msk [vmem:[%s4 + $0x8] sm:$0xf] %vm364, %v358
  %368 = vst.msk [vmem:[%s4 + $0xc] sm:$0xf] %vm364, %v359
  // Predicated region
  $region18: #{cycle_generator_forward.9} parent=0 // pred_check
    _
  $region19: #{cycle_generator_forward.9} parent=0 // pred_check_branch
    %370 = sbr.rel (0) target = $region21
  $region20: #{cycle_generator_forward.9} parent=0 // pred_region
    _
  $region21: #{cycle_generator_forward.9} parent=0 // pred_fallthru
    _
  // Predicated region
  $region22: #{cycle_generator_forward.9} parent=0 // pred_check
    _
  $region23: #{cycle_generator_forward.9} parent=0 // pred_check_branch
    %372 = sbr.rel (0) target = $region25
  $region24: #{cycle_generator_forward.9} parent=0 // pred_region
    _
  $region25: #{cycle_generator_forward.9} parent=0 // pred_fallthru
    _

// kernel: cycle_generator_forward.10
$region0: #{cycle_generator_forward.10}
  #allocation0 [shape = 'u32[]', space=smem, size = 0x4, offset = 0x4, fixed_abs, tag = 'smem constant byte address 0x4 - core index']
  #allocation1 [shape = 'u32[144,128]{1,0:T(1,128)}', space=vmem, size = 0x12000, scoped, tag = 'internal scratch']
  %s0 = inlined_call_operand.vmem [shape: bf16[2,512], index: 0, kind: input, shape index: {}]
  %s1 = inlined_call_operand.vmem [shape: bf16[512,32], index: 1, kind: input, shape index: {}]
  %s2 = inlined_call_operand.vmem [shape: f32[1,32], index: 2, kind: input, shape index: {}]
  %s3 = inlined_call_operand.vmem [shape: f32[1,32], index: 3, kind: input, shape index: {}]
  %s4 = inlined_call_operand.vmem [shape: f32[2,32], index: 4, kind: input, shape index: {}]
  %s5 = inlined_call_operand.vmem [shape: bf16[32,512], index: 5, kind: input, shape index: {}]
  %s6 = inlined_call_operand.vmem [shape: f32[1,512], index: 6, kind: input, shape index: {}]
  %s7 = inlined_call_operand.vmem [shape: f32[1,512], index: 7, kind: input, shape index: {}]
  %s8 = inlined_call_operand.vmem [shape: f32[2,32], index: 8, kind: output, shape index: {0}]
  %s9 = inlined_call_operand.vmem [shape: bf16[2,512], index: 9, kind: output, shape index: {1}]
  %10 = xla_tuple %s8, %s9
  %s11 = sld [smem:[#allocation0]]
  $region50: #{cycle_generator_forward.10} parent=0
    _
  %s13 = ssub.s32 1, %s11
  %s14 = scalar_select 0, %s13, %s11
  // Predicated region
  $region2: #{cycle_generator_forward.10} parent=0 // pred_check
    _
  $region3: #{cycle_generator_forward.10} parent=0 // pred_check_branch
    %16 = sbr.rel (0) target = $region5
  $region4: #{cycle_generator_forward.10} parent=0 // pred_region
    _
  $region5: #{cycle_generator_forward.10} parent=0 // pred_fallthru
    _
  // Predicated region
  $region6: #{cycle_generator_forward.10} parent=0 // pred_check
    _
  $region7: #{cycle_generator_forward.10} parent=0 // pred_check_branch
    %18 = sbr.rel (0) target = $region9
  $region8: #{cycle_generator_forward.10} parent=0 // pred_region
    _
  $region9: #{cycle_generator_forward.10} parent=0 // pred_fallthru
    _
  // Predicated region
  $region10: #{cycle_generator_forward.10} parent=0 // pred_check
    _
  $region11: #{cycle_generator_forward.10} parent=0 // pred_check_branch
    %20 = sbr.rel (0) target = $region13
  $region12: #{cycle_generator_forward.10} parent=0 // pred_region
    _
  $region13: #{cycle_generator_forward.10} parent=0 // pred_fallthru
    _
  // Predicated region
  $region14: #{cycle_generator_forward.10} parent=0 // pred_check
    _
  $region15: #{cycle_generator_forward.10} parent=0 // pred_check_branch
    %22 = sbr.rel (0) target = $region17
  $region16: #{cycle_generator_forward.10} parent=0 // pred_region
    _
  $region17: #{cycle_generator_forward.10} parent=0 // pred_fallthru
    _
  // Predicated region
  $region18: #{cycle_generator_forward.10} parent=0 // pred_check
    _
  $region19: #{cycle_generator_forward.10} parent=0 // pred_check_branch
    %24 = sbr.rel (0) target = $region21
  $region20: #{cycle_generator_forward.10} parent=0 // pred_region
    _
  $region21: #{cycle_generator_forward.10} parent=0 // pred_fallthru
    _
  // Predicated region
  $region22: #{cycle_generator_forward.10} parent=0 // pred_check
    _
  $region23: #{cycle_generator_forward.10} parent=0 // pred_check_branch
    %26 = sbr.rel (0) target = $region25
  $region24: #{cycle_generator_forward.10} parent=0 // pred_region
    _
  $region25: #{cycle_generator_forward.10} parent=0 // pred_fallthru
    _
  // Predicated region
  $region26: #{cycle_generator_forward.10} parent=0 // pred_check
    _
  $region27: #{cycle_generator_forward.10} parent=0 // pred_check_branch
    %28 = sbr.rel (0) target = $region29
  $region28: #{cycle_generator_forward.10} parent=0 // pred_region
    _
  $region29: #{cycle_generator_forward.10} parent=0 // pred_fallthru
    _
  // Predicated region
  $region30: #{cycle_generator_forward.10} parent=0 // pred_check
    _
  $region31: #{cycle_generator_forward.10} parent=0 // pred_check_branch
    %30 = sbr.rel (0) target = $region33
  $region32: #{cycle_generator_forward.10} parent=0 // pred_region
    _
  $region33: #{cycle_generator_forward.10} parent=0 // pred_fallthru
    _
  %v32 = vld [vmem:[%s0] sm:$0xf]
  %v33 = vld [vmem:[%s1] sm:$0xf]
  %v34 = vld [vmem:[%s1 + $0x4] sm:$0xf]
  %v35 = vld [vmem:[%s1 + $0x8] sm:$0xf]
  %v36 = vld [vmem:[%s1 + $0xc] sm:$0xf]
  %v37 = vld [vmem:[%s1 + $0x10] sm:$0xf]
  %v38 = vld [vmem:[%s1 + $0x14] sm:$0xf]
  %v39 = vld [vmem:[%s1 + $0x18] sm:$0xf]
  %v40 = vld [vmem:[%s1 + $0x1c] sm:$0xf]
  %v41 = vld [vmem:[%s1 + $0x20] sm:$0xf]
  %v42 = vld [vmem:[%s1 + $0x24] sm:$0xf]
  %v43 = vld [vmem:[%s1 + $0x28] sm:$0xf]
  %v44 = vld [vmem:[%s1 + $0x2c] sm:$0xf]
  %v45 = vld [vmem:[%s1 + $0x30] sm:$0xf]
  %v46 = vld [vmem:[%s1 + $0x34] sm:$0xf]
  %v47 = vld [vmem:[%s1 + $0x38] sm:$0xf]
  %v48 = vld [vmem:[%s1 + $0x3c] sm:$0xf]
  %v49 = vld [vmem:[%s1 + $0x40] sm:$0xf]
  %v50 = vld [vmem:[%s1 + $0x44] sm:$0xf]
  %v51 = vld [vmem:[%s1 + $0x48] sm:$0xf]
  %v52 = vld [vmem:[%s1 + $0x4c] sm:$0xf]
  %v53 = vld [vmem:[%s1 + $0x50] sm:$0xf]
  %v54 = vld [vmem:[%s1 + $0x54] sm:$0xf]
  %v55 = vld [vmem:[%s1 + $0x58] sm:$0xf]
  %v56 = vld [vmem:[%s1 + $0x5c] sm:$0xf]
  %v57 = vld [vmem:[%s1 + $0x60] sm:$0xf]
  %v58 = vld [vmem:[%s1 + $0x64] sm:$0xf]
  %v59 = vld [vmem:[%s1 + $0x68] sm:$0xf]
  %v60 = vld [vmem:[%s1 + $0x6c] sm:$0xf]
  %v61 = vld [vmem:[%s1 + $0x70] sm:$0xf]
  %v62 = vld [vmem:[%s1 + $0x74] sm:$0xf]
  %v63 = vld [vmem:[%s1 + $0x78] sm:$0xf]
  %v64 = vld [vmem:[%s1 + $0x7c] sm:$0xf]
  %v65 = vld [vmem:[%s1 + $0x80] sm:$0xf]
  %v66 = vld [vmem:[%s1 + $0x84] sm:$0xf]
  %v67 = vld [vmem:[%s1 + $0x88] sm:$0xf]
  %v68 = vld [vmem:[%s1 + $0x8c] sm:$0xf]
  %v69 = vld [vmem:[%s1 + $0x90] sm:$0xf]
  %v70 = vld [vmem:[%s1 + $0x94] sm:$0xf]
  %v71 = vld [vmem:[%s1 + $0x98] sm:$0xf]
  %v72 = vld [vmem:[%s1 + $0x9c] sm:$0xf]
  %v73 = vld [vmem:[%s1 + $0xa0] sm:$0xf]
  %v74 = vld [vmem:[%s1 + $0xa4] sm:$0xf]
  %v75 = vld [vmem:[%s1 + $0xa8] sm:$0xf]
  %v76 = vld [vmem:[%s1 + $0xac] sm:$0xf]
  %v77 = vld [vmem:[%s1 + $0xb0] sm:$0xf]
  %v78 = vld [vmem:[%s1 + $0xb4] sm:$0xf]
  %v79 = vld [vmem:[%s1 + $0xb8] sm:$0xf]
  %v80 = vld [vmem:[%s1 + $0xbc] sm:$0xf]
  %v81 = vld [vmem:[%s1 + $0xc0] sm:$0xf]
  %v82 = vld [vmem:[%s1 + $0xc4] sm:$0xf]
  %v83 = vld [vmem:[%s1 + $0xc8] sm:$0xf]
  %v84 = vld [vmem:[%s1 + $0xcc] sm:$0xf]
  %v85 = vld [vmem:[%s1 + $0xd0] sm:$0xf]
  %v86 = vld [vmem:[%s1 + $0xd4] sm:$0xf]
  %v87 = vld [vmem:[%s1 + $0xd8] sm:$0xf]
  %v88 = vld [vmem:[%s1 + $0xdc] sm:$0xf]
  %v89 = vld [vmem:[%s1 + $0xe0] sm:$0xf]
  %v90 = vld [vmem:[%s1 + $0xe4] sm:$0xf]
  %v91 = vld [vmem:[%s1 + $0xe8] sm:$0xf]
  %v92 = vld [vmem:[%s1 + $0xec] sm:$0xf]
  %v93 = vld [vmem:[%s1 + $0xf0] sm:$0xf]
  %v94 = vld [vmem:[%s1 + $0xf4] sm:$0xf]
  %v95 = vld [vmem:[%s1 + $0xf8] sm:$0xf]
  %v96 = vld [vmem:[%s1 + $0xfc] sm:$0xf]
  %v99 = vunpack.c.l.s4 1966171168
  %v100 = vunpack.c.0.s8 %v99
  %v101 = vlaneseq
  %v102 = vshrl.u32 %v101, 7
  %v103 = vsub.s32 %v100, %v102
  %v104 = vrot.slane %v32, %v103
  %v105 = vcombine.high %v104, %v104
  %v107 = vunpack.c.l.s4 1966171168
  %v108 = vunpack.c.0.s8 %v107
  %v109 = vlaneseq
  %v110 = vshrl.u32 %v109, 7
  %v111 = vsub.s32 %v108, %v110
  %v112 = vrot.slane %v104, %v111
  %v114 = vunpack.c.l.s4 1966171168
  %v115 = vunpack.c.0.s8 %v114
  %v116 = vlaneseq
  %v117 = vshrl.u32 %v116, 7
  %v118 = vsub.s32 %v115, %v117
  %v119 = vrot.slane %v105, %v118
  %v120 = vcombine.high %v112, %v112
  %v121 = vcombine.high %v119, %v119
  %v190 = vunpack.c.l.b16 %v33
  %v191 = vunpack.c.l.b16 %v34
  %v192 = vunpack.c.l.b16 %v35
  %v193 = vunpack.c.l.b16 %v36
  %v194 = vunpack.c.l.b16 %v37
  %v195 = vunpack.c.l.b16 %v38
  %v196 = vunpack.c.l.b16 %v39
  %v197 = vunpack.c.l.b16 %v40
  %v198 = vunpack.c.l.b16 %v41
  %v199 = vunpack.c.l.b16 %v42
  %v200 = vunpack.c.l.b16 %v43
  %v201 = vunpack.c.l.b16 %v44
  %v202 = vunpack.c.l.b16 %v45
  %v203 = vunpack.c.l.b16 %v46
  %v204 = vunpack.c.l.b16 %v47
  %v205 = vunpack.c.l.b16 %v48
  %v206 = vunpack.c.l.b16 %v49
  %v207 = vunpack.c.l.b16 %v50
  %v208 = vunpack.c.l.b16 %v51
  %v209 = vunpack.c.l.b16 %v52
  %v210 = vunpack.c.l.b16 %v53
  %v211 = vunpack.c.l.b16 %v54
  %v212 = vunpack.c.l.b16 %v55
  %v213 = vunpack.c.l.b16 %v56
  %v214 = vunpack.c.l.b16 %v57
  %v215 = vunpack.c.l.b16 %v58
  %v216 = vunpack.c.l.b16 %v59
  %v217 = vunpack.c.l.b16 %v60
  %v218 = vunpack.c.l.b16 %v61
  %v219 = vunpack.c.l.b16 %v62
  %v220 = vunpack.c.l.b16 %v63
  %v221 = vunpack.c.l.b16 %v64
  %v222 = vunpack.c.l.b16 %v65
  %v223 = vunpack.c.l.b16 %v66
  %v224 = vunpack.c.l.b16 %v67
  %v225 = vunpack.c.l.b16 %v68
  %v226 = vunpack.c.l.b16 %v69
  %v227 = vunpack.c.l.b16 %v70
  %v228 = vunpack.c.l.b16 %v71
  %v229 = vunpack.c.l.b16 %v72
  %v230 = vunpack.c.l.b16 %v73
  %v231 = vunpack.c.l.b16 %v74
  %v232 = vunpack.c.l.b16 %v75
  %v233 = vunpack.c.l.b16 %v76
  %v234 = vunpack.c.l.b16 %v77
  %v235 = vunpack.c.l.b16 %v78
  %v236 = vunpack.c.l.b16 %v79
  %v237 = vunpack.c.l.b16 %v80
  %v238 = vunpack.c.l.b16 %v81
  %v239 = vunpack.c.l.b16 %v82
  %v240 = vunpack.c.l.b16 %v83
  %v241 = vunpack.c.l.b16 %v84
  %v242 = vunpack.c.l.b16 %v85
  %v243 = vunpack.c.l.b16 %v86
  %v244 = vunpack.c.l.b16 %v87
  %v245 = vunpack.c.l.b16 %v88
  %v246 = vunpack.c.l.b16 %v89
  %v247 = vunpack.c.l.b16 %v90
  %v248 = vunpack.c.l.b16 %v91
  %v249 = vunpack.c.l.b16 %v92
  %v250 = vunpack.c.l.b16 %v93
  %v251 = vunpack.c.l.b16 %v94
  %v252 = vunpack.c.l.b16 %v95
  %v253 = vunpack.c.l.b16 %v96
  %v254 = vpack.c.b16 %v191, %v190
  %v255 = vpack.c.b16 %v193, %v192
  %v256 = vpack.c.b16 %v195, %v194
  %v257 = vpack.c.b16 %v197, %v196
  %v258 = vpack.c.b16 %v199, %v198
  %v259 = vpack.c.b16 %v201, %v200
  %v260 = vpack.c.b16 %v203, %v202
  %v261 = vpack.c.b16 %v205, %v204
  %v262 = vpack.c.b16 %v207, %v206
  %v263 = vpack.c.b16 %v209, %v208
  %v264 = vpack.c.b16 %v211, %v210
  %v265 = vpack.c.b16 %v213, %v212
  %v266 = vpack.c.b16 %v215, %v214
  %v267 = vpack.c.b16 %v217, %v216
  %v268 = vpack.c.b16 %v219, %v218
  %v269 = vpack.c.b16 %v221, %v220
  %v270 = vpack.c.b16 %v223, %v222
  %v271 = vpack.c.b16 %v225, %v224
  %v272 = vpack.c.b16 %v227, %v226
  %v273 = vpack.c.b16 %v229, %v228
  %v274 = vpack.c.b16 %v231, %v230
  %v275 = vpack.c.b16 %v233, %v232
  %v276 = vpack.c.b16 %v235, %v234
  %v277 = vpack.c.b16 %v237, %v236
  %v278 = vpack.c.b16 %v239, %v238
  %v279 = vpack.c.b16 %v241, %v240
  %v280 = vpack.c.b16 %v243, %v242
  %v281 = vpack.c.b16 %v245, %v244
  %v282 = vpack.c.b16 %v247, %v246
  %v283 = vpack.c.b16 %v249, %v248
  %v284 = vpack.c.b16 %v251, %v250
  %v285 = vpack.c.b16 %v253, %v252
  %318 = vmatprep.subr.bf16.mxu0 0
  %319 = vmatpush1.bf16.msra.mxu0 %v261
  %320 = vmatprep.subr.bf16.mxu0 0
  %321 = vmatpush1.bf16.msra.mxu0 %v260
  %322 = vmatprep.subr.bf16.mxu0 0
  %323 = vmatpush1.bf16.msra.mxu0 %v259
  %324 = vmatprep.subr.bf16.mxu0 0
  %325 = vmatpush1.bf16.msra.mxu0 %v258
  %326 = vmatprep.subr.bf16.mxu0 0
  %327 = vmatpush1.bf16.msra.mxu0 %v257
  %328 = vmatprep.subr.bf16.mxu0 0
  %329 = vmatpush1.bf16.msra.mxu0 %v256
  %330 = vmatprep.subr.bf16.mxu0 0
  %331 = vmatpush1.bf16.msra.mxu0 %v255
  %332 = vmatprep.subr.bf16.mxu0 0
  %333 = vmatpush1.bf16.msra.mxu0 %v254
  %334 = vmatprep.subr.bf16.mxu0 0
  %335 = vmatpush2.bf16.msra.mxu0 %v269
  %336 = vmatprep.subr.bf16.mxu0 0
  %337 = vmatpush2.bf16.msra.mxu0 %v268
  %338 = vmatprep.subr.bf16.mxu0 0
  %339 = vmatpush2.bf16.msra.mxu0 %v267
  %340 = vmatprep.subr.bf16.mxu0 0
  %341 = vmatpush2.bf16.msra.mxu0 %v266
  %342 = vmatprep.subr.bf16.mxu0 0
  %343 = vmatpush2.bf16.msra.mxu0 %v265
  %344 = vmatprep.subr.bf16.mxu0 0
  %345 = vmatpush2.bf16.msra.mxu0 %v264
  %346 = vmatprep.subr.bf16.mxu0 0
  %347 = vmatpush2.bf16.msra.mxu0 %v263
  %348 = vmatprep.subr.bf16.mxu0 0
  %349 = vmatpush2.bf16.msra.mxu0 %v262
  %350 = vmatprep.mubr.bf16.mxu0 %v119
  %351 = vmatmul.mubr.bf16.gmra.mxu0 %v112
  %v352 = vpop.f32.mrf.mxu0
  %v353 = vadd.f32 0.0, %v352
  %v354 = vpop.f32.mrf.mxu0
  %v355 = vpop.f32.mrf.mxu0
  %v356 = vpop.f32.mrf.mxu0
  %357 = vdwg.mxu0
  %358 = vmatprep.subr.bf16.mxu0 0
  %359 = vmatpush1.bf16.msra.mxu0 %v277
  %360 = vmatprep.subr.bf16.mxu0 0
  %361 = vmatpush1.bf16.msra.mxu0 %v276
  %362 = vmatprep.subr.bf16.mxu0 0
  %363 = vmatpush1.bf16.msra.mxu0 %v275
  %364 = vmatprep.subr.bf16.mxu0 0
  %365 = vmatpush1.bf16.msra.mxu0 %v274
  %366 = vmatprep.subr.bf16.mxu0 0
  %367 = vmatpush1.bf16.msra.mxu0 %v273
  %368 = vmatprep.subr.bf16.mxu0 0
  %369 = vmatpush1.bf16.msra.mxu0 %v272
  %370 = vmatprep.subr.bf16.mxu0 0
  %371 = vmatpush1.bf16.msra.mxu0 %v271
  %372 = vmatprep.subr.bf16.mxu0 0
  %373 = vmatpush1.bf16.msra.mxu0 %v270
  %374 = vmatprep.subr.bf16.mxu0 0
  %375 = vmatpush2.bf16.msra.mxu0 %v285
  %376 = vmatprep.subr.bf16.mxu0 0
  %377 = vmatpush2.bf16.msra.mxu0 %v284
  %378 = vmatprep.subr.bf16.mxu0 0
  %379 = vmatpush2.bf16.msra.mxu0 %v283
  %380 = vmatprep.subr.bf16.mxu0 0
  %381 = vmatpush2.bf16.msra.mxu0 %v282
  %382 = vmatprep.subr.bf16.mxu0 0
  %383 = vmatpush2.bf16.msra.mxu0 %v281
  %384 = vmatprep.subr.bf16.mxu0 0
  %385 = vmatpush2.bf16.msra.mxu0 %v280
  %386 = vmatprep.subr.bf16.mxu0 0
  %387 = vmatpush2.bf16.msra.mxu0 %v279
  %388 = vmatprep.subr.bf16.mxu0 0
  %389 = vmatpush2.bf16.msra.mxu0 %v278
  %390 = vmatprep.mubr.bf16.mxu0 %v121
  %391 = vmatmul.mubr.bf16.gmra.mxu0 %v120
  %v392 = vpop.f32.mrf.mxu0
  %v393 = vadd.f32 %v353, %v392
  %v394 = vpop.f32.mrf.mxu0
  %v395 = vpop.f32.mrf.mxu0
  %v396 = vpop.f32.mrf.mxu0
  %397 = vdwg.mxu0
  %vm398 = vcmask 254976
  %v399 = vsel %vm398, %v393, 0.0
  %v400 = vrot.slane %v399, 4
  %v401 = vadd.f32 %v399, %v400
  %v402 = vrot.slane %v401, 2
  %v403 = vadd.f32 %v401, %v402
  %v404 = vrot.slane %v403, 1
  %v405 = vadd.f32 %v403, %v404
  %v406 = vmul.f32 %v393, %v393
  %v407 = vsel %vm398, %v406, 0.0
  %v408 = vrot.slane %v407, 4
  %v409 = vadd.f32 %v407, %v408
  %v410 = vrot.slane %v409, 2
  %v411 = vadd.f32 %v409, %v410
  %v412 = vrot.slane %v411, 1
  %v413 = vadd.f32 %v411, %v412
  %v414 = vmul.f32 %v405, 0.5
  %v415 = vmul.f32 %v413, 0.5
  %v416 = vmul.f32 %v414, %v414
  %v417 = vsub.f32 %v415, %v416
  %v418 = vmax.f32 %v417, 0.0
  %v419 = vadd.f32 %v418, 1e-05
  %v420 = vrsqrt.pop %v419
  %v421 = vld [vmem:[%s2] sm:$0x1]
  %v422 = vmul.f32 %v420, %v421
  %v423 = vld [vmem:[%s3] sm:$0x1]
  %v424 = vmul.f32 %v414, %v422
  %v425 = vsub.f32 %v423, %v424
  %v426 = vlaneseq
  %v427 = vshrl.u32 %v426, 7
  %v428 = vsub.s32 0, %v427
  %v429 = vrot.slane %v422, %v428
  %v430 = vmul.f32 %v393, %v429
  %v432 = vlaneseq
  %v433 = vshrl.u32 %v432, 7
  %v434 = vsub.s32 0, %v433
  %v435 = vrot.slane %v425, %v434
  %v437 = vadd.f32 %v430, %v435
  %438 = vst.msk [vmem:[%s8] sm:$0x3] %vm398, %v437
  %v439 = vld [vmem:[%s4] sm:$0x3]
  %v440 = vmul.f32 %v437, 0.5
  %v441 = vmul.f32 %v440, 1.442695
  %v442 = vpow.pop %v441
  %v443 = vmul.f32 %v439, %v442
  %v444 = vadd.f32 %v443, %v437
  %v445 = vpack.c.bf16 %v444, %v444
  %v446 = vld [vmem:[%s5] sm:$0xff]
  %v447 = vld [vmem:[%s5 + $0x8] sm:$0xff]
  %v448 = vld [vmem:[%s5 + $0x10] sm:$0xff]
  %v449 = vld [vmem:[%s5 + $0x18] sm:$0xff]
  %v450 = vld [vmem:[%s5 + $0x20] sm:$0xff]
  %v451 = vld [vmem:[%s5 + $0x28] sm:$0xff]
  %v452 = vld [vmem:[%s5 + $0x30] sm:$0xff]
  %v453 = vld [vmem:[%s5 + $0x38] sm:$0xff]
  %v462 = vunpack.c.l.b16 %v446
  %v463 = vunpack.c.h.b16 %v446
  %v464 = vunpack.c.l.b16 %v447
  %v465 = vunpack.c.h.b16 %v447
  %v466 = vunpack.c.l.b16 %v448
  %v467 = vunpack.c.h.b16 %v448
  %v468 = vunpack.c.l.b16 %v449
  %v469 = vunpack.c.h.b16 %v449
  %v470 = vunpack.c.l.b16 %v450
  %v471 = vunpack.c.h.b16 %v450
  %v472 = vunpack.c.l.b16 %v451
  %v473 = vunpack.c.h.b16 %v451
  %v474 = vunpack.c.l.b16 %v452
  %v475 = vunpack.c.h.b16 %v452
  %v476 = vunpack.c.l.b16 %v453
  %v477 = vunpack.c.h.b16 %v453
  %v478 = vpack.c.b16 %v466, %v462
  %v479 = vpack.c.b16 %v467, %v463
  %v480 = vpack.c.b16 %v468, %v464
  %v481 = vpack.c.b16 %v469, %v465
  %v482 = vpack.c.b16 %v474, %v470
  %v483 = vpack.c.b16 %v475, %v471
  %v484 = vpack.c.b16 %v476, %v472
  %v485 = vpack.c.b16 %v477, %v473
  %vm494 = vcmask 261120
  %v496 = vsel %vm494, %v445, 0
  %498 = vmatprep.subr.bf16.mxu0 0
  %499 = vmatpush1.bf16.msra.mxu0 0
  %500 = vmatprep.subr.bf16.mxu0 0
  %501 = vmatpush1.bf16.msra.mxu0 0
  %502 = vmatprep.subr.bf16.mxu0 0
  %503 = vmatpush1.bf16.msra.mxu0 0
  %504 = vmatprep.subr.bf16.mxu0 0
  %505 = vmatpush1.bf16.msra.mxu0 0
  %506 = vmatprep.subr.bf16.mxu0 0
  %507 = vmatpush1.bf16.msra.mxu0 0
  %508 = vmatprep.subr.bf16.mxu0 0
  %509 = vmatpush1.bf16.msra.mxu0 0
  %510 = vmatprep.subr.bf16.mxu0 %v483
  %511 = vmatpush1.bf16.msra.mxu0 %v482
  %512 = vmatprep.subr.bf16.mxu0 %v479
  %513 = vmatpush1.bf16.msra.mxu0 %v478
  %514 = vmatprep.subr.bf16.mxu0 0
  %515 = vmatpush2.bf16.msra.mxu0 0
  %516 = vmatprep.subr.bf16.mxu0 0
  %517 = vmatpush2.bf16.msra.mxu0 0
  %518 = vmatprep.subr.bf16.mxu0 0
  %519 = vmatpush2.bf16.msra.mxu0 0
  %520 = vmatprep.subr.bf16.mxu0 0
  %521 = vmatpush2.bf16.msra.mxu0 0
  %522 = vmatprep.subr.bf16.mxu0 0
  %523 = vmatpush2.bf16.msra.mxu0 0
  %524 = vmatprep.subr.bf16.mxu0 0
  %525 = vmatpush2.bf16.msra.mxu0 0
  %526 = vmatprep.subr.bf16.mxu0 0
  %527 = vmatpush2.bf16.msra.mxu0 0
  %528 = vmatprep.subr.bf16.mxu0 0
  %529 = vmatpush2.bf16.msra.mxu0 0
  %530 = vmatprep.mubr.bf16.mxu0 0
  %531 = vmatmul.mubr.bf16.gmra.mxu0 %v496
  %v532 = vpop.f32.mrf.mxu0
  %v533 = vadd.f32 0.0, %v532
  %v534 = vpop.f32.mrf.mxu0
  %v535 = vadd.f32 0.0, %v534
  %v536 = vpop.f32.mrf.mxu0
  %v537 = vpop.f32.mrf.mxu0
  %538 = vdwg.mxu0
  %539 = vmatprep.subr.bf16.mxu0 0
  %540 = vmatpush1.bf16.msra.mxu0 0
  %541 = vmatprep.subr.bf16.mxu0 0
  %542 = vmatpush1.bf16.msra.mxu0 0
  %543 = vmatprep.subr.bf16.mxu0 0
  %544 = vmatpush1.bf16.msra.mxu0 0
  %545 = vmatprep.subr.bf16.mxu0 0
  %546 = vmatpush1.bf16.msra.mxu0 0
  %547 = vmatprep.subr.bf16.mxu0 0
  %548 = vmatpush1.bf16.msra.mxu0 0
  %549 = vmatprep.subr.bf16.mxu0 0
  %550 = vmatpush1.bf16.msra.mxu0 0
  %551 = vmatprep.subr.bf16.mxu0 %v485
  %552 = vmatpush1.bf16.msra.mxu0 %v484
  %553 = vmatprep.subr.bf16.mxu0 %v481
  %554 = vmatpush1.bf16.msra.mxu0 %v480
  %555 = vmatprep.subr.bf16.mxu0 0
  %556 = vmatpush2.bf16.msra.mxu0 0
  %557 = vmatprep.subr.bf16.mxu0 0
  %558 = vmatpush2.bf16.msra.mxu0 0
  %559 = vmatprep.subr.bf16.mxu0 0
  %560 = vmatpush2.bf16.msra.mxu0 0
  %561 = vmatprep.subr.bf16.mxu0 0
  %562 = vmatpush2.bf16.msra.mxu0 0
  %563 = vmatprep.subr.bf16.mxu0 0
  %564 = vmatpush2.bf16.msra.mxu0 0
  %565 = vmatprep.subr.bf16.mxu0 0
  %566 = vmatpush2.bf16.msra.mxu0 0
  %567 = vmatprep.subr.bf16.mxu0 0
  %568 = vmatpush2.bf16.msra.mxu0 0
  %569 = vmatprep.subr.bf16.mxu0 0
  %570 = vmatpush2.bf16.msra.mxu0 0
  %571 = vmatprep.mubr.bf16.mxu0 0
  %572 = vmatmul.mubr.bf16.gmra.mxu0 %v496
  %v573 = vpop.f32.mrf.mxu0
  %v574 = vadd.f32 0.0, %v573
  %v575 = vpop.f32.mrf.mxu0
  %v576 = vadd.f32 0.0, %v575
  %v577 = vpop.f32.mrf.mxu0
  %v578 = vpop.f32.mrf.mxu0
  %579 = vdwg.mxu0
  %vm580 = vcmask 1041408
  %v581 = vsel %vm580, %v533, 0.0
  %v582 = vrot.slane %v581, 4
  %v583 = vadd.f32 %v581, %v582
  %v584 = vrot.slane %v583, 2
  %v585 = vadd.f32 %v583, %v584
  %v586 = vrot.slane %v585, 1
  %v587 = vadd.f32 %v585, %v586
  %v588 = vsel %vm580, %v535, 0.0
  %v589 = vrot.slane %v588, 4
  %v590 = vadd.f32 %v588, %v589
  %v591 = vrot.slane %v590, 2
  %v592 = vadd.f32 %v590, %v591
  %v593 = vrot.slane %v592, 1
  %v594 = vadd.f32 %v592, %v593
  %v595 = vsel %vm580, %v574, 0.0
  %v596 = vrot.slane %v595, 4
  %v597 = vadd.f32 %v595, %v596
  %v598 = vrot.slane %v597, 2
  %v599 = vadd.f32 %v597, %v598
  %v600 = vrot.slane %v599, 1
  %v601 = vadd.f32 %v599, %v600
  %v602 = vsel %vm580, %v576, 0.0
  %v603 = vrot.slane %v602, 4
  %v604 = vadd.f32 %v602, %v603
  %v605 = vrot.slane %v604, 2
  %v606 = vadd.f32 %v604, %v605
  %v607 = vrot.slane %v606, 1
  %v608 = vadd.f32 %v606, %v607
  %v609 = vmul.f32 %v533, %v533
  %v610 = vmul.f32 %v535, %v535
  %v611 = vmul.f32 %v574, %v574
  %v612 = vmul.f32 %v576, %v576
  %v613 = vsel %vm580, %v609, 0.0
  %v614 = vrot.slane %v613, 4
  %v615 = vadd.f32 %v613, %v614
  %v616 = vrot.slane %v615, 2
  %v617 = vadd.f32 %v615, %v616
  %v618 = vrot.slane %v617, 1
  %v619 = vadd.f32 %v617, %v618
  %v620 = vsel %vm580, %v610, 0.0
  %v621 = vrot.slane %v620, 4
  %v622 = vadd.f32 %v620, %v621
  %v623 = vrot.slane %v622, 2
  %v624 = vadd.f32 %v622, %v623
  %v625 = vrot.slane %v624, 1
  %v626 = vadd.f32 %v624, %v625
  %v627 = vsel %vm580, %v611, 0.0
  %v628 = vrot.slane %v627, 4
  %v629 = vadd.f32 %v627, %v628
  %v630 = vrot.slane %v629, 2
  %v631 = vadd.f32 %v629, %v630
  %v632 = vrot.slane %v631, 1
  %v633 = vadd.f32 %v631, %v632
  %v634 = vsel %vm580, %v612, 0.0
  %v635 = vrot.slane %v634, 4
  %v636 = vadd.f32 %v634, %v635
  %v637 = vrot.slane %v636, 2
  %v638 = vadd.f32 %v636, %v637
  %v639 = vrot.slane %v638, 1
  %v640 = vadd.f32 %v638, %v639
  %v641 = vmul.f32 %v587, 0.5
  %v642 = vmul.f32 %v594, 0.5
  %v643 = vmul.f32 %v601, 0.5
  %v644 = vmul.f32 %v608, 0.5
  %v645 = vmul.f32 %v619, 0.5
  %v646 = vmul.f32 %v626, 0.5
  %v647 = vmul.f32 %v633, 0.5
  %v648 = vmul.f32 %v640, 0.5
  %v649 = vmul.f32 %v641, %v641
  %v650 = vmul.f32 %v642, %v642
  %v651 = vmul.f32 %v643, %v643
  %v652 = vmul.f32 %v644, %v644
  %v653 = vsub.f32 %v645, %v649
  %v654 = vsub.f32 %v646, %v650
  %v655 = vsub.f32 %v647, %v651
  %v656 = vsub.f32 %v648, %v652
  %v657 = vmax.f32 %v653, 0.0
  %v658 = vmax.f32 %v654, 0.0
  %v659 = vmax.f32 %v655, 0.0
  %v660 = vmax.f32 %v656, 0.0
  %v661 = vadd.f32 %v657, 1e-05
  %v662 = vadd.f32 %v658, 1e-05
  %v663 = vadd.f32 %v659, 1e-05
  %v664 = vadd.f32 %v660, 1e-05
  %v665 = vrsqrt.pop %v661
  %v666 = vrsqrt.pop %v662
  %v667 = vrsqrt.pop %v663
  %v668 = vrsqrt.pop %v664
  %v669 = vld [vmem:[%s6] sm:$0xf]
  %v671 = vlaneseq
  %v672 = vshrl.u32 %v671, 7
  %v673 = vsub.s32 0, %v672
  %v674 = vrot.slane %v669, %v673
  %v675 = vlaneseq
  %v676 = vshrl.u32 %v675, 7
  %v677 = vsub.s32 1, %v676
  %v678 = vrot.slane %v669, %v677
  %v679 = vlaneseq
  %v680 = vshrl.u32 %v679, 7
  %v681 = vsub.s32 2, %v680
  %v682 = vrot.slane %v669, %v681
  %v683 = vlaneseq
  %v684 = vshrl.u32 %v683, 7
  %v685 = vsub.s32 3, %v684
  %v686 = vrot.slane %v669, %v685
  %v691 = vmul.f32 %v665, %v674
  %v692 = vmul.f32 %v666, %v678
  %v693 = vmul.f32 %v667, %v682
  %v694 = vmul.f32 %v668, %v686
  %v695 = vld [vmem:[%s7] sm:$0xf]
  %v696 = vmul.f32 %v641, %v691
  %v697 = vmul.f32 %v642, %v692
  %v698 = vmul.f32 %v643, %v693
  %v699 = vmul.f32 %v644, %v694
  %v704 = vcombine.low %v696, %v697
  %v705 = vcombine.low %v698, %v699
  %v707 = vunpack.c.l.s4 1966171168
  %v708 = vunpack.c.0.s8 %v707
  %v709 = vlaneseq
  %v710 = vshrl.u32 %v709, 7
  %v711 = vsub.s32 %v708, %v710
  %v712 = vrot.slane %v704, %v711
  %v714 = vunpack.c.l.s4 1966171168
  %v715 = vunpack.c.0.s8 %v714
  %v716 = vlaneseq
  %v717 = vshrl.u32 %v716, 7
  %v718 = vsub.s32 %v715, %v717
  %v719 = vrot.slane %v705, %v718
  %v720 = vcombine.low %v712, %v719
  %v722 = vunpack.c.l.s4 1966171168
  %v723 = vunpack.c.0.s8 %v722
  %v724 = vlaneseq
  %v725 = vshrl.u32 %v724, 7
  %v726 = vsub.s32 %v723, %v725
  %v727 = vrot.slane %v720, %v726
  %v729 = vsub.f32 %v695, %v727
  %v730 = vlaneseq
  %v731 = vshrl.u32 %v730, 7
  %v732 = vsub.s32 0, %v731
  %v733 = vrot.slane %v691, %v732
  %v734 = vlaneseq
  %v735 = vshrl.u32 %v734, 7
  %v736 = vsub.s32 0, %v735
  %v737 = vrot.slane %v692, %v736
  %v738 = vlaneseq
  %v739 = vshrl.u32 %v738, 7
  %v740 = vsub.s32 0, %v739
  %v741 = vrot.slane %v693, %v740
  %v742 = vlaneseq
  %v743 = vshrl.u32 %v742, 7
  %v744 = vsub.s32 0, %v743
  %v745 = vrot.slane %v694, %v744
  %v746 = vmul.f32 %v533, %v733
  %v747 = vmul.f32 %v535, %v737
  %v748 = vmul.f32 %v574, %v741
  %v749 = vmul.f32 %v576, %v745
  %v751 = vlaneseq
  %v752 = vshrl.u32 %v751, 7
  %v753 = vsub.s32 0, %v752
  %v754 = vrot.slane %v729, %v753
  %v755 = vlaneseq
  %v756 = vshrl.u32 %v755, 7
  %v757 = vsub.s32 1, %v756
  %v758 = vrot.slane %v729, %v757
  %v759 = vlaneseq
  %v760 = vshrl.u32 %v759, 7
  %v761 = vsub.s32 2, %v760
  %v762 = vrot.slane %v729, %v761
  %v763 = vlaneseq
  %v764 = vshrl.u32 %v763, 7
  %v765 = vsub.s32 3, %v764
  %v766 = vrot.slane %v729, %v765
  %v771 = vadd.f32 %v746, %v754
  %v772 = vadd.f32 %v747, %v758
  %v773 = vadd.f32 %v748, %v762
  %v774 = vadd.f32 %v749, %v766
  %v775 = vmax.f32 %v771, 0.0
  %v776 = vmax.f32 %v772, 0.0
  %v777 = vmax.f32 %v773, 0.0
  %v778 = vmax.f32 %v774, 0.0
  %v779 = vpack.c.bf16 %v775, %v775
  %v780 = vpack.c.bf16 %v776, %v776
  %v781 = vpack.c.bf16 %v777, %v777
  %v782 = vpack.c.bf16 %v778, %v778
  %v787 = vcombine.low %v779, %v780
  %v788 = vcombine.low %v781, %v782
  %v790 = vunpack.c.l.s4 1966171168
  %v791 = vunpack.c.0.s8 %v790
  %v792 = vlaneseq
  %v793 = vshrl.u32 %v792, 7
  %v794 = vsub.s32 %v791, %v793
  %v795 = vrot.slane %v787, %v794
  %v797 = vunpack.c.l.s4 1966171168
  %v798 = vunpack.c.0.s8 %v797
  %v799 = vlaneseq
  %v800 = vshrl.u32 %v799, 7
  %v801 = vsub.s32 %v798, %v800
  %v802 = vrot.slane %v788, %v801
  %v803 = vcombine.low %v795, %v802
  %v805 = vunpack.c.l.s4 1966171168
  %v806 = vunpack.c.0.s8 %v805
  %v807 = vlaneseq
  %v808 = vshrl.u32 %v807, 7
  %v809 = vsub.s32 %v806, %v808
  %v810 = vrot.slane %v803, %v809
  %812 = vst [vmem:[%s9] sm:$0xf] %v810
  // Predicated region
  $region34: #{cycle_generator_forward.10} parent=0 // pred_check
    _
  $region35: #{cycle_generator_forward.10} parent=0 // pred_check_branch
    %814 = sbr.rel (0) target = $region37
  $region36: #{cycle_generator_forward.10} parent=0 // pred_region
    _
  $region37: #{cycle_generator_forward.10} parent=0 // pred_fallthru
    _
  // Predicated region
  $region38: #{cycle_generator_forward.10} parent=0 // pred_check
    _
  $region39: #{cycle_generator_forward.10} parent=0 // pred_check_branch
    %816 = sbr.rel (0) target = $region41
  $region40: #{cycle_generator_forward.10} parent=0 // pred_region
    _
  $region41: #{cycle_generator_forward.10} parent=0 // pred_fallthru
    _
  // Predicated region
  $region42: #{cycle_generator_forward.10} parent=0 // pred_check
    _
  $region43: #{cycle_generator_forward.10} parent=0 // pred_check_branch
    %818 = sbr.rel (0) target = $region45
  $region44: #{cycle_generator_forward.10} parent=0 // pred_region
    _
  $region45: #{cycle_generator_forward.10} parent=0 // pred_fallthru
    _
  // Predicated region
  $region46: #{cycle_generator_forward.10} parent=0 // pred_check
    _
  $region47: #{cycle_generator_forward.10} parent=0 // pred_check_branch
    %820 = sbr.rel (0) target = $region49
  $region48: #{cycle_generator_forward.10} parent=0 // pred_region
    _
  $region49: #{cycle_generator_forward.10} parent=0 // pred_fallthru
    _

// kernel: cycle_generator_forward.11
$region0: #{cycle_generator_forward.11}
  #allocation0 [shape = 'u32[]', space=smem, size = 0x4, offset = 0x4, fixed_abs, tag = 'smem constant byte address 0x4 - core index']
  #allocation1 [shape = 'u32[144,128]{1,0:T(1,128)}', space=vmem, size = 0x12000, scoped, tag = 'internal scratch']
  %s0 = inlined_call_operand.vmem [shape: bf16[4,16,128], index: 0, kind: input, shape index: {}]
  %s1 = inlined_call_operand.vmem [shape: bf16[4,128,32], index: 1, kind: input, shape index: {}]
  %s2 = inlined_call_operand.vmem [shape: f32[16,1], index: 2, kind: input, shape index: {}]
  %s3 = inlined_call_operand.vmem [shape: f32[16,1], index: 3, kind: input, shape index: {}]
  %s4 = inlined_call_operand.vmem [shape: bf16[16,128], index: 4, kind: output, shape index: {}]
  %s5 = sld [smem:[#allocation0]]
  $region26: #{cycle_generator_forward.11} parent=0
    _
  %s7 = ssub.s32 1, %s5
  %s8 = scalar_select 0, %s7, %s5
  // Predicated region
  $region2: #{cycle_generator_forward.11} parent=0 // pred_check
    _
  $region3: #{cycle_generator_forward.11} parent=0 // pred_check_branch
    %10 = sbr.rel (0) target = $region5
  $region4: #{cycle_generator_forward.11} parent=0 // pred_region
    _
  $region5: #{cycle_generator_forward.11} parent=0 // pred_fallthru
    _
  // Predicated region
  $region6: #{cycle_generator_forward.11} parent=0 // pred_check
    _
  $region7: #{cycle_generator_forward.11} parent=0 // pred_check_branch
    %12 = sbr.rel (0) target = $region9
  $region8: #{cycle_generator_forward.11} parent=0 // pred_region
    _
  $region9: #{cycle_generator_forward.11} parent=0 // pred_fallthru
    _
  // Predicated region
  $region10: #{cycle_generator_forward.11} parent=0 // pred_check
    _
  $region11: #{cycle_generator_forward.11} parent=0 // pred_check_branch
    %14 = sbr.rel (0) target = $region13
  $region12: #{cycle_generator_forward.11} parent=0 // pred_region
    _
  $region13: #{cycle_generator_forward.11} parent=0 // pred_fallthru
    _
  // Predicated region
  $region14: #{cycle_generator_forward.11} parent=0 // pred_check
    _
  $region15: #{cycle_generator_forward.11} parent=0 // pred_check_branch
    %16 = sbr.rel (0) target = $region17
  $region16: #{cycle_generator_forward.11} parent=0 // pred_region
    _
  $region17: #{cycle_generator_forward.11} parent=0 // pred_fallthru
    _
  %v18 = vld [vmem:[%s0] sm:$0xf]
  %v19 = vld [vmem:[%s0 + $0x4] sm:$0xf]
  %v20 = vld [vmem:[%s1] sm:$0xf]
  %v21 = vld [vmem:[%s1 + $0x4] sm:$0xf]
  %v22 = vld [vmem:[%s1 + $0x8] sm:$0xf]
  %v23 = vld [vmem:[%s1 + $0xc] sm:$0xf]
  %v24 = vld [vmem:[%s1 + $0x10] sm:$0xf]
  %v25 = vld [vmem:[%s1 + $0x14] sm:$0xf]
  %v26 = vld [vmem:[%s1 + $0x18] sm:$0xf]
  %v27 = vld [vmem:[%s1 + $0x1c] sm:$0xf]
  %v28 = vld [vmem:[%s1 + $0x20] sm:$0xf]
  %v29 = vld [vmem:[%s1 + $0x24] sm:$0xf]
  %v30 = vld [vmem:[%s1 + $0x28] sm:$0xf]
  %v31 = vld [vmem:[%s1 + $0x2c] sm:$0xf]
  %v32 = vld [vmem:[%s1 + $0x30] sm:$0xf]
  %v33 = vld [vmem:[%s1 + $0x34] sm:$0xf]
  %v34 = vld [vmem:[%s1 + $0x38] sm:$0xf]
  %v35 = vld [vmem:[%s1 + $0x3c] sm:$0xf]
  %v38 = vunpack.c.l.b16 %v18
  %v39 = vunpack.c.l.b16 %v19
  %v40 = vpack.c.b16 %v39, %v38
  %v58 = vunpack.c.l.b16 %v20
  %v59 = vunpack.c.l.b16 %v21
  %v60 = vunpack.c.l.b16 %v22
  %v61 = vunpack.c.l.b16 %v23
  %v62 = vunpack.c.l.b16 %v24
  %v63 = vunpack.c.l.b16 %v25
  %v64 = vunpack.c.l.b16 %v26
  %v65 = vunpack.c.l.b16 %v27
  %v66 = vunpack.c.l.b16 %v28
  %v67 = vunpack.c.l.b16 %v29
  %v68 = vunpack.c.l.b16 %v30
  %v69 = vunpack.c.l.b16 %v31
  %v70 = vunpack.c.l.b16 %v32
  %v71 = vunpack.c.l.b16 %v33
  %v72 = vunpack.c.l.b16 %v34
  %v73 = vunpack.c.l.b16 %v35
  %v74 = vpack.c.b16 %v59, %v58
  %v75 = vpack.c.b16 %v61, %v60
  %v76 = vpack.c.b16 %v63, %v62
  %v77 = vpack.c.b16 %v65, %v64
  %v78 = vpack.c.b16 %v67, %v66
  %v79 = vpack.c.b16 %v69, %v68
  %v80 = vpack.c.b16 %v71, %v70
  %v81 = vpack.c.b16 %v73, %v72
  %90 = vmatprep.subr.bf16.mxu0 0
  %91 = vmatpush1.bf16.msra.mxu0 %v81
  %92 = vmatprep.subr.bf16.mxu0 0
  %93 = vmatpush1.bf16.msra.mxu0 %v80
  %94 = vmatprep.subr.bf16.mxu0 0
  %95 = vmatpush1.bf16.msra.mxu0 %v79
  %96 = vmatprep.subr.bf16.mxu0 0
  %97 = vmatpush1.bf16.msra.mxu0 %v78
  %98 = vmatprep.subr.bf16.mxu0 0
  %99 = vmatpush1.bf16.msra.mxu0 %v77
  %100 = vmatprep.subr.bf16.mxu0 0
  %101 = vmatpush1.bf16.msra.mxu0 %v76
  %102 = vmatprep.subr.bf16.mxu0 0
  %103 = vmatpush1.bf16.msra.mxu0 %v75
  %104 = vmatprep.subr.bf16.mxu0 0
  %105 = vmatpush1.bf16.msra.mxu0 %v74
  %106 = vmatprep.subr.bf16.mxu0 0
  %107 = vmatpush2.bf16.msra.mxu0 0
  %108 = vmatprep.subr.bf16.mxu0 0
  %109 = vmatpush2.bf16.msra.mxu0 0
  %110 = vmatprep.subr.bf16.mxu0 0
  %111 = vmatpush2.bf16.msra.mxu0 0
  %112 = vmatprep.subr.bf16.mxu0 0
  %113 = vmatpush2.bf16.msra.mxu0 0
  %114 = vmatprep.subr.bf16.mxu0 0
  %115 = vmatpush2.bf16.msra.mxu0 0
  %116 = vmatprep.subr.bf16.mxu0 0
  %117 = vmatpush2.bf16.msra.mxu0 0
  %118 = vmatprep.subr.bf16.mxu0 0
  %119 = vmatpush2.bf16.msra.mxu0 0
  %120 = vmatprep.subr.bf16.mxu0 0
  %121 = vmatpush2.bf16.msra.mxu0 0
  %122 = vmatprep.mubr.bf16.mxu0 0
  %123 = vmatmul.mubr.bf16.gmra.mxu0 %v40
  %v124 = vpop.f32.mrf.mxu0
  %v125 = vadd.f32 0.0, %v124
  %v126 = vpop.f32.mrf.mxu0
  %v127 = vpop.f32.mrf.mxu0
  %v128 = vadd.f32 0.0, %v127
  %v129 = vpop.f32.mrf.mxu0
  %130 = vdwg.mxu0
  %s131 = scalar_lea.vmem %s0, 8
  %v132 = vld [vmem:[%s131] sm:$0xf]
  %v133 = vld [vmem:[%s131 + $0x4] sm:$0xf]
  %s134 = scalar_lea.vmem %s1, 64
  %v135 = vld [vmem:[%s134] sm:$0xf]
  %v136 = vld [vmem:[%s134 + $0x4] sm:$0xf]
  %v137 = vld [vmem:[%s134 + $0x8] sm:$0xf]
  %v138 = vld [vmem:[%s134 + $0xc] sm:$0xf]
  %v139 = vld [vmem:[%s134 + $0x10] sm:$0xf]
  %v140 = vld [vmem:[%s134 + $0x14] sm:$0xf]
  %v141 = vld [vmem:[%s134 + $0x18] sm:$0xf]
  %v142 = vld [vmem:[%s134 + $0x1c] sm:$0xf]
  %v143 = vld [vmem:[%s134 + $0x20] sm:$0xf]
  %v144 = vld [vmem:[%s134 + $0x24] sm:$0xf]
  %v145 = vld [vmem:[%s134 + $0x28] sm:$0xf]
  %v146 = vld [vmem:[%s134 + $0x2c] sm:$0xf]
  %v147 = vld [vmem:[%s134 + $0x30] sm:$0xf]
  %v148 = vld [vmem:[%s134 + $0x34] sm:$0xf]
  %v149 = vld [vmem:[%s134 + $0x38] sm:$0xf]
  %v150 = vld [vmem:[%s134 + $0x3c] sm:$0xf]
  %v153 = vunpack.c.l.b16 %v132
  %v154 = vunpack.c.l.b16 %v133
  %v155 = vpack.c.b16 %v154, %v153
  %v173 = vunpack.c.l.b16 %v135
  %v174 = vunpack.c.l.b16 %v136
  %v175 = vunpack.c.l.b16 %v137
  %v176 = vunpack.c.l.b16 %v138
  %v177 = vunpack.c.l.b16 %v139
  %v178 = vunpack.c.l.b16 %v140
  %v179 = vunpack.c.l.b16 %v141
  %v180 = vunpack.c.l.b16 %v142
  %v181 = vunpack.c.l.b16 %v143
  %v182 = vunpack.c.l.b16 %v144
  %v183 = vunpack.c.l.b16 %v145
  %v184 = vunpack.c.l.b16 %v146
  %v185 = vunpack.c.l.b16 %v147
  %v186 = vunpack.c.l.b16 %v148
  %v187 = vunpack.c.l.b16 %v149
  %v188 = vunpack.c.l.b16 %v150
  %v189 = vpack.c.b16 %v174, %v173
  %v190 = vpack.c.b16 %v176, %v175
  %v191 = vpack.c.b16 %v178, %v177
  %v192 = vpack.c.b16 %v180, %v179
  %v193 = vpack.c.b16 %v182, %v181
  %v194 = vpack.c.b16 %v184, %v183
  %v195 = vpack.c.b16 %v186, %v185
  %v196 = vpack.c.b16 %v188, %v187
  %205 = vmatprep.subr.bf16.mxu0 0
  %206 = vmatpush1.bf16.msra.mxu0 %v196
  %207 = vmatprep.subr.bf16.mxu0 0
  %208 = vmatpush1.bf16.msra.mxu0 %v195
  %209 = vmatprep.subr.bf16.mxu0 0
  %210 = vmatpush1.bf16.msra.mxu0 %v194
  %211 = vmatprep.subr.bf16.mxu0 0
  %212 = vmatpush1.bf16.msra.mxu0 %v193
  %213 = vmatprep.subr.bf16.mxu0 0
  %214 = vmatpush1.bf16.msra.mxu0 %v192
  %215 = vmatprep.subr.bf16.mxu0 0
  %216 = vmatpush1.bf16.msra.mxu0 %v191
  %217 = vmatprep.subr.bf16.mxu0 0
  %218 = vmatpush1.bf16.msra.mxu0 %v190
  %219 = vmatprep.subr.bf16.mxu0 0
  %220 = vmatpush1.bf16.msra.mxu0 %v189
  %221 = vmatprep.subr.bf16.mxu0 0
  %222 = vmatpush2.bf16.msra.mxu0 0
  %223 = vmatprep.subr.bf16.mxu0 0
  %224 = vmatpush2.bf16.msra.mxu0 0
  %225 = vmatprep.subr.bf16.mxu0 0
  %226 = vmatpush2.bf16.msra.mxu0 0
  %227 = vmatprep.subr.bf16.mxu0 0
  %228 = vmatpush2.bf16.msra.mxu0 0
  %229 = vmatprep.subr.bf16.mxu0 0
  %230 = vmatpush2.bf16.msra.mxu0 0
  %231 = vmatprep.subr.bf16.mxu0 0
  %232 = vmatpush2.bf16.msra.mxu0 0
  %233 = vmatprep.subr.bf16.mxu0 0
  %234 = vmatpush2.bf16.msra.mxu0 0
  %235 = vmatprep.subr.bf16.mxu0 0
  %236 = vmatpush2.bf16.msra.mxu0 0
  %237 = vmatprep.mubr.bf16.mxu0 0
  %238 = vmatmul.mubr.bf16.gmra.mxu0 %v155
  %v239 = vpop.f32.mrf.mxu0
  %v240 = vadd.f32 0.0, %v239
  %v241 = vpop.f32.mrf.mxu0
  %v242 = vpop.f32.mrf.mxu0
  %v243 = vadd.f32 0.0, %v242
  %v244 = vpop.f32.mrf.mxu0
  %245 = vdwg.mxu0
  %s246 = scalar_lea.vmem %s0, 16
  %v247 = vld [vmem:[%s246] sm:$0xf]
  %v248 = vld [vmem:[%s246 + $0x4] sm:$0xf]
  %s249 = scalar_lea.vmem %s1, 128
  %v250 = vld [vmem:[%s249] sm:$0xf]
  %v251 = vld [vmem:[%s249 + $0x4] sm:$0xf]
  %v252 = vld [vmem:[%s249 + $0x8] sm:$0xf]
  %v253 = vld [vmem:[%s249 + $0xc] sm:$0xf]
  %v254 = vld [vmem:[%s249 + $0x10] sm:$0xf]
  %v255 = vld [vmem:[%s249 + $0x14] sm:$0xf]
  %v256 = vld [vmem:[%s249 + $0x18] sm:$0xf]
  %v257 = vld [vmem:[%s249 + $0x1c] sm:$0xf]
  %v258 = vld [vmem:[%s249 + $0x20] sm:$0xf]
  %v259 = vld [vmem:[%s249 + $0x24] sm:$0xf]
  %v260 = vld [vmem:[%s249 + $0x28] sm:$0xf]
  %v261 = vld [vmem:[%s249 + $0x2c] sm:$0xf]
  %v262 = vld [vmem:[%s249 + $0x30] sm:$0xf]
  %v263 = vld [vmem:[%s249 + $0x34] sm:$0xf]
  %v264 = vld [vmem:[%s249 + $0x38] sm:$0xf]
  %v265 = vld [vmem:[%s249 + $0x3c] sm:$0xf]
  %v268 = vunpack.c.l.b16 %v247
  %v269 = vunpack.c.l.b16 %v248
  %v270 = vpack.c.b16 %v269, %v268
  %v288 = vunpack.c.l.b16 %v250
  %v289 = vunpack.c.l.b16 %v251
  %v290 = vunpack.c.l.b16 %v252
  %v291 = vunpack.c.l.b16 %v253
  %v292 = vunpack.c.l.b16 %v254
  %v293 = vunpack.c.l.b16 %v255
  %v294 = vunpack.c.l.b16 %v256
  %v295 = vunpack.c.l.b16 %v257
  %v296 = vunpack.c.l.b16 %v258
  %v297 = vunpack.c.l.b16 %v259
  %v298 = vunpack.c.l.b16 %v260
  %v299 = vunpack.c.l.b16 %v261
  %v300 = vunpack.c.l.b16 %v262
  %v301 = vunpack.c.l.b16 %v263
  %v302 = vunpack.c.l.b16 %v264
  %v303 = vunpack.c.l.b16 %v265
  %v304 = vpack.c.b16 %v289, %v288
  %v305 = vpack.c.b16 %v291, %v290
  %v306 = vpack.c.b16 %v293, %v292
  %v307 = vpack.c.b16 %v295, %v294
  %v308 = vpack.c.b16 %v297, %v296
  %v309 = vpack.c.b16 %v299, %v298
  %v310 = vpack.c.b16 %v301, %v300
  %v311 = vpack.c.b16 %v303, %v302
  %320 = vmatprep.subr.bf16.mxu0 0
  %321 = vmatpush1.bf16.msra.mxu0 %v311
  %322 = vmatprep.subr.bf16.mxu0 0
  %323 = vmatpush1.bf16.msra.mxu0 %v310
  %324 = vmatprep.subr.bf16.mxu0 0
  %325 = vmatpush1.bf16.msra.mxu0 %v309
  %326 = vmatprep.subr.bf16.mxu0 0
  %327 = vmatpush1.bf16.msra.mxu0 %v308
  %328 = vmatprep.subr.bf16.mxu0 0
  %329 = vmatpush1.bf16.msra.mxu0 %v307
  %330 = vmatprep.subr.bf16.mxu0 0
  %331 = vmatpush1.bf16.msra.mxu0 %v306
  %332 = vmatprep.subr.bf16.mxu0 0
  %333 = vmatpush1.bf16.msra.mxu0 %v305
  %334 = vmatprep.subr.bf16.mxu0 0
  %335 = vmatpush1.bf16.msra.mxu0 %v304
  %336 = vmatprep.subr.bf16.mxu0 0
  %337 = vmatpush2.bf16.msra.mxu0 0
  %338 = vmatprep.subr.bf16.mxu0 0
  %339 = vmatpush2.bf16.msra.mxu0 0
  %340 = vmatprep.subr.bf16.mxu0 0
  %341 = vmatpush2.bf16.msra.mxu0 0
  %342 = vmatprep.subr.bf16.mxu0 0
  %343 = vmatpush2.bf16.msra.mxu0 0
  %344 = vmatprep.subr.bf16.mxu0 0
  %345 = vmatpush2.bf16.msra.mxu0 0
  %346 = vmatprep.subr.bf16.mxu0 0
  %347 = vmatpush2.bf16.msra.mxu0 0
  %348 = vmatprep.subr.bf16.mxu0 0
  %349 = vmatpush2.bf16.msra.mxu0 0
  %350 = vmatprep.subr.bf16.mxu0 0
  %351 = vmatpush2.bf16.msra.mxu0 0
  %352 = vmatprep.mubr.bf16.mxu0 0
  %353 = vmatmul.mubr.bf16.gmra.mxu0 %v270
  %v354 = vpop.f32.mrf.mxu0
  %v355 = vadd.f32 0.0, %v354
  %v356 = vpop.f32.mrf.mxu0
  %v357 = vpop.f32.mrf.mxu0
  %v358 = vadd.f32 0.0, %v357
  %v359 = vpop.f32.mrf.mxu0
  %360 = vdwg.mxu0
  %s361 = scalar_lea.vmem %s0, 24
  %v362 = vld [vmem:[%s361] sm:$0xf]
  %v363 = vld [vmem:[%s361 + $0x4] sm:$0xf]
  %s364 = scalar_lea.vmem %s1, 192
  %v365 = vld [vmem:[%s364] sm:$0xf]
  %v366 = vld [vmem:[%s364 + $0x4] sm:$0xf]
  %v367 = vld [vmem:[%s364 + $0x8] sm:$0xf]
  %v368 = vld [vmem:[%s364 + $0xc] sm:$0xf]
  %v369 = vld [vmem:[%s364 + $0x10] sm:$0xf]
  %v370 = vld [vmem:[%s364 + $0x14] sm:$0xf]
  %v371 = vld [vmem:[%s364 + $0x18] sm:$0xf]
  %v372 = vld [vmem:[%s364 + $0x1c] sm:$0xf]
  %v373 = vld [vmem:[%s364 + $0x20] sm:$0xf]
  %v374 = vld [vmem:[%s364 + $0x24] sm:$0xf]
  %v375 = vld [vmem:[%s364 + $0x28] sm:$0xf]
  %v376 = vld [vmem:[%s364 + $0x2c] sm:$0xf]
  %v377 = vld [vmem:[%s364 + $0x30] sm:$0xf]
  %v378 = vld [vmem:[%s364 + $0x34] sm:$0xf]
  %v379 = vld [vmem:[%s364 + $0x38] sm:$0xf]
  %v380 = vld [vmem:[%s364 + $0x3c] sm:$0xf]
  %v383 = vunpack.c.l.b16 %v362
  %v384 = vunpack.c.l.b16 %v363
  %v385 = vpack.c.b16 %v384, %v383
  %v403 = vunpack.c.l.b16 %v365
  %v404 = vunpack.c.l.b16 %v366
  %v405 = vunpack.c.l.b16 %v367
  %v406 = vunpack.c.l.b16 %v368
  %v407 = vunpack.c.l.b16 %v369
  %v408 = vunpack.c.l.b16 %v370
  %v409 = vunpack.c.l.b16 %v371
  %v410 = vunpack.c.l.b16 %v372
  %v411 = vunpack.c.l.b16 %v373
  %v412 = vunpack.c.l.b16 %v374
  %v413 = vunpack.c.l.b16 %v375
  %v414 = vunpack.c.l.b16 %v376
  %v415 = vunpack.c.l.b16 %v377
  %v416 = vunpack.c.l.b16 %v378
  %v417 = vunpack.c.l.b16 %v379
  %v418 = vunpack.c.l.b16 %v380
  %v419 = vpack.c.b16 %v404, %v403
  %v420 = vpack.c.b16 %v406, %v405
  %v421 = vpack.c.b16 %v408, %v407
  %v422 = vpack.c.b16 %v410, %v409
  %v423 = vpack.c.b16 %v412, %v411
  %v424 = vpack.c.b16 %v414, %v413
  %v425 = vpack.c.b16 %v416, %v415
  %v426 = vpack.c.b16 %v418, %v417
  %435 = vmatprep.subr.bf16.mxu0 0
  %436 = vmatpush1.bf16.msra.mxu0 %v426
  %437 = vmatprep.subr.bf16.mxu0 0
  %438 = vmatpush1.bf16.msra.mxu0 %v425
  %439 = vmatprep.subr.bf16.mxu0 0
  %440 = vmatpush1.bf16.msra.mxu0 %v424
  %441 = vmatprep.subr.bf16.mxu0 0
  %442 = vmatpush1.bf16.msra.mxu0 %v423
  %443 = vmatprep.subr.bf16.mxu0 0
  %444 = vmatpush1.bf16.msra.mxu0 %v422
  %445 = vmatprep.subr.bf16.mxu0 0
  %446 = vmatpush1.bf16.msra.mxu0 %v421
  %447 = vmatprep.subr.bf16.mxu0 0
  %448 = vmatpush1.bf16.msra.mxu0 %v420
  %449 = vmatprep.subr.bf16.mxu0 0
  %450 = vmatpush1.bf16.msra.mxu0 %v419
  %451 = vmatprep.subr.bf16.mxu0 0
  %452 = vmatpush2.bf16.msra.mxu0 0
  %453 = vmatprep.subr.bf16.mxu0 0
  %454 = vmatpush2.bf16.msra.mxu0 0
  %455 = vmatprep.subr.bf16.mxu0 0
  %456 = vmatpush2.bf16.msra.mxu0 0
  %457 = vmatprep.subr.bf16.mxu0 0
  %458 = vmatpush2.bf16.msra.mxu0 0
  %459 = vmatprep.subr.bf16.mxu0 0
  %460 = vmatpush2.bf16.msra.mxu0 0
  %461 = vmatprep.subr.bf16.mxu0 0
  %462 = vmatpush2.bf16.msra.mxu0 0
  %463 = vmatprep.subr.bf16.mxu0 0
  %464 = vmatpush2.bf16.msra.mxu0 0
  %465 = vmatprep.subr.bf16.mxu0 0
  %466 = vmatpush2.bf16.msra.mxu0 0
  %467 = vmatprep.mubr.bf16.mxu0 0
  %468 = vmatmul.mubr.bf16.gmra.mxu0 %v385
  %v469 = vpop.f32.mrf.mxu0
  %v470 = vadd.f32 0.0, %v469
  %v471 = vpop.f32.mrf.mxu0
  %v472 = vpop.f32.mrf.mxu0
  %v473 = vadd.f32 0.0, %v472
  %v474 = vpop.f32.mrf.mxu0
  %475 = vdwg.mxu0
  %478 = vrot.lane.b32.xlu0 %v240, 32
  %v479 = vpop.permute.xlu0 %478
  %480 = vrot.lane.b32.xlu0 %v243, 32
  %v481 = vpop.permute.xlu0 %480
  %486 = vrot.lane.b32.xlu0 %v355, 64
  %v487 = vpop.permute.xlu0 %486
  %488 = vrot.lane.b32.xlu0 %v358, 64
  %v489 = vpop.permute.xlu0 %488
  %494 = vrot.lane.b32.xlu0 %v470, 96
  %v495 = vpop.permute.xlu0 %494
  %496 = vrot.lane.b32.xlu0 %v473, 96
  %v497 = vpop.permute.xlu0 %496
  %vm500 = vcmask 261120
  %v501 = vsel %vm500, %v125, %v479
  %v502 = vsel %vm500, %v128, %v481
  %vm503 = vcmask 523264
  %v504 = vsel %vm503, %v501, %v487
  %v505 = vsel %vm503, %v502, %v489
  %vm506 = vcmask 785408
  %v507 = vsel %vm506, %v504, %v495
  %v508 = vsel %vm506, %v505, %v497
  %509 = vadd.xlane.f32.xlu0 %v507
  %v510 = vpop.xlane.xlu0 %509
  %511 = vadd.xlane.f32.xlu0 %v508
  %v512 = vpop.xlane.xlu0 %511
  %v513 = vmul.f32 %v507, %v507
  %v514 = vmul.f32 %v508, %v508
  %515 = vadd.xlane.f32.xlu0 %v513
  %v516 = vpop.xlane.xlu0 %515
  %517 = vadd.xlane.f32.xlu0 %v514
  %v518 = vpop.xlane.xlu0 %517
  %v519 = vmul.f32 %v510, 0.0078125
  %v520 = vmul.f32 %v512, 0.0078125
  %v521 = vmul.f32 %v516, 0.0078125
  %v522 = vmul.f32 %v518, 0.0078125
  %v523 = vmul.f32 %v519, %v519
  %v524 = vmul.f32 %v520, %v520
  %v525 = vsub.f32 %v521, %v523
  %v526 = vsub.f32 %v522, %v524
  %v527 = vmax.f32 %v525, 0.0
  %v528 = vmax.f32 %v526, 0.0
  %v529 = vadd.f32 %v527, 1e-05
  %v530 = vadd.f32 %v528, 1e-05
  %v531 = vrsqrt.pop %v529
  %v532 = vrsqrt.pop %v530
  %v533 = vld [vmem:[%s2] sm:$0xff]
  %v534 = vld [vmem:[%s2 + $0x8] sm:$0xff]
  %v535 = vmul.f32 %v531, %v533
  %v536 = vmul.f32 %v532, %v534
  %v537 = vld [vmem:[%s3] sm:$0xff]
  %v538 = vld [vmem:[%s3 + $0x8] sm:$0xff]
  %v539 = vmul.f32 %v519, %v535
  %v540 = vmul.f32 %v520, %v536
  %v541 = vsub.f32 %v537, %v539
  %v542 = vsub.f32 %v538, %v540
  %544 = vset.pattern.permute.xlu0 0
  %545 = vperm.xlu0 %544, %v535
  %v546 = vpop.permute.xlu0 %545
  %549 = vset.pattern.permute.xlu0 0
  %550 = vperm.xlu0 %549, %v536
  %v551 = vpop.permute.xlu0 %550
  %v553 = vmul.f32 %v507, %v546
  %v554 = vmul.f32 %v508, %v551
  %556 = vset.pattern.permute.xlu0 0
  %557 = vperm.xlu0 %556, %v541
  %v558 = vpop.permute.xlu0 %557
  %561 = vset.pattern.permute.xlu0 0
  %562 = vperm.xlu0 %561, %v542
  %v563 = vpop.permute.xlu0 %562
  %v565 = vadd.f32 %v553, %v558
  %v566 = vadd.f32 %v554, %v563
  %v567 = vmax.f32 %v565, 0.0
  %v568 = vmax.f32 %v566, 0.0
  %v569 = vpack.c.bf16 %v568, %v567
  %v571 = vunpack.c.l.b16 %v569
  %v572 = vunpack.c.h.b16 %v569
  %v573 = vpack.c.b16 %v571, %v571
  %v574 = vpack.c.b16 %v572, %v572
  %577 = vst [vmem:[%s4] sm:$0xf] %v573
  %578 = vst [vmem:[%s4 + $0x4] sm:$0xf] %v574
  // Predicated region
  $region18: #{cycle_generator_forward.11} parent=0 // pred_check
    _
  $region19: #{cycle_generator_forward.11} parent=0 // pred_check_branch
    %580 = sbr.rel (0) target = $region21
  $region20: #{cycle_generator_forward.11} parent=0 // pred_region
    _
  $region21: #{cycle_generator_forward.11} parent=0 // pred_fallthru
    _
  // Predicated region
  $region22: #{cycle_generator_forward.11} parent=0 // pred_check
    _
  $region23: #{cycle_generator_forward.11} parent=0 // pred_check_branch
    %582 = sbr.rel (0) target = $region25
  $region24: #{cycle_generator_forward.11} parent=0 // pred_region
    _
  $region25: #{cycle_generator_forward.11} parent=0 // pred_fallthru
    _

// kernel: cycle_generator_forward.12
$region0: #{cycle_generator_forward.12}
  #allocation0 [shape = 'u32[]', space=smem, size = 0x4, offset = 0x4, fixed_abs, tag = 'smem constant byte address 0x4 - core index']
  #allocation1 [shape = 'u32[144,128]{1,0:T(1,128)}', space=vmem, size = 0x12000, scoped, tag = 'internal scratch']
  %s0 = inlined_call_operand.vmem [shape: bf16[4,8,64], index: 0, kind: input, shape index: {}]
  %s1 = inlined_call_operand.vmem [shape: bf16[4,64,128], index: 1, kind: input, shape index: {}]
  %s2 = inlined_call_operand.vmem [shape: f32[8,1], index: 2, kind: input, shape index: {}]
  %s3 = inlined_call_operand.vmem [shape: f32[8,1], index: 3, kind: input, shape index: {}]
  %s4 = inlined_call_operand.vmem [shape: bf16[8,512], index: 4, kind: output, shape index: {}]
  %s5 = sld [smem:[#allocation0]]
  $region26: #{cycle_generator_forward.12} parent=0
    _
  %s7 = ssub.s32 1, %s5
  %s8 = scalar_select 0, %s7, %s5
  // Predicated region
  $region2: #{cycle_generator_forward.12} parent=0 // pred_check
    _
  $region3: #{cycle_generator_forward.12} parent=0 // pred_check_branch
    %10 = sbr.rel (0) target = $region5
  $region4: #{cycle_generator_forward.12} parent=0 // pred_region
    _
  $region5: #{cycle_generator_forward.12} parent=0 // pred_fallthru
    _
  // Predicated region
  $region6: #{cycle_generator_forward.12} parent=0 // pred_check
    _
  $region7: #{cycle_generator_forward.12} parent=0 // pred_check_branch
    %12 = sbr.rel (0) target = $region9
  $region8: #{cycle_generator_forward.12} parent=0 // pred_region
    _
  $region9: #{cycle_generator_forward.12} parent=0 // pred_fallthru
    _
  // Predicated region
  $region10: #{cycle_generator_forward.12} parent=0 // pred_check
    _
  $region11: #{cycle_generator_forward.12} parent=0 // pred_check_branch
    %14 = sbr.rel (0) target = $region13
  $region12: #{cycle_generator_forward.12} parent=0 // pred_region
    _
  $region13: #{cycle_generator_forward.12} parent=0 // pred_fallthru
    _
  // Predicated region
  $region14: #{cycle_generator_forward.12} parent=0 // pred_check
    _
  $region15: #{cycle_generator_forward.12} parent=0 // pred_check_branch
    %16 = sbr.rel (0) target = $region17
  $region16: #{cycle_generator_forward.12} parent=0 // pred_region
    _
  $region17: #{cycle_generator_forward.12} parent=0 // pred_fallthru
    _
  %v18 = vld [vmem:[%s0] sm:$0xf]
  %v19 = vld [vmem:[%s1] sm:$0xf]
  %v20 = vld [vmem:[%s1 + $0x4] sm:$0xf]
  %v21 = vld [vmem:[%s1 + $0x8] sm:$0xf]
  %v22 = vld [vmem:[%s1 + $0xc] sm:$0xf]
  %v23 = vld [vmem:[%s1 + $0x10] sm:$0xf]
  %v24 = vld [vmem:[%s1 + $0x14] sm:$0xf]
  %v25 = vld [vmem:[%s1 + $0x18] sm:$0xf]
  %v26 = vld [vmem:[%s1 + $0x1c] sm:$0xf]
  %v35 = vunpack.c.l.b16 %v19
  %v36 = vunpack.c.l.b16 %v20
  %v37 = vunpack.c.l.b16 %v21
  %v38 = vunpack.c.l.b16 %v22
  %v39 = vunpack.c.l.b16 %v23
  %v40 = vunpack.c.l.b16 %v24
  %v41 = vunpack.c.l.b16 %v25
  %v42 = vunpack.c.l.b16 %v26
  %v43 = vpack.c.b16 %v36, %v35
  %v44 = vpack.c.b16 %v38, %v37
  %v45 = vpack.c.b16 %v40, %v39
  %v46 = vpack.c.b16 %v42, %v41
  %vm51 = vcmask 523264
  %v53 = vsel %vm51, %v18, 0
  %55 = vmatprep.subr.bf16.mxu0 0
  %56 = vmatpush1.bf16.msra.mxu0 0
  %57 = vmatprep.subr.bf16.mxu0 0
  %58 = vmatpush1.bf16.msra.mxu0 0
  %59 = vmatprep.subr.bf16.mxu0 0
  %60 = vmatpush1.bf16.msra.mxu0 0
  %61 = vmatprep.subr.bf16.mxu0 0
  %62 = vmatpush1.bf16.msra.mxu0 0
  %63 = vmatprep.subr.bf16.mxu0 0
  %64 = vmatpush1.bf16.msra.mxu0 %v46
  %65 = vmatprep.subr.bf16.mxu0 0
  %66 = vmatpush1.bf16.msra.mxu0 %v45
  %67 = vmatprep.subr.bf16.mxu0 0
  %68 = vmatpush1.bf16.msra.mxu0 %v44
  %69 = vmatprep.subr.bf16.mxu0 0
  %70 = vmatpush1.bf16.msra.mxu0 %v43
  %71 = vmatprep.subr.bf16.mxu0 0
  %72 = vmatpush2.bf16.msra.mxu0 0
  %73 = vmatprep.subr.bf16.mxu0 0
  %74 = vmatpush2.bf16.msra.mxu0 0
  %75 = vmatprep.subr.bf16.mxu0 0
  %76 = vmatpush2.bf16.msra.mxu0 0
  %77 = vmatprep.subr.bf16.mxu0 0
  %78 = vmatpush2.bf16.msra.mxu0 0
  %79 = vmatprep.subr.bf16.mxu0 0
  %80 = vmatpush2.bf16.msra.mxu0 0
  %81 = vmatprep.subr.bf16.mxu0 0
  %82 = vmatpush2.bf16.msra.mxu0 0
  %83 = vmatprep.subr.bf16.mxu0 0
  %84 = vmatpush2.bf16.msra.mxu0 0
  %85 = vmatprep.subr.bf16.mxu0 0
  %86 = vmatpush2.bf16.msra.mxu0 0
  %87 = vmatprep.mubr.bf16.mxu0 0
  %88 = vmatmul.mubr.bf16.gmra.mxu0 %v53
  %v89 = vpop.f32.mrf.mxu0
  %v90 = vadd.f32 0.0, %v89
  %v91 = vpop.f32.mrf.mxu0
  %v92 = vpop.f32.mrf.mxu0
  %v93 = vpop.f32.mrf.mxu0
  %94 = vdwg.mxu0
  %s95 = scalar_lea.vmem %s0, 4
  %v96 = vld [vmem:[%s95] sm:$0xf]
  %s97 = scalar_lea.vmem %s1, 32
  %v98 = vld [vmem:[%s97] sm:$0xf]
  %v99 = vld [vmem:[%s97 + $0x4] sm:$0xf]
  %v100 = vld [vmem:[%s97 + $0x8] sm:$0xf]
  %v101 = vld [vmem:[%s97 + $0xc] sm:$0xf]
  %v102 = vld [vmem:[%s97 + $0x10] sm:$0xf]
  %v103 = vld [vmem:[%s97 + $0x14] sm:$0xf]
  %v104 = vld [vmem:[%s97 + $0x18] sm:$0xf]
  %v105 = vld [vmem:[%s97 + $0x1c] sm:$0xf]
  %v114 = vunpack.c.l.b16 %v98
  %v115 = vunpack.c.l.b16 %v99
  %v116 = vunpack.c.l.b16 %v100
  %v117 = vunpack.c.l.b16 %v101
  %v118 = vunpack.c.l.b16 %v102
  %v119 = vunpack.c.l.b16 %v103
  %v120 = vunpack.c.l.b16 %v104
  %v121 = vunpack.c.l.b16 %v105
  %v122 = vpack.c.b16 %v115, %v114
  %v123 = vpack.c.b16 %v117, %v116
  %v124 = vpack.c.b16 %v119, %v118
  %v125 = vpack.c.b16 %v121, %v120
  %v131 = vsel %vm51, %v96, 0
  %133 = vmatprep.subr.bf16.mxu0 0
  %134 = vmatpush1.bf16.msra.mxu0 0
  %135 = vmatprep.subr.bf16.mxu0 0
  %136 = vmatpush1.bf16.msra.mxu0 0
  %137 = vmatprep.subr.bf16.mxu0 0
  %138 = vmatpush1.bf16.msra.mxu0 0
  %139 = vmatprep.subr.bf16.mxu0 0
  %140 = vmatpush1.bf16.msra.mxu0 0
  %141 = vmatprep.subr.bf16.mxu0 0
  %142 = vmatpush1.bf16.msra.mxu0 %v125
  %143 = vmatprep.subr.bf16.mxu0 0
  %144 = vmatpush1.bf16.msra.mxu0 %v124
  %145 = vmatprep.subr.bf16.mxu0 0
  %146 = vmatpush1.bf16.msra.mxu0 %v123
  %147 = vmatprep.subr.bf16.mxu0 0
  %148 = vmatpush1.bf16.msra.mxu0 %v122
  %149 = vmatprep.subr.bf16.mxu0 0
  %150 = vmatpush2.bf16.msra.mxu0 0
  %151 = vmatprep.subr.bf16.mxu0 0
  %152 = vmatpush2.bf16.msra.mxu0 0
  %153 = vmatprep.subr.bf16.mxu0 0
  %154 = vmatpush2.bf16.msra.mxu0 0
  %155 = vmatprep.subr.bf16.mxu0 0
  %156 = vmatpush2.bf16.msra.mxu0 0
  %157 = vmatprep.subr.bf16.mxu0 0
  %158 = vmatpush2.bf16.msra.mxu0 0
  %159 = vmatprep.subr.bf16.mxu0 0
  %160 = vmatpush2.bf16.msra.mxu0 0
  %161 = vmatprep.subr.bf16.mxu0 0
  %162 = vmatpush2.bf16.msra.mxu0 0
  %163 = vmatprep.subr.bf16.mxu0 0
  %164 = vmatpush2.bf16.msra.mxu0 0
  %165 = vmatprep.mubr.bf16.mxu0 0
  %166 = vmatmul.mubr.bf16.gmra.mxu0 %v131
  %v167 = vpop.f32.mrf.mxu0
  %v168 = vadd.f32 0.0, %v167
  %v169 = vpop.f32.mrf.mxu0
  %v170 = vpop.f32.mrf.mxu0
  %v171 = vpop.f32.mrf.mxu0
  %172 = vdwg.mxu0
  %s173 = scalar_lea.vmem %s0, 8
  %v174 = vld [vmem:[%s173] sm:$0xf]
  %s175 = scalar_lea.vmem %s1, 64
  %v176 = vld [vmem:[%s175] sm:$0xf]
  %v177 = vld [vmem:[%s175 + $0x4] sm:$0xf]
  %v178 = vld [vmem:[%s175 + $0x8] sm:$0xf]
  %v179 = vld [vmem:[%s175 + $0xc] sm:$0xf]
  %v180 = vld [vmem:[%s175 + $0x10] sm:$0xf]
  %v181 = vld [vmem:[%s175 + $0x14] sm:$0xf]
  %v182 = vld [vmem:[%s175 + $0x18] sm:$0xf]
  %v183 = vld [vmem:[%s175 + $0x1c] sm:$0xf]
  %v192 = vunpack.c.l.b16 %v176
  %v193 = vunpack.c.l.b16 %v177
  %v194 = vunpack.c.l.b16 %v178
  %v195 = vunpack.c.l.b16 %v179
  %v196 = vunpack.c.l.b16 %v180
  %v197 = vunpack.c.l.b16 %v181
  %v198 = vunpack.c.l.b16 %v182
  %v199 = vunpack.c.l.b16 %v183
  %v200 = vpack.c.b16 %v193, %v192
  %v201 = vpack.c.b16 %v195, %v194
  %v202 = vpack.c.b16 %v197, %v196
  %v203 = vpack.c.b16 %v199, %v198
  %v209 = vsel %vm51, %v174, 0
  %211 = vmatprep.subr.bf16.mxu0 0
  %212 = vmatpush1.bf16.msra.mxu0 0
  %213 = vmatprep.subr.bf16.mxu0 0
  %214 = vmatpush1.bf16.msra.mxu0 0
  %215 = vmatprep.subr.bf16.mxu0 0
  %216 = vmatpush1.bf16.msra.mxu0 0
  %217 = vmatprep.subr.bf16.mxu0 0
  %218 = vmatpush1.bf16.msra.mxu0 0
  %219 = vmatprep.subr.bf16.mxu0 0
  %220 = vmatpush1.bf16.msra.mxu0 %v203
  %221 = vmatprep.subr.bf16.mxu0 0
  %222 = vmatpush1.bf16.msra.mxu0 %v202
  %223 = vmatprep.subr.bf16.mxu0 0
  %224 = vmatpush1.bf16.msra.mxu0 %v201
  %225 = vmatprep.subr.bf16.mxu0 0
  %226 = vmatpush1.bf16.msra.mxu0 %v200
  %227 = vmatprep.subr.bf16.mxu0 0
  %228 = vmatpush2.bf16.msra.mxu0 0
  %229 = vmatprep.subr.bf16.mxu0 0
  %230 = vmatpush2.bf16.msra.mxu0 0
  %231 = vmatprep.subr.bf16.mxu0 0
  %232 = vmatpush2.bf16.msra.mxu0 0
  %233 = vmatprep.subr.bf16.mxu0 0
  %234 = vmatpush2.bf16.msra.mxu0 0
  %235 = vmatprep.subr.bf16.mxu0 0
  %236 = vmatpush2.bf16.msra.mxu0 0
  %237 = vmatprep.subr.bf16.mxu0 0
  %238 = vmatpush2.bf16.msra.mxu0 0
  %239 = vmatprep.subr.bf16.mxu0 0
  %240 = vmatpush2.bf16.msra.mxu0 0
  %241 = vmatprep.subr.bf16.mxu0 0
  %242 = vmatpush2.bf16.msra.mxu0 0
  %243 = vmatprep.mubr.bf16.mxu0 0
  %244 = vmatmul.mubr.bf16.gmra.mxu0 %v209
  %v245 = vpop.f32.mrf.mxu0
  %v246 = vadd.f32 0.0, %v245
  %v247 = vpop.f32.mrf.mxu0
  %v248 = vpop.f32.mrf.mxu0
  %v249 = vpop.f32.mrf.mxu0
  %250 = vdwg.mxu0
  %s251 = scalar_lea.vmem %s0, 12
  %v252 = vld [vmem:[%s251] sm:$0xf]
  %s253 = scalar_lea.vmem %s1, 96
  %v254 = vld [vmem:[%s253] sm:$0xf]
  %v255 = vld [vmem:[%s253 + $0x4] sm:$0xf]
  %v256 = vld [vmem:[%s253 + $0x8] sm:$0xf]
  %v257 = vld [vmem:[%s253 + $0xc] sm:$0xf]
  %v258 = vld [vmem:[%s253 + $0x10] sm:$0xf]
  %v259 = vld [vmem:[%s253 + $0x14] sm:$0xf]
  %v260 = vld [vmem:[%s253 + $0x18] sm:$0xf]
  %v261 = vld [vmem:[%s253 + $0x1c] sm:$0xf]
  %v270 = vunpack.c.l.b16 %v254
  %v271 = vunpack.c.l.b16 %v255
  %v272 = vunpack.c.l.b16 %v256
  %v273 = vunpack.c.l.b16 %v257
  %v274 = vunpack.c.l.b16 %v258
  %v275 = vunpack.c.l.b16 %v259
  %v276 = vunpack.c.l.b16 %v260
  %v277 = vunpack.c.l.b16 %v261
  %v278 = vpack.c.b16 %v271, %v270
  %v279 = vpack.c.b16 %v273, %v272
  %v280 = vpack.c.b16 %v275, %v274
  %v281 = vpack.c.b16 %v277, %v276
  %v287 = vsel %vm51, %v252, 0
  %289 = vmatprep.subr.bf16.mxu0 0
  %290 = vmatpush1.bf16.msra.mxu0 0
  %291 = vmatprep.subr.bf16.mxu0 0
  %292 = vmatpush1.bf16.msra.mxu0 0
  %293 = vmatprep.subr.bf16.mxu0 0
  %294 = vmatpush1.bf16.msra.mxu0 0
  %295 = vmatprep.subr.bf16.mxu0 0
  %296 = vmatpush1.bf16.msra.mxu0 0
  %297 = vmatprep.subr.bf16.mxu0 0
  %298 = vmatpush1.bf16.msra.mxu0 %v281
  %299 = vmatprep.subr.bf16.mxu0 0
  %300 = vmatpush1.bf16.msra.mxu0 %v280
  %301 = vmatprep.subr.bf16.mxu0 0
  %302 = vmatpush1.bf16.msra.mxu0 %v279
  %303 = vmatprep.subr.bf16.mxu0 0
  %304 = vmatpush1.bf16.msra.mxu0 %v278
  %305 = vmatprep.subr.bf16.mxu0 0
  %306 = vmatpush2.bf16.msra.mxu0 0
  %307 = vmatprep.subr.bf16.mxu0 0
  %308 = vmatpush2.bf16.msra.mxu0 0
  %309 = vmatprep.subr.bf16.mxu0 0
  %310 = vmatpush2.bf16.msra.mxu0 0
  %311 = vmatprep.subr.bf16.mxu0 0
  %312 = vmatpush2.bf16.msra.mxu0 0
  %313 = vmatprep.subr.bf16.mxu0 0
  %314 = vmatpush2.bf16.msra.mxu0 0
  %315 = vmatprep.subr.bf16.mxu0 0
  %316 = vmatpush2.bf16.msra.mxu0 0
  %317 = vmatprep.subr.bf16.mxu0 0
  %318 = vmatpush2.bf16.msra.mxu0 0
  %319 = vmatprep.subr.bf16.mxu0 0
  %320 = vmatpush2.bf16.msra.mxu0 0
  %321 = vmatprep.mubr.bf16.mxu0 0
  %322 = vmatmul.mubr.bf16.gmra.mxu0 %v287
  %v323 = vpop.f32.mrf.mxu0
  %v324 = vadd.f32 0.0, %v323
  %v325 = vpop.f32.mrf.mxu0
  %v326 = vpop.f32.mrf.mxu0
  %v327 = vpop.f32.mrf.mxu0
  %328 = vdwg.mxu0
  %v329 = vadd.f32 %v90, %v168
  %v330 = vadd.f32 %v329, %v246
  %v331 = vadd.f32 %v330, %v324
  %332 = vadd.xlane.f32.xlu0 %v331
  %v333 = vpop.xlane.xlu0 %332
  %v334 = vmul.f32 %v90, %v90
  %v335 = vmul.f32 %v168, %v168
  %v336 = vmul.f32 %v246, %v246
  %v337 = vmul.f32 %v324, %v324
  %v338 = vadd.f32 %v334, %v335
  %v339 = vadd.f32 %v338, %v336
  %v340 = vadd.f32 %v339, %v337
  %341 = vadd.xlane.f32.xlu0 %v340
  %v342 = vpop.xlane.xlu0 %341
  %v343 = vmul.f32 %v333, 0.001953125
  %v344 = vmul.f32 %v342, 0.001953125
  %v345 = vmul.f32 %v343, %v343
  %v346 = vsub.f32 %v344, %v345
  %v347 = vmax.f32 %v346, 0.0
  %v348 = vadd.f32 %v347, 1e-05
  %v349 = vrsqrt.pop %v348
  %v350 = vld [vmem:[%s2] sm:$0xff]
  %v351 = vmul.f32 %v349, %v350
  %v352 = vld [vmem:[%s3] sm:$0xff]
  %v353 = vmul.f32 %v343, %v351
  %v354 = vsub.f32 %v352, %v353
  %356 = vset.pattern.permute.xlu0 0
  %357 = vperm.xlu0 %356, %v351
  %v358 = vpop.permute.xlu0 %357
  %v360 = vmul.f32 %v90, %v358
  %v361 = vmul.f32 %v168, %v358
  %v362 = vmul.f32 %v246, %v358
  %v363 = vmul.f32 %v324, %v358
  %365 = vset.pattern.permute.xlu0 0
  %366 = vperm.xlu0 %365, %v354
  %v367 = vpop.permute.xlu0 %366
  %v369 = vadd.f32 %v360, %v367
  %v370 = vadd.f32 %v361, %v367
  %v371 = vadd.f32 %v362, %v367
  %v372 = vadd.f32 %v363, %v367
  %v373 = vtanh.pop %v369
  %v374 = vtanh.pop %v370
  %v375 = vtanh.pop %v371
  %v376 = vtanh.pop %v372
  %v377 = vpack.c.bf16 %v373, %v373
  %v378 = vpack.c.bf16 %v374, %v374
  %v379 = vpack.c.bf16 %v375, %v375
  %v380 = vpack.c.bf16 %v376, %v376
  %v385 = vunpack.c.l.b16 %v377
  %v386 = vunpack.c.l.b16 %v378
  %v387 = vunpack.c.l.b16 %v379
  %v388 = vunpack.c.l.b16 %v380
  %v389 = vpack.c.b16 %v386, %v385
  %v390 = vpack.c.b16 %v388, %v387
  %393 = vst [vmem:[%s4] sm:$0xff] %v389
  %394 = vst [vmem:[%s4 + $0x8] sm:$0xff] %v390
  // Predicated region
  $region18: #{cycle_generator_forward.12} parent=0 // pred_check
    _
  $region19: #{cycle_generator_forward.12} parent=0 // pred_check_branch
    %396 = sbr.rel (0) target = $region21
  $region20: #{cycle_generator_forward.12} parent=0 // pred_region
    _
  $region21: #{cycle_generator_forward.12} parent=0 // pred_fallthru
    _
  // Predicated region
  $region22: #{cycle_generator_forward.12} parent=0 // pred_check
    _
  $region23: #{cycle_generator_forward.12} parent=0 // pred_check_branch
    %398 = sbr.rel (0) target = $region25
  $region24: #{cycle_generator_forward.12} parent=0 // pred_region
    _
  $region25: #{cycle_generator_forward.12} parent=0 // pred_fallthru
    _

// kernel: cycle_generator_forward.13
$region0: #{cycle_generator_forward.13}
  #allocation0 [shape = 'u32[]', space=smem, size = 0x4, offset = 0x4, fixed_abs, tag = 'smem constant byte address 0x4 - core index']
  #allocation1 [shape = 'u32[144,128]{1,0:T(1,128)}', space=vmem, size = 0x12000, scoped, tag = 'internal scratch']
  %s0 = inlined_call_operand.vmem [shape: bf16[4,3,32], index: 0, kind: input, shape index: {}]
  %s1 = inlined_call_operand.vmem [shape: bf16[4,32,512], index: 1, kind: input, shape index: {}]
  %s2 = inlined_call_operand.vmem [shape: f32[3,1], index: 2, kind: input, shape index: {}]
  %s3 = inlined_call_operand.vmem [shape: f32[3,1], index: 3, kind: input, shape index: {}]
  %s4 = inlined_call_operand.vmem [shape: f32[3,2048], index: 4, kind: output, shape index: {}]
  %s5 = sld [smem:[#allocation0]]
  $region26: #{cycle_generator_forward.13} parent=0
    _
  %s7 = ssub.s32 1, %s5
  %s8 = scalar_select 0, %s7, %s5
  // Predicated region
  $region2: #{cycle_generator_forward.13} parent=0 // pred_check
    _
  $region3: #{cycle_generator_forward.13} parent=0 // pred_check_branch
    %10 = sbr.rel (0) target = $region5
  $region4: #{cycle_generator_forward.13} parent=0 // pred_region
    _
  $region5: #{cycle_generator_forward.13} parent=0 // pred_fallthru
    _
  // Predicated region
  $region6: #{cycle_generator_forward.13} parent=0 // pred_check
    _
  $region7: #{cycle_generator_forward.13} parent=0 // pred_check_branch
    %12 = sbr.rel (0) target = $region9
  $region8: #{cycle_generator_forward.13} parent=0 // pred_region
    _
  $region9: #{cycle_generator_forward.13} parent=0 // pred_fallthru
    _
  // Predicated region
  $region10: #{cycle_generator_forward.13} parent=0 // pred_check
    _
  $region11: #{cycle_generator_forward.13} parent=0 // pred_check_branch
    %14 = sbr.rel (0) target = $region13
  $region12: #{cycle_generator_forward.13} parent=0 // pred_region
    _
  $region13: #{cycle_generator_forward.13} parent=0 // pred_fallthru
    _
  // Predicated region
  $region14: #{cycle_generator_forward.13} parent=0 // pred_check
    _
  $region15: #{cycle_generator_forward.13} parent=0 // pred_check_branch
    %16 = sbr.rel (0) target = $region17
  $region16: #{cycle_generator_forward.13} parent=0 // pred_region
    _
  $region17: #{cycle_generator_forward.13} parent=0 // pred_fallthru
    _
  %v18 = vld [vmem:[%s0] sm:$0x3]
  %v19 = vld [vmem:[%s1] sm:$0xff]
  %v20 = vld [vmem:[%s1 + $0x8] sm:$0xff]
  %v21 = vld [vmem:[%s1 + $0x10] sm:$0xff]
  %v22 = vld [vmem:[%s1 + $0x18] sm:$0xff]
  %v23 = vld [vmem:[%s1 + $0x20] sm:$0xff]
  %v24 = vld [vmem:[%s1 + $0x28] sm:$0xff]
  %v25 = vld [vmem:[%s1 + $0x30] sm:$0xff]
  %v26 = vld [vmem:[%s1 + $0x38] sm:$0xff]
  %v35 = vunpack.c.l.b16 %v19
  %v36 = vunpack.c.h.b16 %v19
  %v37 = vunpack.c.l.b16 %v20
  %v38 = vunpack.c.h.b16 %v20
  %v39 = vunpack.c.l.b16 %v21
  %v40 = vunpack.c.h.b16 %v21
  %v41 = vunpack.c.l.b16 %v22
  %v42 = vunpack.c.h.b16 %v22
  %v43 = vunpack.c.l.b16 %v23
  %v44 = vunpack.c.h.b16 %v23
  %v45 = vunpack.c.l.b16 %v24
  %v46 = vunpack.c.h.b16 %v24
  %v47 = vunpack.c.l.b16 %v25
  %v48 = vunpack.c.h.b16 %v25
  %v49 = vunpack.c.l.b16 %v26
  %v50 = vunpack.c.h.b16 %v26
  %v51 = vpack.c.b16 %v39, %v35
  %v52 = vpack.c.b16 %v40, %v36
  %v53 = vpack.c.b16 %v41, %v37
  %v54 = vpack.c.b16 %v42, %v38
  %v55 = vpack.c.b16 %v47, %v43
  %v56 = vpack.c.b16 %v48, %v44
  %v57 = vpack.c.b16 %v49, %v45
  %v58 = vpack.c.b16 %v50, %v46
  %vm67 = vcmask 261120
  %v69 = vsel %vm67, %v18, 0
  %71 = vmatprep.subr.bf16.mxu0 0
  %72 = vmatpush1.bf16.msra.mxu0 0
  %73 = vmatprep.subr.bf16.mxu0 0
  %74 = vmatpush1.bf16.msra.mxu0 0
  %75 = vmatprep.subr.bf16.mxu0 0
  %76 = vmatpush1.bf16.msra.mxu0 0
  %77 = vmatprep.subr.bf16.mxu0 0
  %78 = vmatpush1.bf16.msra.mxu0 0
  %79 = vmatprep.subr.bf16.mxu0 0
  %80 = vmatpush1.bf16.msra.mxu0 0
  %81 = vmatprep.subr.bf16.mxu0 0
  %82 = vmatpush1.bf16.msra.mxu0 0
  %83 = vmatprep.subr.bf16.mxu0 %v56
  %84 = vmatpush1.bf16.msra.mxu0 %v55
  %85 = vmatprep.subr.bf16.mxu0 %v52
  %86 = vmatpush1.bf16.msra.mxu0 %v51
  %87 = vmatprep.subr.bf16.mxu0 0
  %88 = vmatpush2.bf16.msra.mxu0 0
  %89 = vmatprep.subr.bf16.mxu0 0
  %90 = vmatpush2.bf16.msra.mxu0 0
  %91 = vmatprep.subr.bf16.mxu0 0
  %92 = vmatpush2.bf16.msra.mxu0 0
  %93 = vmatprep.subr.bf16.mxu0 0
  %94 = vmatpush2.bf16.msra.mxu0 0
  %95 = vmatprep.subr.bf16.mxu0 0
  %96 = vmatpush2.bf16.msra.mxu0 0
  %97 = vmatprep.subr.bf16.mxu0 0
  %98 = vmatpush2.bf16.msra.mxu0 0
  %99 = vmatprep.subr.bf16.mxu0 0
  %100 = vmatpush2.bf16.msra.mxu0 0
  %101 = vmatprep.subr.bf16.mxu0 0
  %102 = vmatpush2.bf16.msra.mxu0 0
  %103 = vmatprep.mubr.bf16.mxu0 0
  %104 = vmatmul.mubr.bf16.gmra.mxu0 %v69
  %v105 = vpop.f32.mrf.mxu0
  %v106 = vadd.f32 0.0, %v105
  %v107 = vpop.f32.mrf.mxu0
  %v108 = vadd.f32 0.0, %v107
  %v109 = vpop.f32.mrf.mxu0
  %v110 = vpop.f32.mrf.mxu0
  %111 = vdwg.mxu0
  %112 = vmatprep.subr.bf16.mxu0 0
  %113 = vmatpush1.bf16.msra.mxu0 0
  %114 = vmatprep.subr.bf16.mxu0 0
  %115 = vmatpush1.bf16.msra.mxu0 0
  %116 = vmatprep.subr.bf16.mxu0 0
  %117 = vmatpush1.bf16.msra.mxu0 0
  %118 = vmatprep.subr.bf16.mxu0 0
  %119 = vmatpush1.bf16.msra.mxu0 0
  %120 = vmatprep.subr.bf16.mxu0 0
  %121 = vmatpush1.bf16.msra.mxu0 0
  %122 = vmatprep.subr.bf16.mxu0 0
  %123 = vmatpush1.bf16.msra.mxu0 0
  %124 = vmatprep.subr.bf16.mxu0 %v58
  %125 = vmatpush1.bf16.msra.mxu0 %v57
  %126 = vmatprep.subr.bf16.mxu0 %v54
  %127 = vmatpush1.bf16.msra.mxu0 %v53
  %128 = vmatprep.subr.bf16.mxu0 0
  %129 = vmatpush2.bf16.msra.mxu0 0
  %130 = vmatprep.subr.bf16.mxu0 0
  %131 = vmatpush2.bf16.msra.mxu0 0
  %132 = vmatprep.subr.bf16.mxu0 0
  %133 = vmatpush2.bf16.msra.mxu0 0
  %134 = vmatprep.subr.bf16.mxu0 0
  %135 = vmatpush2.bf16.msra.mxu0 0
  %136 = vmatprep.subr.bf16.mxu0 0
  %137 = vmatpush2.bf16.msra.mxu0 0
  %138 = vmatprep.subr.bf16.mxu0 0
  %139 = vmatpush2.bf16.msra.mxu0 0
  %140 = vmatprep.subr.bf16.mxu0 0
  %141 = vmatpush2.bf16.msra.mxu0 0
  %142 = vmatprep.subr.bf16.mxu0 0
  %143 = vmatpush2.bf16.msra.mxu0 0
  %144 = vmatprep.mubr.bf16.mxu0 0
  %145 = vmatmul.mubr.bf16.gmra.mxu0 %v69
  %v146 = vpop.f32.mrf.mxu0
  %v147 = vadd.f32 0.0, %v146
  %v148 = vpop.f32.mrf.mxu0
  %v149 = vadd.f32 0.0, %v148
  %v150 = vpop.f32.mrf.mxu0
  %v151 = vpop.f32.mrf.mxu0
  %152 = vdwg.mxu0
  %s153 = scalar_lea.vmem %s0, 2
  %v154 = vld [vmem:[%s153] sm:$0x3]
  %s155 = scalar_lea.vmem %s1, 64
  %v156 = vld [vmem:[%s155] sm:$0xff]
  %v157 = vld [vmem:[%s155 + $0x8] sm:$0xff]
  %v158 = vld [vmem:[%s155 + $0x10] sm:$0xff]
  %v159 = vld [vmem:[%s155 + $0x18] sm:$0xff]
  %v160 = vld [vmem:[%s155 + $0x20] sm:$0xff]
  %v161 = vld [vmem:[%s155 + $0x28] sm:$0xff]
  %v162 = vld [vmem:[%s155 + $0x30] sm:$0xff]
  %v163 = vld [vmem:[%s155 + $0x38] sm:$0xff]
  %v172 = vunpack.c.l.b16 %v156
  %v173 = vunpack.c.h.b16 %v156
  %v174 = vunpack.c.l.b16 %v157
  %v175 = vunpack.c.h.b16 %v157
  %v176 = vunpack.c.l.b16 %v158
  %v177 = vunpack.c.h.b16 %v158
  %v178 = vunpack.c.l.b16 %v159
  %v179 = vunpack.c.h.b16 %v159
  %v180 = vunpack.c.l.b16 %v160
  %v181 = vunpack.c.h.b16 %v160
  %v182 = vunpack.c.l.b16 %v161
  %v183 = vunpack.c.h.b16 %v161
  %v184 = vunpack.c.l.b16 %v162
  %v185 = vunpack.c.h.b16 %v162
  %v186 = vunpack.c.l.b16 %v163
  %v187 = vunpack.c.h.b16 %v163
  %v188 = vpack.c.b16 %v176, %v172
  %v189 = vpack.c.b16 %v177, %v173
  %v190 = vpack.c.b16 %v178, %v174
  %v191 = vpack.c.b16 %v179, %v175
  %v192 = vpack.c.b16 %v184, %v180
  %v193 = vpack.c.b16 %v185, %v181
  %v194 = vpack.c.b16 %v186, %v182
  %v195 = vpack.c.b16 %v187, %v183
  %v205 = vsel %vm67, %v154, 0
  %207 = vmatprep.subr.bf16.mxu0 0
  %208 = vmatpush1.bf16.msra.mxu0 0
  %209 = vmatprep.subr.bf16.mxu0 0
  %210 = vmatpush1.bf16.msra.mxu0 0
  %211 = vmatprep.subr.bf16.mxu0 0
  %212 = vmatpush1.bf16.msra.mxu0 0
  %213 = vmatprep.subr.bf16.mxu0 0
  %214 = vmatpush1.bf16.msra.mxu0 0
  %215 = vmatprep.subr.bf16.mxu0 0
  %216 = vmatpush1.bf16.msra.mxu0 0
  %217 = vmatprep.subr.bf16.mxu0 0
  %218 = vmatpush1.bf16.msra.mxu0 0
  %219 = vmatprep.subr.bf16.mxu0 %v193
  %220 = vmatpush1.bf16.msra.mxu0 %v192
  %221 = vmatprep.subr.bf16.mxu0 %v189
  %222 = vmatpush1.bf16.msra.mxu0 %v188
  %223 = vmatprep.subr.bf16.mxu0 0
  %224 = vmatpush2.bf16.msra.mxu0 0
  %225 = vmatprep.subr.bf16.mxu0 0
  %226 = vmatpush2.bf16.msra.mxu0 0
  %227 = vmatprep.subr.bf16.mxu0 0
  %228 = vmatpush2.bf16.msra.mxu0 0
  %229 = vmatprep.subr.bf16.mxu0 0
  %230 = vmatpush2.bf16.msra.mxu0 0
  %231 = vmatprep.subr.bf16.mxu0 0
  %232 = vmatpush2.bf16.msra.mxu0 0
  %233 = vmatprep.subr.bf16.mxu0 0
  %234 = vmatpush2.bf16.msra.mxu0 0
  %235 = vmatprep.subr.bf16.mxu0 0
  %236 = vmatpush2.bf16.msra.mxu0 0
  %237 = vmatprep.subr.bf16.mxu0 0
  %238 = vmatpush2.bf16.msra.mxu0 0
  %239 = vmatprep.mubr.bf16.mxu0 0
  %240 = vmatmul.mubr.bf16.gmra.mxu0 %v205
  %v241 = vpop.f32.mrf.mxu0
  %v242 = vadd.f32 0.0, %v241
  %v243 = vpop.f32.mrf.mxu0
  %v244 = vadd.f32 0.0, %v243
  %v245 = vpop.f32.mrf.mxu0
  %v246 = vpop.f32.mrf.mxu0
  %247 = vdwg.mxu0
  %248 = vmatprep.subr.bf16.mxu0 0
  %249 = vmatpush1.bf16.msra.mxu0 0
  %250 = vmatprep.subr.bf16.mxu0 0
  %251 = vmatpush1.bf16.msra.mxu0 0
  %252 = vmatprep.subr.bf16.mxu0 0
  %253 = vmatpush1.bf16.msra.mxu0 0
  %254 = vmatprep.subr.bf16.mxu0 0
  %255 = vmatpush1.bf16.msra.mxu0 0
  %256 = vmatprep.subr.bf16.mxu0 0
  %257 = vmatpush1.bf16.msra.mxu0 0
  %258 = vmatprep.subr.bf16.mxu0 0
  %259 = vmatpush1.bf16.msra.mxu0 0
  %260 = vmatprep.subr.bf16.mxu0 %v195
  %261 = vmatpush1.bf16.msra.mxu0 %v194
  %262 = vmatprep.subr.bf16.mxu0 %v191
  %263 = vmatpush1.bf16.msra.mxu0 %v190
  %264 = vmatprep.subr.bf16.mxu0 0
  %265 = vmatpush2.bf16.msra.mxu0 0
  %266 = vmatprep.subr.bf16.mxu0 0
  %267 = vmatpush2.bf16.msra.mxu0 0
  %268 = vmatprep.subr.bf16.mxu0 0
  %269 = vmatpush2.bf16.msra.mxu0 0
  %270 = vmatprep.subr.bf16.mxu0 0
  %271 = vmatpush2.bf16.msra.mxu0 0
  %272 = vmatprep.subr.bf16.mxu0 0
  %273 = vmatpush2.bf16.msra.mxu0 0
  %274 = vmatprep.subr.bf16.mxu0 0
  %275 = vmatpush2.bf16.msra.mxu0 0
  %276 = vmatprep.subr.bf16.mxu0 0
  %277 = vmatpush2.bf16.msra.mxu0 0
  %278 = vmatprep.subr.bf16.mxu0 0
  %279 = vmatpush2.bf16.msra.mxu0 0
  %280 = vmatprep.mubr.bf16.mxu0 0
  %281 = vmatmul.mubr.bf16.gmra.mxu0 %v205
  %v282 = vpop.f32.mrf.mxu0
  %v283 = vadd.f32 0.0, %v282
  %v284 = vpop.f32.mrf.mxu0
  %v285 = vadd.f32 0.0, %v284
  %v286 = vpop.f32.mrf.mxu0
  %v287 = vpop.f32.mrf.mxu0
  %288 = vdwg.mxu0
  %s289 = scalar_lea.vmem %s0, 4
  %v290 = vld [vmem:[%s289] sm:$0x3]
  %s291 = scalar_lea.vmem %s1, 128
  %v292 = vld [vmem:[%s291] sm:$0xff]
  %v293 = vld [vmem:[%s291 + $0x8] sm:$0xff]
  %v294 = vld [vmem:[%s291 + $0x10] sm:$0xff]
  %v295 = vld [vmem:[%s291 + $0x18] sm:$0xff]
  %v296 = vld [vmem:[%s291 + $0x20] sm:$0xff]
  %v297 = vld [vmem:[%s291 + $0x28] sm:$0xff]
  %v298 = vld [vmem:[%s291 + $0x30] sm:$0xff]
  %v299 = vld [vmem:[%s291 + $0x38] sm:$0xff]
  %v308 = vunpack.c.l.b16 %v292
  %v309 = vunpack.c.h.b16 %v292
  %v310 = vunpack.c.l.b16 %v293
  %v311 = vunpack.c.h.b16 %v293
  %v312 = vunpack.c.l.b16 %v294
  %v313 = vunpack.c.h.b16 %v294
  %v314 = vunpack.c.l.b16 %v295
  %v315 = vunpack.c.h.b16 %v295
  %v316 = vunpack.c.l.b16 %v296
  %v317 = vunpack.c.h.b16 %v296
  %v318 = vunpack.c.l.b16 %v297
  %v319 = vunpack.c.h.b16 %v297
  %v320 = vunpack.c.l.b16 %v298
  %v321 = vunpack.c.h.b16 %v298
  %v322 = vunpack.c.l.b16 %v299
  %v323 = vunpack.c.h.b16 %v299
  %v324 = vpack.c.b16 %v312, %v308
  %v325 = vpack.c.b16 %v313, %v309
  %v326 = vpack.c.b16 %v314, %v310
  %v327 = vpack.c.b16 %v315, %v311
  %v328 = vpack.c.b16 %v320, %v316
  %v329 = vpack.c.b16 %v321, %v317
  %v330 = vpack.c.b16 %v322, %v318
  %v331 = vpack.c.b16 %v323, %v319
  %v341 = vsel %vm67, %v290, 0
  %343 = vmatprep.subr.bf16.mxu0 0
  %344 = vmatpush1.bf16.msra.mxu0 0
  %345 = vmatprep.subr.bf16.mxu0 0
  %346 = vmatpush1.bf16.msra.mxu0 0
  %347 = vmatprep.subr.bf16.mxu0 0
  %348 = vmatpush1.bf16.msra.mxu0 0
  %349 = vmatprep.subr.bf16.mxu0 0
  %350 = vmatpush1.bf16.msra.mxu0 0
  %351 = vmatprep.subr.bf16.mxu0 0
  %352 = vmatpush1.bf16.msra.mxu0 0
  %353 = vmatprep.subr.bf16.mxu0 0
  %354 = vmatpush1.bf16.msra.mxu0 0
  %355 = vmatprep.subr.bf16.mxu0 %v329
  %356 = vmatpush1.bf16.msra.mxu0 %v328
  %357 = vmatprep.subr.bf16.mxu0 %v325
  %358 = vmatpush1.bf16.msra.mxu0 %v324
  %359 = vmatprep.subr.bf16.mxu0 0
  %360 = vmatpush2.bf16.msra.mxu0 0
  %361 = vmatprep.subr.bf16.mxu0 0
  %362 = vmatpush2.bf16.msra.mxu0 0
  %363 = vmatprep.subr.bf16.mxu0 0
  %364 = vmatpush2.bf16.msra.mxu0 0
  %365 = vmatprep.subr.bf16.mxu0 0
  %366 = vmatpush2.bf16.msra.mxu0 0
  %367 = vmatprep.subr.bf16.mxu0 0
  %368 = vmatpush2.bf16.msra.mxu0 0
  %369 = vmatprep.subr.bf16.mxu0 0
  %370 = vmatpush2.bf16.msra.mxu0 0
  %371 = vmatprep.subr.bf16.mxu0 0
  %372 = vmatpush2.bf16.msra.mxu0 0
  %373 = vmatprep.subr.bf16.mxu0 0
  %374 = vmatpush2.bf16.msra.mxu0 0
  %375 = vmatprep.mubr.bf16.mxu0 0
  %376 = vmatmul.mubr.bf16.gmra.mxu0 %v341
  %v377 = vpop.f32.mrf.mxu0
  %v378 = vadd.f32 0.0, %v377
  %v379 = vpop.f32.mrf.mxu0
  %v380 = vadd.f32 0.0, %v379
  %v381 = vpop.f32.mrf.mxu0
  %v382 = vpop.f32.mrf.mxu0
  %383 = vdwg.mxu0
  %384 = vmatprep.subr.bf16.mxu0 0
  %385 = vmatpush1.bf16.msra.mxu0 0
  %386 = vmatprep.subr.bf16.mxu0 0
  %387 = vmatpush1.bf16.msra.mxu0 0
  %388 = vmatprep.subr.bf16.mxu0 0
  %389 = vmatpush1.bf16.msra.mxu0 0
  %390 = vmatprep.subr.bf16.mxu0 0
  %391 = vmatpush1.bf16.msra.mxu0 0
  %392 = vmatprep.subr.bf16.mxu0 0
  %393 = vmatpush1.bf16.msra.mxu0 0
  %394 = vmatprep.subr.bf16.mxu0 0
  %395 = vmatpush1.bf16.msra.mxu0 0
  %396 = vmatprep.subr.bf16.mxu0 %v331
  %397 = vmatpush1.bf16.msra.mxu0 %v330
  %398 = vmatprep.subr.bf16.mxu0 %v327
  %399 = vmatpush1.bf16.msra.mxu0 %v326
  %400 = vmatprep.subr.bf16.mxu0 0
  %401 = vmatpush2.bf16.msra.mxu0 0
  %402 = vmatprep.subr.bf16.mxu0 0
  %403 = vmatpush2.bf16.msra.mxu0 0
  %404 = vmatprep.subr.bf16.mxu0 0
  %405 = vmatpush2.bf16.msra.mxu0 0
  %406 = vmatprep.subr.bf16.mxu0 0
  %407 = vmatpush2.bf16.msra.mxu0 0
  %408 = vmatprep.subr.bf16.mxu0 0
  %409 = vmatpush2.bf16.msra.mxu0 0
  %410 = vmatprep.subr.bf16.mxu0 0
  %411 = vmatpush2.bf16.msra.mxu0 0
  %412 = vmatprep.subr.bf16.mxu0 0
  %413 = vmatpush2.bf16.msra.mxu0 0
  %414 = vmatprep.subr.bf16.mxu0 0
  %415 = vmatpush2.bf16.msra.mxu0 0
  %416 = vmatprep.mubr.bf16.mxu0 0
  %417 = vmatmul.mubr.bf16.gmra.mxu0 %v341
  %v418 = vpop.f32.mrf.mxu0
  %v419 = vadd.f32 0.0, %v418
  %v420 = vpop.f32.mrf.mxu0
  %v421 = vadd.f32 0.0, %v420
  %v422 = vpop.f32.mrf.mxu0
  %v423 = vpop.f32.mrf.mxu0
  %424 = vdwg.mxu0
  %s425 = scalar_lea.vmem %s0, 6
  %v426 = vld [vmem:[%s425] sm:$0x3]
  %s427 = scalar_lea.vmem %s1, 192
  %v428 = vld [vmem:[%s427] sm:$0xff]
  %v429 = vld [vmem:[%s427 + $0x8] sm:$0xff]
  %v430 = vld [vmem:[%s427 + $0x10] sm:$0xff]
  %v431 = vld [vmem:[%s427 + $0x18] sm:$0xff]
  %v432 = vld [vmem:[%s427 + $0x20] sm:$0xff]
  %v433 = vld [vmem:[%s427 + $0x28] sm:$0xff]
  %v434 = vld [vmem:[%s427 + $0x30] sm:$0xff]
  %v435 = vld [vmem:[%s427 + $0x38] sm:$0xff]
  %v444 = vunpack.c.l.b16 %v428
  %v445 = vunpack.c.h.b16 %v428
  %v446 = vunpack.c.l.b16 %v429
  %v447 = vunpack.c.h.b16 %v429
  %v448 = vunpack.c.l.b16 %v430
  %v449 = vunpack.c.h.b16 %v430
  %v450 = vunpack.c.l.b16 %v431
  %v451 = vunpack.c.h.b16 %v431
  %v452 = vunpack.c.l.b16 %v432
  %v453 = vunpack.c.h.b16 %v432
  %v454 = vunpack.c.l.b16 %v433
  %v455 = vunpack.c.h.b16 %v433
  %v456 = vunpack.c.l.b16 %v434
  %v457 = vunpack.c.h.b16 %v434
  %v458 = vunpack.c.l.b16 %v435
  %v459 = vunpack.c.h.b16 %v435
  %v460 = vpack.c.b16 %v448, %v444
  %v461 = vpack.c.b16 %v449, %v445
  %v462 = vpack.c.b16 %v450, %v446
  %v463 = vpack.c.b16 %v451, %v447
  %v464 = vpack.c.b16 %v456, %v452
  %v465 = vpack.c.b16 %v457, %v453
  %v466 = vpack.c.b16 %v458, %v454
  %v467 = vpack.c.b16 %v459, %v455
  %v477 = vsel %vm67, %v426, 0
  %479 = vmatprep.subr.bf16.mxu0 0
  %480 = vmatpush1.bf16.msra.mxu0 0
  %481 = vmatprep.subr.bf16.mxu0 0
  %482 = vmatpush1.bf16.msra.mxu0 0
  %483 = vmatprep.subr.bf16.mxu0 0
  %484 = vmatpush1.bf16.msra.mxu0 0
  %485 = vmatprep.subr.bf16.mxu0 0
  %486 = vmatpush1.bf16.msra.mxu0 0
  %487 = vmatprep.subr.bf16.mxu0 0
  %488 = vmatpush1.bf16.msra.mxu0 0
  %489 = vmatprep.subr.bf16.mxu0 0
  %490 = vmatpush1.bf16.msra.mxu0 0
  %491 = vmatprep.subr.bf16.mxu0 %v465
  %492 = vmatpush1.bf16.msra.mxu0 %v464
  %493 = vmatprep.subr.bf16.mxu0 %v461
  %494 = vmatpush1.bf16.msra.mxu0 %v460
  %495 = vmatprep.subr.bf16.mxu0 0
  %496 = vmatpush2.bf16.msra.mxu0 0
  %497 = vmatprep.subr.bf16.mxu0 0
  %498 = vmatpush2.bf16.msra.mxu0 0
  %499 = vmatprep.subr.bf16.mxu0 0
  %500 = vmatpush2.bf16.msra.mxu0 0
  %501 = vmatprep.subr.bf16.mxu0 0
  %502 = vmatpush2.bf16.msra.mxu0 0
  %503 = vmatprep.subr.bf16.mxu0 0
  %504 = vmatpush2.bf16.msra.mxu0 0
  %505 = vmatprep.subr.bf16.mxu0 0
  %506 = vmatpush2.bf16.msra.mxu0 0
  %507 = vmatprep.subr.bf16.mxu0 0
  %508 = vmatpush2.bf16.msra.mxu0 0
  %509 = vmatprep.subr.bf16.mxu0 0
  %510 = vmatpush2.bf16.msra.mxu0 0
  %511 = vmatprep.mubr.bf16.mxu0 0
  %512 = vmatmul.mubr.bf16.gmra.mxu0 %v477
  %v513 = vpop.f32.mrf.mxu0
  %v514 = vadd.f32 0.0, %v513
  %v515 = vpop.f32.mrf.mxu0
  %v516 = vadd.f32 0.0, %v515
  %v517 = vpop.f32.mrf.mxu0
  %v518 = vpop.f32.mrf.mxu0
  %519 = vdwg.mxu0
  %520 = vmatprep.subr.bf16.mxu0 0
  %521 = vmatpush1.bf16.msra.mxu0 0
  %522 = vmatprep.subr.bf16.mxu0 0
  %523 = vmatpush1.bf16.msra.mxu0 0
  %524 = vmatprep.subr.bf16.mxu0 0
  %525 = vmatpush1.bf16.msra.mxu0 0
  %526 = vmatprep.subr.bf16.mxu0 0
  %527 = vmatpush1.bf16.msra.mxu0 0
  %528 = vmatprep.subr.bf16.mxu0 0
  %529 = vmatpush1.bf16.msra.mxu0 0
  %530 = vmatprep.subr.bf16.mxu0 0
  %531 = vmatpush1.bf16.msra.mxu0 0
  %532 = vmatprep.subr.bf16.mxu0 %v467
  %533 = vmatpush1.bf16.msra.mxu0 %v466
  %534 = vmatprep.subr.bf16.mxu0 %v463
  %535 = vmatpush1.bf16.msra.mxu0 %v462
  %536 = vmatprep.subr.bf16.mxu0 0
  %537 = vmatpush2.bf16.msra.mxu0 0
  %538 = vmatprep.subr.bf16.mxu0 0
  %539 = vmatpush2.bf16.msra.mxu0 0
  %540 = vmatprep.subr.bf16.mxu0 0
  %541 = vmatpush2.bf16.msra.mxu0 0
  %542 = vmatprep.subr.bf16.mxu0 0
  %543 = vmatpush2.bf16.msra.mxu0 0
  %544 = vmatprep.subr.bf16.mxu0 0
  %545 = vmatpush2.bf16.msra.mxu0 0
  %546 = vmatprep.subr.bf16.mxu0 0
  %547 = vmatpush2.bf16.msra.mxu0 0
  %548 = vmatprep.subr.bf16.mxu0 0
  %549 = vmatpush2.bf16.msra.mxu0 0
  %550 = vmatprep.subr.bf16.mxu0 0
  %551 = vmatpush2.bf16.msra.mxu0 0
  %552 = vmatprep.mubr.bf16.mxu0 0
  %553 = vmatmul.mubr.bf16.gmra.mxu0 %v477
  %v554 = vpop.f32.mrf.mxu0
  %v555 = vadd.f32 0.0, %v554
  %v556 = vpop.f32.mrf.mxu0
  %v557 = vadd.f32 0.0, %v556
  %v558 = vpop.f32.mrf.mxu0
  %v559 = vpop.f32.mrf.mxu0
  %560 = vdwg.mxu0
  %vm561 = vcmask 1042432
  %v562 = vsel %vm561, %v106, 0.0
  %v563 = vsel %vm561, %v108, 0.0
  %v564 = vadd.f32 %v562, %v563
  %v565 = vsel %vm561, %v147, 0.0
  %v566 = vadd.f32 %v564, %v565
  %v567 = vsel %vm561, %v149, 0.0
  %v568 = vadd.f32 %v566, %v567
  %v569 = vsel %vm561, %v242, 0.0
  %v570 = vadd.f32 %v568, %v569
  %v571 = vsel %vm561, %v244, 0.0
  %v572 = vadd.f32 %v570, %v571
  %v573 = vsel %vm561, %v283, 0.0
  %v574 = vadd.f32 %v572, %v573
  %v575 = vsel %vm561, %v285, 0.0
  %v576 = vadd.f32 %v574, %v575
  %v577 = vsel %vm561, %v378, 0.0
  %v578 = vadd.f32 %v576, %v577
  %v579 = vsel %vm561, %v380, 0.0
  %v580 = vadd.f32 %v578, %v579
  %v581 = vsel %vm561, %v419, 0.0
  %v582 = vadd.f32 %v580, %v581
  %v583 = vsel %vm561, %v421, 0.0
  %v584 = vadd.f32 %v582, %v583
  %v585 = vsel %vm561, %v514, 0.0
  %v586 = vadd.f32 %v584, %v585
  %v587 = vsel %vm561, %v516, 0.0
  %v588 = vadd.f32 %v586, %v587
  %v589 = vsel %vm561, %v555, 0.0
  %v590 = vadd.f32 %v588, %v589
  %v591 = vsel %vm561, %v557, 0.0
  %v592 = vadd.f32 %v590, %v591
  %593 = vadd.xlane.f32.xlu0 %v592
  %v594 = vpop.xlane.xlu0 %593
  %v595 = vmul.f32 %v106, %v106
  %v596 = vmul.f32 %v108, %v108
  %v597 = vmul.f32 %v147, %v147
  %v598 = vmul.f32 %v149, %v149
  %v599 = vmul.f32 %v242, %v242
  %v600 = vmul.f32 %v244, %v244
  %v601 = vmul.f32 %v283, %v283
  %v602 = vmul.f32 %v285, %v285
  %v603 = vmul.f32 %v378, %v378
  %v604 = vmul.f32 %v380, %v380
  %v605 = vmul.f32 %v419, %v419
  %v606 = vmul.f32 %v421, %v421
  %v607 = vmul.f32 %v514, %v514
  %v608 = vmul.f32 %v516, %v516
  %v609 = vmul.f32 %v555, %v555
  %v610 = vmul.f32 %v557, %v557
  %v611 = vsel %vm561, %v595, 0.0
  %v612 = vsel %vm561, %v596, 0.0
  %v613 = vadd.f32 %v611, %v612
  %v614 = vsel %vm561, %v597, 0.0
  %v615 = vadd.f32 %v613, %v614
  %v616 = vsel %vm561, %v598, 0.0
  %v617 = vadd.f32 %v615, %v616
  %v618 = vsel %vm561, %v599, 0.0
  %v619 = vadd.f32 %v617, %v618
  %v620 = vsel %vm561, %v600, 0.0
  %v621 = vadd.f32 %v619, %v620
  %v622 = vsel %vm561, %v601, 0.0
  %v623 = vadd.f32 %v621, %v622
  %v624 = vsel %vm561, %v602, 0.0
  %v625 = vadd.f32 %v623, %v624
  %v626 = vsel %vm561, %v603, 0.0
  %v627 = vadd.f32 %v625, %v626
  %v628 = vsel %vm561, %v604, 0.0
  %v629 = vadd.f32 %v627, %v628
  %v630 = vsel %vm561, %v605, 0.0
  %v631 = vadd.f32 %v629, %v630
  %v632 = vsel %vm561, %v606, 0.0
  %v633 = vadd.f32 %v631, %v632
  %v634 = vsel %vm561, %v607, 0.0
  %v635 = vadd.f32 %v633, %v634
  %v636 = vsel %vm561, %v608, 0.0
  %v637 = vadd.f32 %v635, %v636
  %v638 = vsel %vm561, %v609, 0.0
  %v639 = vadd.f32 %v637, %v638
  %v640 = vsel %vm561, %v610, 0.0
  %v641 = vadd.f32 %v639, %v640
  %642 = vadd.xlane.f32.xlu0 %v641
  %v643 = vpop.xlane.xlu0 %642
  %v644 = vmul.f32 %v594, 0.00048828125
  %v645 = vmul.f32 %v643, 0.00048828125
  %v646 = vmul.f32 %v644, %v644
  %v647 = vsub.f32 %v645, %v646
  %v648 = vmax.f32 %v647, 0.0
  %v649 = vadd.f32 %v648, 1e-05
  %v650 = vrsqrt.pop %v649
  %v651 = vld [vmem:[%s2] sm:$0x7]
  %v652 = vmul.f32 %v650, %v651
  %v653 = vld [vmem:[%s3] sm:$0x7]
  %v654 = vmul.f32 %v644, %v652
  %v655 = vsub.f32 %v653, %v654
  %657 = vset.pattern.permute.xlu0 0
  %658 = vperm.xlu0 %657, %v652
  %v659 = vpop.permute.xlu0 %658
  %v661 = vmul.f32 %v106, %v659
  %v662 = vmul.f32 %v108, %v659
  %v663 = vmul.f32 %v147, %v659
  %v664 = vmul.f32 %v149, %v659
  %v665 = vmul.f32 %v242, %v659
  %v666 = vmul.f32 %v244, %v659
  %v667 = vmul.f32 %v283, %v659
  %v668 = vmul.f32 %v285, %v659
  %v669 = vmul.f32 %v378, %v659
  %v670 = vmul.f32 %v380, %v659
  %v671 = vmul.f32 %v419, %v659
  %v672 = vmul.f32 %v421, %v659
  %v673 = vmul.f32 %v514, %v659
  %v674 = vmul.f32 %v516, %v659
  %v675 = vmul.f32 %v555, %v659
  %v676 = vmul.f32 %v557, %v659
  %678 = vset.pattern.permute.xlu0 0
  %679 = vperm.xlu0 %678, %v655
  %v680 = vpop.permute.xlu0 %679
  %v682 = vadd.f32 %v661, %v680
  %v683 = vadd.f32 %v662, %v680
  %v684 = vadd.f32 %v663, %v680
  %v685 = vadd.f32 %v664, %v680
  %v686 = vadd.f32 %v665, %v680
  %v687 = vadd.f32 %v666, %v680
  %v688 = vadd.f32 %v667, %v680
  %v689 = vadd.f32 %v668, %v680
  %v690 = vadd.f32 %v669, %v680
  %v691 = vadd.f32 %v670, %v680
  %v692 = vadd.f32 %v671, %v680
  %v693 = vadd.f32 %v672, %v680
  %v694 = vadd.f32 %v673, %v680
  %v695 = vadd.f32 %v674, %v680
  %v696 = vadd.f32 %v675, %v680
  %v697 = vadd.f32 %v676, %v680
  %v698 = vtanh.pop %v682
  %v699 = vtanh.pop %v683
  %v700 = vtanh.pop %v684
  %v701 = vtanh.pop %v685
  %v702 = vtanh.pop %v686
  %v703 = vtanh.pop %v687
  %v704 = vtanh.pop %v688
  %v705 = vtanh.pop %v689
  %v706 = vtanh.pop %v690
  %v707 = vtanh.pop %v691
  %v708 = vtanh.pop %v692
  %v709 = vtanh.pop %v693
  %v710 = vtanh.pop %v694
  %v711 = vtanh.pop %v695
  %v712 = vtanh.pop %v696
  %v713 = vtanh.pop %v697
  %v730 = vcombine.low %v698, %v699
  %v731 = vcombine.low %v700, %v701
  %v732 = vcombine.low %v702, %v703
  %v733 = vcombine.low %v704, %v705
  %v734 = vcombine.low %v706, %v707
  %v735 = vcombine.low %v708, %v709
  %v736 = vcombine.low %v710, %v711
  %v737 = vcombine.low %v712, %v713
  %746 = vst [vmem:[%s4] sm:$0x77] %v730
  %747 = vst [vmem:[%s4 + $0x8] sm:$0x77] %v731
  %748 = vst [vmem:[%s4 + $0x10] sm:$0x77] %v732
  %749 = vst [vmem:[%s4 + $0x18] sm:$0x77] %v733
  %750 = vst [vmem:[%s4 + $0x20] sm:$0x77] %v734
  %751 = vst [vmem:[%s4 + $0x28] sm:$0x77] %v735
  %752 = vst [vmem:[%s4 + $0x30] sm:$0x77] %v736
  %753 = vst [vmem:[%s4 + $0x38] sm:$0x77] %v737
  // Predicated region
  $region18: #{cycle_generator_forward.13} parent=0 // pred_check
    _
  $region19: #{cycle_generator_forward.13} parent=0 // pred_check_branch
    %755 = sbr.rel (0) target = $region21
  $region20: #{cycle_generator_forward.13} parent=0 // pred_region
    _
  $region21: #{cycle_generator_forward.13} parent=0 // pred_fallthru
    _
  // Predicated region
  $region22: #{cycle_generator_forward.13} parent=0 // pred_check
    _
  $region23: #{cycle_generator_forward.13} parent=0 // pred_check_branch
    %757 = sbr.rel (0) target = $region25
  $region24: #{cycle_generator_forward.13} parent=0 // pred_region
    _
  $region25: #{cycle_generator_forward.13} parent=0 // pred_fallthru
    _

</llo_original>
